<compile_context>
chip_gen: v7x
topology: tpu7x:2x2x1
jax: 0.10.0
libtpu: 0.0.40
codegen_flags: <defaults>
</compile_context>

<pallas_src>
import jax
import jax.numpy as jnp
from jax.experimental import pallas as pl
from jax.experimental.pallas import tpu as pltpu


# ---------------- Kernel A: fused (proj_aa + proj_esm) + add + relu ---------
def proj_kernel(x_ref, w_ref, b_ref, o_ref):
    acc = jnp.dot(x_ref[...], w_ref[...], preferred_element_type=jnp.float32)
    o_ref[...] = jnp.maximum(acc + b_ref[...], 0.0)


def fused_proj(emb, esm, w_aa, b_aa, w_esm, b_esm, *, tm=128):
    """relu(emb @ w_aa + b_aa + esm @ w_esm + b_esm) as ONE bf16 matmul."""
    N = emb.shape[0]
    D = w_aa.shape[1]

    # Concatenate features / stack weights -> one MXU matmul, bf16 inputs with
    # f32 accumulation (halves HBM traffic on the wide esm stream).
    x = jnp.concatenate([emb, esm], axis=1).astype(jnp.bfloat16)     # [N, 1376]
    w = jnp.concatenate([w_aa, w_esm], axis=0).astype(jnp.bfloat16)  # [1376, D]
    b = (b_aa + b_esm).astype(jnp.float32)                           # [1, D]

    n_blocks = pl.cdiv(N, tm)
    n_pad = n_blocks * tm
    if n_pad != N:                      # pad remainder rows instead of dropping
        x = jnp.pad(x, ((0, n_pad - N), (0, 0)))
    Kdim = x.shape[1]

    out = pl.pallas_call(
        proj_kernel,
        out_shape=jax.ShapeDtypeStruct((n_pad, D), jnp.float32),
        grid=(n_blocks,),
        in_specs=[
            pl.BlockSpec((tm, Kdim), lambda i: (i, 0)),
            pl.BlockSpec(w.shape, lambda i: (0, 0)),   # weights stay resident
            pl.BlockSpec(b.shape, lambda i: (0, 0)),
        ],
        out_specs=pl.BlockSpec((tm, D), lambda i: (i, 0)),
        compiler_params=pltpu.CompilerParams(
            dimension_semantics=("parallel",)),
    )(x, w, b)
    return out[:N]


# ------- Kernel B: Conv1d + BatchNorm1d + MCAM pool + fc_out + sigmoid ------
def cnn_head(x_dense, wc, bc, gamma, beta, wfc, bfc):
    B, L, Cin = x_dense.shape
    K, _, Cout = wc.shape
    Lout = L - K + 1
    n_cls = wfc.shape[1]
    inv_n = 1.0 / float(B * Lout)       # BN batch-stat normalizer
    inv_l = 1.0 / float(Lout)           # mean-pool normalizer

    def head_kernel(x_ref, wc_ref, bc_ref, g_ref, be_ref, wfc_ref, bfc_ref,
                    o_ref, s_ref, stat_ref):
        b = pl.program_id(0)

        @pl.when(b == 0)
        def _():
            stat_ref[...] = jnp.zeros_like(stat_ref)

        x = x_ref[0]                                          # [L, Cin]

        # Conv1d(Cin->Cout, k=K, pad=0): K full-row matmuls (M = L rows on the
        # MXU) with the shift-add done in the narrow Cout domain, so the wide
        # Cin input is never sliced at unaligned sublane offsets.
        acc = jnp.dot(x, wc_ref[0],
                      preferred_element_type=jnp.float32)[0:Lout, :]
        for k in range(1, K):                                 # static unroll
            zk = jnp.dot(x, wc_ref[k], preferred_element_type=jnp.float32)
            acc = acc + zk[k:k + Lout, :]
        y = acc + bc_ref[...]                                 # [Lout, Cout]

        # Fused BN + mean-pool statistics: only sums are kept, the full
        # [B, Lout, Cout] conv output is never materialized / re-read.
        sy = jnp.sum(y, axis=0, keepdims=True)                # [1, Cout]
        sy2 = jnp.sum(y * y, axis=0, keepdims=True)           # [1, Cout]
        s_ref[pl.ds(b, 1), :] = sy                            # per-graph sum_L(y)
        stat_ref[...] += jnp.concatenate([sy, sy2], axis=0)   # batch sums

        @pl.when(b == pl.num_programs(0) - 1)
        def _():
            mu = stat_ref[pl.ds(0, 1), :] * inv_n             # [1, Cout]
            var = stat_ref[pl.ds(1, 1), :] * inv_n - mu * mu  # E[y^2]-E[y]^2
            inv_std = jax.lax.rsqrt(var + 1e-5)
            # mean-pool commutes with the BN affine: pool(BN(y)) = BN(pool(y))
            pooled = (s_ref[...] * inv_l - mu) * inv_std * g_ref[...] + be_ref[...]
            # TODO(synk): FPN_Module definition is not in the reference source;
            # treated as identity, so conv_mha == conv_x and out = 2 * pooled.
            out = pooled + pooled
            logits = jnp.dot(out, wfc_ref[...],
                             preferred_element_type=jnp.float32) + bfc_ref[...]
            o_ref[...] = jax.nn.sigmoid(logits)

    def full(shape):
        return pl.BlockSpec(shape, lambda i: (0,) * len(shape))

    return pl.pallas_call(
        head_kernel,
        out_shape=jax.ShapeDtypeStruct((B, n_cls), jnp.float32),
        grid=(B,),
        in_specs=[
            pl.BlockSpec((1, L, Cin), lambda i: (i, 0, 0)),   # one graph / step
            full(wc.shape), full(bc.shape), full(gamma.shape),
            full(beta.shape), full(wfc.shape), full(bfc.shape),
        ],
        out_specs=pl.BlockSpec((B, n_cls), lambda i: (0, 0)),  # resident output
        scratch_shapes=[
            pltpu.VMEM((B, Cout), jnp.float32),   # per-graph sum_L(conv)
            pltpu.VMEM((2, Cout), jnp.float32),   # [sum_BL(y), sum_BL(y^2)]
        ],
        # B axis is sequential: BatchNorm batch statistics couple all graphs.
        compiler_params=pltpu.CompilerParams(
            dimension_semantics=("arbitrary",)),
    )(x_dense, wc, bc, gamma, beta, wfc, bfc)


if __name__ == "__main__":
    key = jax.random.PRNGKey(0)
    ks = jax.random.split(key, 8)

    B, L = 2, 16                 # batch graphs, nodes per graph (equal lengths)
    N = B * L
    input_dim = 512              # Conv1d in-channels (matches proj output dim)
    hidden_dim = 64
    num_classes = 256

    # --- synthetic inputs (data.native_x, data.x, data.batch) ---------------
    native_x = jax.random.randint(ks[0], (N,), 0, 21)
    x_esm_in = jax.random.normal(ks[1], (N, 1280), jnp.float32)
    batch = jnp.repeat(jnp.arange(B), L)   # sorted, equal-length graphs

    # --- deterministic parameters (mirror CNN.init_parameters) --------------
    embed_table = jax.random.normal(ks[2], (21, 96), jnp.float32)  # Embedding N(0,1)
    w_aa = (0.001 * jax.random.normal(ks[3], (512, 96))).T.astype(jnp.float32)
    b_aa = jnp.zeros((1, 512), jnp.float32)
    w_esm = (0.001 * jax.random.normal(ks[4], (512, 1280))).T.astype(jnp.float32)
    b_esm = jnp.zeros((1, 512), jnp.float32)

    fan_out = hidden_dim * 3                 # kaiming_normal(mode='fan_out')
    wc_torch = jnp.sqrt(2.0 / fan_out) * jax.random.normal(
        ks[5], (hidden_dim, input_dim, 3))   # PyTorch [Cout, Cin, K]
    wc = jnp.transpose(wc_torch, (2, 1, 0)).astype(jnp.float32)  # -> [K, Cin, Cout]
    bc = jnp.zeros((1, hidden_dim), jnp.float32)
    gamma = jnp.ones((1, hidden_dim), jnp.float32)
    beta = jnp.zeros((1, hidden_dim), jnp.float32)

    w_fc = (0.001 * jax.random.normal(ks[6], (num_classes, hidden_dim))).T.astype(jnp.float32)
    b_fc = jnp.zeros((1, num_classes), jnp.float32)

    # --- glue: embedding gather + fused projection kernel -------------------
    emb = jnp.take(embed_table, native_x, axis=0)                    # [N, 96]
    node_feat = fused_proj(emb, x_esm_in, w_aa, b_aa, w_esm, b_esm)  # [N, 512]

    # to_dense_batch: with sorted, equal-length graphs this is a reshape.
    x_dense = node_feat.reshape(B, L, input_dim)                     # [B, L, 512]

    # --- fused conv + BN + pool + fc + sigmoid kernel ------------------------
    out = cnn_head(x_dense, wc, bc, gamma, beta, w_fc, b_fc)         # [B, 256]
    out = jax.block_until_ready(out)
    assert out.shape == (B, num_classes) and out.dtype == jnp.float32
    print("KERNEL_OK")
</pallas_src>

<mosaic_0001>
module attributes {stable_mosaic.version = 11 : i64} {
  func.func @proj_kernel(%arg0: i32, %arg1: memref<128x1376xbf16, #tpu.memory_space<vmem>>, %arg2: memref<1376x512xbf16, #tpu.memory_space<vmem>>, %arg3: memref<1x512xf32, #tpu.memory_space<vmem>>, %arg4: memref<128x512xf32, #tpu.memory_space<vmem>>) attributes {dimension_semantics = [#tpu.dimension_semantics<parallel>], iteration_bounds = array<i64: 1>, scalar_prefetch = 0 : i64, scratch_operands = 0 : i64, tpu.core_type = #tpu.core_type<tc>, window_params = [{transform_indices = @transform_0, window_bounds = array<i64: 128, 1376>}, {pipeline_mode = #tpu.pipeline_mode<synchronous>, transform_indices = @transform_1, window_bounds = array<i64: 1376, 512>}, {pipeline_mode = #tpu.pipeline_mode<synchronous>, transform_indices = @transform_2, window_bounds = array<i64: 1, 512>}, {transform_indices = @transform_3, window_bounds = array<i64: 128, 512>}]} {
    %c0 = arith.constant 0 : index
    %c0_0 = arith.constant 0 : index
    %0 = vector.load %arg1[%c0, %c0_0] : memref<128x1376xbf16, #tpu.memory_space<vmem>>, vector<128x1376xbf16>
    %c0_1 = arith.constant 0 : index
    %c0_2 = arith.constant 0 : index
    %1 = vector.load %arg2[%c0_1, %c0_2] : memref<1376x512xbf16, #tpu.memory_space<vmem>>, vector<1376x512xbf16>
    %cst = arith.constant dense<0.000000e+00> : vector<128x512xf32>
    %2 = tpu.matmul %0, %1, %cst {dimension_numbers = #tpu.dot_dimension_numbers<[1], [0], [0], [1], [0, 0, 1, 1], [], []>} : vector<128x1376xbf16>, vector<1376x512xbf16>, vector<128x512xf32> -> vector<128x512xf32>
    %c0_3 = arith.constant 0 : index
    %c0_4 = arith.constant 0 : index
    %3 = vector.load %arg3[%c0_3, %c0_4] : memref<1x512xf32, #tpu.memory_space<vmem>>, vector<1x512xf32>
    %4 = vector.broadcast %3 : vector<1x512xf32> to vector<128x512xf32>
    %5 = arith.addf %2, %4 : vector<128x512xf32>
    %cst_5 = arith.constant 0.000000e+00 : f32
    %6 = vector.broadcast %cst_5 : f32 to vector<128x512xf32>
    %7 = arith.maximumf %5, %6 : vector<128x512xf32>
    %c0_6 = arith.constant 0 : index
    %c0_7 = arith.constant 0 : index
    %8 = vector.load %arg4[%c0_6, %c0_7] : memref<128x512xf32, #tpu.memory_space<vmem>>, vector<128x512xf32>
    tpu.vector_store %arg4[%c0_6, %c0_7], %7 {strides = array<i32>} : memref<128x512xf32, #tpu.memory_space<vmem>>, vector<128x512xf32>,
    return
  }
  func.func @transform_0(%arg0: i32) -> (i32, i32) {
    %c0_i32 = arith.constant 0 : i32
    %c0_i32_0 = arith.constant 0 : i32
    return %arg0, %c0_i32 : i32, i32
  }
  func.func @transform_1(%arg0: i32) -> (i32, i32) {
    %c0_i32 = arith.constant 0 : i32
    %c0_i32_0 = arith.constant 0 : i32
    %c0_i32_1 = arith.constant 0 : i32
    return %c0_i32, %c0_i32_0 : i32, i32
  }
  func.func @transform_2(%arg0: i32) -> (i32, i32) {
    %c0_i32 = arith.constant 0 : i32
    %c0_i32_0 = arith.constant 0 : i32
    %c0_i32_1 = arith.constant 0 : i32
    return %c0_i32, %c0_i32_0 : i32, i32
  }
  func.func @transform_3(%arg0: i32) -> (i32, i32) {
    %c0_i32 = arith.constant 0 : i32
    %c0_i32_0 = arith.constant 0 : i32
    return %arg0, %c0_i32 : i32, i32
  }
}

</mosaic_0001>

<llo_original>
// kernel: tpu_custom_call.1
$region0: #{tpu_custom_call.1}
  #allocation0 [shape = 'u32[]', space=smem, size = 0x4, offset = 0x4, fixed_abs, tag = 'smem constant byte address 0x4 - core index']
  #allocation1 [shape = 'u32[144,128]{1,0:T(1,128)}', space=vmem, size = 0x12000, scoped, tag = 'internal scratch']
  %s0 = inlined_call_operand.vmem [shape: bf16[128,1376], index: 0, kind: input, shape index: {}]
  %s1 = inlined_call_operand.hbm [shape: bf16[1376,512], index: 1, kind: input, shape index: {}]
  %s2 = inlined_call_operand.hbm [shape: f32[1,512], index: 2, kind: input, shape index: {}]
  %s3 = inlined_call_operand.hbm [shape: f32[128,512], index: 3, kind: output, shape index: {}]
  %s4 = sld [smem:[#allocation0]]
  $region30: #{tpu_custom_call.1} parent=0
    _
  %s6 = ssub.s32 1, %s4
  %s7 = scalar_select 0, %s6, %s4
  $region1: #{tpu_custom_call.1} parent=0
    #allocation2 [shape = 'u8[1409024]{0}', space=vmem, size = 0x158000, scoped, tag = 'input window, operand 1, single buffered']
    #allocation3 [shape = 's32[1]{0}', space=sflag, size = 0x4, scoped, tag = 'scoped memory for tpu_custom_call.1']
    #allocation4 [shape = 's32[1]{0}', space=sflag, size = 0x4, scoped, tag = 'scoped memory for tpu_custom_call.1']
    #allocation5 [shape = 'u8[2048]{0}', space=vmem, size = 0x800, scoped, tag = 'input window, operand 2, single buffered']
    #allocation6 [shape = 's32[1]{0}', space=sflag, size = 0x4, scoped, tag = 'scoped memory for tpu_custom_call.1']
    #allocation7 [shape = 'u8[262144]{0}', space=vmem, size = 0x40000, scoped, tag = 'output window, operand 0, single buffered']
    %8 = vsyncpa [#allocation3], 0
    %9 = vsyncpa [#allocation6], 0
    %10 = vsyncpa [#allocation4], 0
    // Predicated region
    $region2: #{tpu_custom_call.1} parent=1 // pred_check
      _
    $region3: #{tpu_custom_call.1} parent=1 // pred_check_branch
      %12 = sbr.rel (0) target = $region5
    $region4: #{tpu_custom_call.1} parent=1 // pred_region
      _
    $region5: #{tpu_custom_call.1} parent=1 // pred_fallthru
      _
    // Predicated region
    $region6: #{tpu_custom_call.1} parent=1 // pred_check
      _
    $region7: #{tpu_custom_call.1} parent=1 // pred_check_branch
      %14 = sbr.rel (0) target = $region9
    $region8: #{tpu_custom_call.1} parent=1 // pred_region
      %s16 = ssub.s32 44032, 44032
      %17 = vsyncadd [#allocation3], %s16
      %s18 = sshll.u32 [#allocation2], 4
      %s19 = int_to_ptr.vmem [resolvable:$true] %s18
      %24 = dma.hbm_to_vmem [thread:$0]  %s1, 44032, %s19, [#allocation3], 256, 256, 16
    $region9: #{tpu_custom_call.1} parent=1 // pred_fallthru
      _
    // Predicated region
    $region10: #{tpu_custom_call.1} parent=1 // pred_check
      _
    $region11: #{tpu_custom_call.1} parent=1 // pred_check_branch
      %26 = sbr.rel (0) target = $region13
    $region12: #{tpu_custom_call.1} parent=1 // pred_region
      %s28 = ssub.s32 64, 64
      %29 = vsyncadd [#allocation6], %s28
      %s31 = sshll.u32 [#allocation5], 4
      %s32 = int_to_ptr.vmem [resolvable:$true] %s31
      %34 = dma.hbm_to_vmem [thread:$0]  %s2, 64, %s32, [#allocation6]
    $region13: #{tpu_custom_call.1} parent=1 // pred_fallthru
      _
    // Predicated region
    $region14: #{tpu_custom_call.1} parent=1 // pred_check
      _
    $region15: #{tpu_custom_call.1} parent=1 // pred_check_branch
      %36 = sbr.rel (0) target = $region17
    $region16: #{tpu_custom_call.1} parent=1 // pred_region
      %37 = dma.done [#allocation3], 44032
    $region17: #{tpu_custom_call.1} parent=1 // pred_fallthru
      _
    // Predicated region
    $region18: #{tpu_custom_call.1} parent=1 // pred_check
      _
    $region19: #{tpu_custom_call.1} parent=1 // pred_check_branch
      %39 = sbr.rel (0) target = $region21
    $region20: #{tpu_custom_call.1} parent=1 // pred_region
      %40 = dma.done [#allocation6], 64
    $region21: #{tpu_custom_call.1} parent=1 // pred_fallthru
      _
    %v42 = vld [vmem:[%s0] sm:$0xff]
    %v43 = vld [vmem:[%s0 + $0x8] sm:$0xff]
    %v44 = vld [vmem:[%s0 + $0x10] sm:$0xff]
    %v45 = vld [vmem:[%s0 + $0x18] sm:$0xff]
    %v46 = vld [vmem:[%s0 + $0x20] sm:$0xff]
    %v47 = vld [vmem:[%s0 + $0x28] sm:$0xf]
    %v48 = vld [vmem:[%s0 + $0x2c] sm:$0xff]
    %v49 = vld [vmem:[%s0 + $0x34] sm:$0xff]
    %v50 = vld [vmem:[%s0 + $0x3c] sm:$0xff]
    %v51 = vld [vmem:[%s0 + $0x44] sm:$0xff]
    %v52 = vld [vmem:[%s0 + $0x4c] sm:$0xff]
    %v53 = vld [vmem:[%s0 + $0x54] sm:$0xf]
    %v54 = vld [vmem:[%s0 + $0x58] sm:$0xff]
    %v55 = vld [vmem:[%s0 + $0x60] sm:$0xff]
    %v56 = vld [vmem:[%s0 + $0x68] sm:$0xff]
    %v57 = vld [vmem:[%s0 + $0x70] sm:$0xff]
    %v58 = vld [vmem:[%s0 + $0x78] sm:$0xff]
    %v59 = vld [vmem:[%s0 + $0x80] sm:$0xf]
    %v60 = vld [vmem:[%s0 + $0x84] sm:$0xff]
    %v61 = vld [vmem:[%s0 + $0x8c] sm:$0xff]
    %v62 = vld [vmem:[%s0 + $0x94] sm:$0xff]
    %v63 = vld [vmem:[%s0 + $0x9c] sm:$0xff]
    %v64 = vld [vmem:[%s0 + $0xa4] sm:$0xff]
    %v65 = vld [vmem:[%s0 + $0xac] sm:$0xf]
    %v66 = vld [vmem:[%s0 + $0xb0] sm:$0xff]
    %v67 = vld [vmem:[%s0 + $0xb8] sm:$0xff]
    %v68 = vld [vmem:[%s0 + $0xc0] sm:$0xff]
    %v69 = vld [vmem:[%s0 + $0xc8] sm:$0xff]
    %v70 = vld [vmem:[%s0 + $0xd0] sm:$0xff]
    %v71 = vld [vmem:[%s0 + $0xd8] sm:$0xf]
    %v72 = vld [vmem:[%s0 + $0xdc] sm:$0xff]
    %v73 = vld [vmem:[%s0 + $0xe4] sm:$0xff]
    %v74 = vld [vmem:[%s0 + $0xec] sm:$0xff]
    %v75 = vld [vmem:[%s0 + $0xf4] sm:$0xff]
    %v76 = vld [vmem:[%s0 + $0xfc] sm:$0xff]
    %v77 = vld [vmem:[%s0 + $0x104] sm:$0xf]
    %v78 = vld [vmem:[%s0 + $0x108] sm:$0xff]
    %v79 = vld [vmem:[%s0 + $0x110] sm:$0xff]
    %v80 = vld [vmem:[%s0 + $0x118] sm:$0xff]
    %v81 = vld [vmem:[%s0 + $0x120] sm:$0xff]
    %v82 = vld [vmem:[%s0 + $0x128] sm:$0xff]
    %v83 = vld [vmem:[%s0 + $0x130] sm:$0xf]
    %v84 = vld [vmem:[%s0 + $0x134] sm:$0xff]
    %v85 = vld [vmem:[%s0 + $0x13c] sm:$0xff]
    %v86 = vld [vmem:[%s0 + $0x144] sm:$0xff]
    %v87 = vld [vmem:[%s0 + $0x14c] sm:$0xff]
    %v88 = vld [vmem:[%s0 + $0x154] sm:$0xff]
    %v89 = vld [vmem:[%s0 + $0x15c] sm:$0xf]
    %v90 = vld [vmem:[%s0 + $0x160] sm:$0xff]
    %v91 = vld [vmem:[%s0 + $0x168] sm:$0xff]
    %v92 = vld [vmem:[%s0 + $0x170] sm:$0xff]
    %v93 = vld [vmem:[%s0 + $0x178] sm:$0xff]
    %v94 = vld [vmem:[%s0 + $0x180] sm:$0xff]
    %v95 = vld [vmem:[%s0 + $0x188] sm:$0xf]
    %v96 = vld [vmem:[%s0 + $0x18c] sm:$0xff]
    %v97 = vld [vmem:[%s0 + $0x194] sm:$0xff]
    %v98 = vld [vmem:[%s0 + $0x19c] sm:$0xff]
    %v99 = vld [vmem:[%s0 + $0x1a4] sm:$0xff]
    %v100 = vld [vmem:[%s0 + $0x1ac] sm:$0xff]
    %v101 = vld [vmem:[%s0 + $0x1b4] sm:$0xf]
    %v102 = vld [vmem:[%s0 + $0x1b8] sm:$0xff]
    %v103 = vld [vmem:[%s0 + $0x1c0] sm:$0xff]
    %v104 = vld [vmem:[%s0 + $0x1c8] sm:$0xff]
    %v105 = vld [vmem:[%s0 + $0x1d0] sm:$0xff]
    %v106 = vld [vmem:[%s0 + $0x1d8] sm:$0xff]
    %v107 = vld [vmem:[%s0 + $0x1e0] sm:$0xf]
    %v108 = vld [vmem:[%s0 + $0x1e4] sm:$0xff]
    %v109 = vld [vmem:[%s0 + $0x1ec] sm:$0xff]
    %v110 = vld [vmem:[%s0 + $0x1f4] sm:$0xff]
    %v111 = vld [vmem:[%s0 + $0x1fc] sm:$0xff]
    %v112 = vld [vmem:[%s0 + $0x204] sm:$0xff]
    %v113 = vld [vmem:[%s0 + $0x20c] sm:$0xf]
    %v114 = vld [vmem:[%s0 + $0x210] sm:$0xff]
    %v115 = vld [vmem:[%s0 + $0x218] sm:$0xff]
    %v116 = vld [vmem:[%s0 + $0x220] sm:$0xff]
    %v117 = vld [vmem:[%s0 + $0x228] sm:$0xff]
    %v118 = vld [vmem:[%s0 + $0x230] sm:$0xff]
    %v119 = vld [vmem:[%s0 + $0x238] sm:$0xf]
    %v120 = vld [vmem:[%s0 + $0x23c] sm:$0xff]
    %v121 = vld [vmem:[%s0 + $0x244] sm:$0xff]
    %v122 = vld [vmem:[%s0 + $0x24c] sm:$0xff]
    %v123 = vld [vmem:[%s0 + $0x254] sm:$0xff]
    %v124 = vld [vmem:[%s0 + $0x25c] sm:$0xff]
    %v125 = vld [vmem:[%s0 + $0x264] sm:$0xf]
    %v126 = vld [vmem:[%s0 + $0x268] sm:$0xff]
    %v127 = vld [vmem:[%s0 + $0x270] sm:$0xff]
    %v128 = vld [vmem:[%s0 + $0x278] sm:$0xff]
    %v129 = vld [vmem:[%s0 + $0x280] sm:$0xff]
    %v130 = vld [vmem:[%s0 + $0x288] sm:$0xff]
    %v131 = vld [vmem:[%s0 + $0x290] sm:$0xf]
    %v132 = vld [vmem:[%s0 + $0x294] sm:$0xff]
    %v133 = vld [vmem:[%s0 + $0x29c] sm:$0xff]
    %v134 = vld [vmem:[%s0 + $0x2a4] sm:$0xff]
    %v135 = vld [vmem:[%s0 + $0x2ac] sm:$0xff]
    %v136 = vld [vmem:[%s0 + $0x2b4] sm:$0xff]
    %v137 = vld [vmem:[%s0 + $0x2bc] sm:$0xf]
    %v138 = vld [vmem:[#allocation2] sm:$0xff]
    %v139 = vld [vmem:[#allocation2 + $0x8] sm:$0xff]
    %v140 = vld [vmem:[#allocation2 + $0x10] sm:$0xff]
    %v141 = vld [vmem:[#allocation2 + $0x18] sm:$0xff]
    %v142 = vld [vmem:[#allocation2 + $0x20] sm:$0xff]
    %v143 = vld [vmem:[#allocation2 + $0x28] sm:$0xff]
    %v144 = vld [vmem:[#allocation2 + $0x30] sm:$0xff]
    %v145 = vld [vmem:[#allocation2 + $0x38] sm:$0xff]
    %v146 = vld [vmem:[#allocation2 + $0x40] sm:$0xff]
    %v147 = vld [vmem:[#allocation2 + $0x48] sm:$0xff]
    %v148 = vld [vmem:[#allocation2 + $0x50] sm:$0xff]
    %v149 = vld [vmem:[#allocation2 + $0x58] sm:$0xff]
    %v150 = vld [vmem:[#allocation2 + $0x60] sm:$0xff]
    %v151 = vld [vmem:[#allocation2 + $0x68] sm:$0xff]
    %v152 = vld [vmem:[#allocation2 + $0x70] sm:$0xff]
    %v153 = vld [vmem:[#allocation2 + $0x78] sm:$0xff]
    %v154 = vld [vmem:[#allocation2 + $0x80] sm:$0xff]
    %v155 = vld [vmem:[#allocation2 + $0x88] sm:$0xff]
    %v156 = vld [vmem:[#allocation2 + $0x90] sm:$0xff]
    %v157 = vld [vmem:[#allocation2 + $0x98] sm:$0xff]
    %v158 = vld [vmem:[#allocation2 + $0xa0] sm:$0xff]
    %v159 = vld [vmem:[#allocation2 + $0xa8] sm:$0xff]
    %v160 = vld [vmem:[#allocation2 + $0xb0] sm:$0xff]
    %v161 = vld [vmem:[#allocation2 + $0xb8] sm:$0xff]
    %v162 = vld [vmem:[#allocation2 + $0xc0] sm:$0xff]
    %v163 = vld [vmem:[#allocation2 + $0xc8] sm:$0xff]
    %v164 = vld [vmem:[#allocation2 + $0xd0] sm:$0xff]
    %v165 = vld [vmem:[#allocation2 + $0xd8] sm:$0xff]
    %v166 = vld [vmem:[#allocation2 + $0xe0] sm:$0xff]
    %v167 = vld [vmem:[#allocation2 + $0xe8] sm:$0xff]
    %v168 = vld [vmem:[#allocation2 + $0xf0] sm:$0xff]
    %v169 = vld [vmem:[#allocation2 + $0xf8] sm:$0xff]
    %v170 = vld [vmem:[#allocation2 + $0x100] sm:$0xff]
    %v171 = vld [vmem:[#allocation2 + $0x108] sm:$0xff]
    %v172 = vld [vmem:[#allocation2 + $0x110] sm:$0xff]
    %v173 = vld [vmem:[#allocation2 + $0x118] sm:$0xff]
    %v174 = vld [vmem:[#allocation2 + $0x120] sm:$0xff]
    %v175 = vld [vmem:[#allocation2 + $0x128] sm:$0xff]
    %v176 = vld [vmem:[#allocation2 + $0x130] sm:$0xff]
    %v177 = vld [vmem:[#allocation2 + $0x138] sm:$0xff]
    %v178 = vld [vmem:[#allocation2 + $0x140] sm:$0xff]
    %v179 = vld [vmem:[#allocation2 + $0x148] sm:$0xff]
    %v180 = vld [vmem:[#allocation2 + $0x150] sm:$0xff]
    %v181 = vld [vmem:[#allocation2 + $0x158] sm:$0xff]
    %v182 = vld [vmem:[#allocation2 + $0x160] sm:$0xff]
    %v183 = vld [vmem:[#allocation2 + $0x168] sm:$0xff]
    %v184 = vld [vmem:[#allocation2 + $0x170] sm:$0xff]
    %v185 = vld [vmem:[#allocation2 + $0x178] sm:$0xff]
    %v186 = vld [vmem:[#allocation2 + $0x180] sm:$0xff]
    %v187 = vld [vmem:[#allocation2 + $0x188] sm:$0xff]
    %v188 = vld [vmem:[#allocation2 + $0x190] sm:$0xff]
    %v189 = vld [vmem:[#allocation2 + $0x198] sm:$0xff]
    %v190 = vld [vmem:[#allocation2 + $0x1a0] sm:$0xff]
    %v191 = vld [vmem:[#allocation2 + $0x1a8] sm:$0xff]
    %v192 = vld [vmem:[#allocation2 + $0x1b0] sm:$0xff]
    %v193 = vld [vmem:[#allocation2 + $0x1b8] sm:$0xff]
    %v194 = vld [vmem:[#allocation2 + $0x1c0] sm:$0xff]
    %v195 = vld [vmem:[#allocation2 + $0x1c8] sm:$0xff]
    %v196 = vld [vmem:[#allocation2 + $0x1d0] sm:$0xff]
    %v197 = vld [vmem:[#allocation2 + $0x1d8] sm:$0xff]
    %v198 = vld [vmem:[#allocation2 + $0x1e0] sm:$0xff]
    %v199 = vld [vmem:[#allocation2 + $0x1e8] sm:$0xff]
    %v200 = vld [vmem:[#allocation2 + $0x1f0] sm:$0xff]
    %v201 = vld [vmem:[#allocation2 + $0x1f8] sm:$0xff]
    %v202 = vld [vmem:[#allocation2 + $0x200] sm:$0xff]
    %v203 = vld [vmem:[#allocation2 + $0x208] sm:$0xff]
    %v204 = vld [vmem:[#allocation2 + $0x210] sm:$0xff]
    %v205 = vld [vmem:[#allocation2 + $0x218] sm:$0xff]
    %v206 = vld [vmem:[#allocation2 + $0x220] sm:$0xff]
    %v207 = vld [vmem:[#allocation2 + $0x228] sm:$0xff]
    %v208 = vld [vmem:[#allocation2 + $0x230] sm:$0xff]
    %v209 = vld [vmem:[#allocation2 + $0x238] sm:$0xff]
    %v210 = vld [vmem:[#allocation2 + $0x240] sm:$0xff]
    %v211 = vld [vmem:[#allocation2 + $0x248] sm:$0xff]
    %v212 = vld [vmem:[#allocation2 + $0x250] sm:$0xff]
    %v213 = vld [vmem:[#allocation2 + $0x258] sm:$0xff]
    %v214 = vld [vmem:[#allocation2 + $0x260] sm:$0xff]
    %v215 = vld [vmem:[#allocation2 + $0x268] sm:$0xff]
    %v216 = vld [vmem:[#allocation2 + $0x270] sm:$0xff]
    %v217 = vld [vmem:[#allocation2 + $0x278] sm:$0xff]
    %v218 = vld [vmem:[#allocation2 + $0x280] sm:$0xff]
    %v219 = vld [vmem:[#allocation2 + $0x288] sm:$0xff]
    %v220 = vld [vmem:[#allocation2 + $0x290] sm:$0xff]
    %v221 = vld [vmem:[#allocation2 + $0x298] sm:$0xff]
    %v222 = vld [vmem:[#allocation2 + $0x2a0] sm:$0xff]
    %v223 = vld [vmem:[#allocation2 + $0x2a8] sm:$0xff]
    %v224 = vld [vmem:[#allocation2 + $0x2b0] sm:$0xff]
    %v225 = vld [vmem:[#allocation2 + $0x2b8] sm:$0xff]
    %v226 = vld [vmem:[#allocation2 + $0x2c0] sm:$0xff]
    %v227 = vld [vmem:[#allocation2 + $0x2c8] sm:$0xff]
    %v228 = vld [vmem:[#allocation2 + $0x2d0] sm:$0xff]
    %v229 = vld [vmem:[#allocation2 + $0x2d8] sm:$0xff]
    %v230 = vld [vmem:[#allocation2 + $0x2e0] sm:$0xff]
    %v231 = vld [vmem:[#allocation2 + $0x2e8] sm:$0xff]
    %v232 = vld [vmem:[#allocation2 + $0x2f0] sm:$0xff]
    %v233 = vld [vmem:[#allocation2 + $0x2f8] sm:$0xff]
    %v234 = vld [vmem:[#allocation2 + $0x300] sm:$0xff]
    %v235 = vld [vmem:[#allocation2 + $0x308] sm:$0xff]
    %v236 = vld [vmem:[#allocation2 + $0x310] sm:$0xff]
    %v237 = vld [vmem:[#allocation2 + $0x318] sm:$0xff]
    %v238 = vld [vmem:[#allocation2 + $0x320] sm:$0xff]
    %v239 = vld [vmem:[#allocation2 + $0x328] sm:$0xff]
    %v240 = vld [vmem:[#allocation2 + $0x330] sm:$0xff]
    %v241 = vld [vmem:[#allocation2 + $0x338] sm:$0xff]
    %v242 = vld [vmem:[#allocation2 + $0x340] sm:$0xff]
    %v243 = vld [vmem:[#allocation2 + $0x348] sm:$0xff]
    %v244 = vld [vmem:[#allocation2 + $0x350] sm:$0xff]
    %v245 = vld [vmem:[#allocation2 + $0x358] sm:$0xff]
    %v246 = vld [vmem:[#allocation2 + $0x360] sm:$0xff]
    %v247 = vld [vmem:[#allocation2 + $0x368] sm:$0xff]
    %v248 = vld [vmem:[#allocation2 + $0x370] sm:$0xff]
    %v249 = vld [vmem:[#allocation2 + $0x378] sm:$0xff]
    %v250 = vld [vmem:[#allocation2 + $0x380] sm:$0xff]
    %v251 = vld [vmem:[#allocation2 + $0x388] sm:$0xff]
    %v252 = vld [vmem:[#allocation2 + $0x390] sm:$0xff]
    %v253 = vld [vmem:[#allocation2 + $0x398] sm:$0xff]
    %v254 = vld [vmem:[#allocation2 + $0x3a0] sm:$0xff]
    %v255 = vld [vmem:[#allocation2 + $0x3a8] sm:$0xff]
    %v256 = vld [vmem:[#allocation2 + $0x3b0] sm:$0xff]
    %v257 = vld [vmem:[#allocation2 + $0x3b8] sm:$0xff]
    %v258 = vld [vmem:[#allocation2 + $0x3c0] sm:$0xff]
    %v259 = vld [vmem:[#allocation2 + $0x3c8] sm:$0xff]
    %v260 = vld [vmem:[#allocation2 + $0x3d0] sm:$0xff]
    %v261 = vld [vmem:[#allocation2 + $0x3d8] sm:$0xff]
    %v262 = vld [vmem:[#allocation2 + $0x3e0] sm:$0xff]
    %v263 = vld [vmem:[#allocation2 + $0x3e8] sm:$0xff]
    %v264 = vld [vmem:[#allocation2 + $0x3f0] sm:$0xff]
    %v265 = vld [vmem:[#allocation2 + $0x3f8] sm:$0xff]
    %v266 = vld [vmem:[#allocation2 + $0x400] sm:$0xff]
    %v267 = vld [vmem:[#allocation2 + $0x408] sm:$0xff]
    %v268 = vld [vmem:[#allocation2 + $0x410] sm:$0xff]
    %v269 = vld [vmem:[#allocation2 + $0x418] sm:$0xff]
    %v270 = vld [vmem:[#allocation2 + $0x420] sm:$0xff]
    %v271 = vld [vmem:[#allocation2 + $0x428] sm:$0xff]
    %v272 = vld [vmem:[#allocation2 + $0x430] sm:$0xff]
    %v273 = vld [vmem:[#allocation2 + $0x438] sm:$0xff]
    %v274 = vld [vmem:[#allocation2 + $0x440] sm:$0xff]
    %v275 = vld [vmem:[#allocation2 + $0x448] sm:$0xff]
    %v276 = vld [vmem:[#allocation2 + $0x450] sm:$0xff]
    %v277 = vld [vmem:[#allocation2 + $0x458] sm:$0xff]
    %v278 = vld [vmem:[#allocation2 + $0x460] sm:$0xff]
    %v279 = vld [vmem:[#allocation2 + $0x468] sm:$0xff]
    %v280 = vld [vmem:[#allocation2 + $0x470] sm:$0xff]
    %v281 = vld [vmem:[#allocation2 + $0x478] sm:$0xff]
    %v282 = vld [vmem:[#allocation2 + $0x480] sm:$0xff]
    %v283 = vld [vmem:[#allocation2 + $0x488] sm:$0xff]
    %v284 = vld [vmem:[#allocation2 + $0x490] sm:$0xff]
    %v285 = vld [vmem:[#allocation2 + $0x498] sm:$0xff]
    %v286 = vld [vmem:[#allocation2 + $0x4a0] sm:$0xff]
    %v287 = vld [vmem:[#allocation2 + $0x4a8] sm:$0xff]
    %v288 = vld [vmem:[#allocation2 + $0x4b0] sm:$0xff]
    %v289 = vld [vmem:[#allocation2 + $0x4b8] sm:$0xff]
    %v290 = vld [vmem:[#allocation2 + $0x4c0] sm:$0xff]
    %v291 = vld [vmem:[#allocation2 + $0x4c8] sm:$0xff]
    %v292 = vld [vmem:[#allocation2 + $0x4d0] sm:$0xff]
    %v293 = vld [vmem:[#allocation2 + $0x4d8] sm:$0xff]
    %v294 = vld [vmem:[#allocation2 + $0x4e0] sm:$0xff]
    %v295 = vld [vmem:[#allocation2 + $0x4e8] sm:$0xff]
    %v296 = vld [vmem:[#allocation2 + $0x4f0] sm:$0xff]
    %v297 = vld [vmem:[#allocation2 + $0x4f8] sm:$0xff]
    %v298 = vld [vmem:[#allocation2 + $0x500] sm:$0xff]
    %v299 = vld [vmem:[#allocation2 + $0x508] sm:$0xff]
    %v300 = vld [vmem:[#allocation2 + $0x510] sm:$0xff]
    %v301 = vld [vmem:[#allocation2 + $0x518] sm:$0xff]
    %v302 = vld [vmem:[#allocation2 + $0x520] sm:$0xff]
    %v303 = vld [vmem:[#allocation2 + $0x528] sm:$0xff]
    %v304 = vld [vmem:[#allocation2 + $0x530] sm:$0xff]
    %v305 = vld [vmem:[#allocation2 + $0x538] sm:$0xff]
    %v306 = vld [vmem:[#allocation2 + $0x540] sm:$0xff]
    %v307 = vld [vmem:[#allocation2 + $0x548] sm:$0xff]
    %v308 = vld [vmem:[#allocation2 + $0x550] sm:$0xff]
    %v309 = vld [vmem:[#allocation2 + $0x558] sm:$0xff]
    %v310 = vld [vmem:[#allocation2 + $0x560] sm:$0xff]
    %v311 = vld [vmem:[#allocation2 + $0x568] sm:$0xff]
    %v312 = vld [vmem:[#allocation2 + $0x570] sm:$0xff]
    %v313 = vld [vmem:[#allocation2 + $0x578] sm:$0xff]
    %v314 = vld [vmem:[#allocation2 + $0x580] sm:$0xff]
    %v315 = vld [vmem:[#allocation2 + $0x588] sm:$0xff]
    %v316 = vld [vmem:[#allocation2 + $0x590] sm:$0xff]
    %v317 = vld [vmem:[#allocation2 + $0x598] sm:$0xff]
    %v318 = vld [vmem:[#allocation2 + $0x5a0] sm:$0xff]
    %v319 = vld [vmem:[#allocation2 + $0x5a8] sm:$0xff]
    %v320 = vld [vmem:[#allocation2 + $0x5b0] sm:$0xff]
    %v321 = vld [vmem:[#allocation2 + $0x5b8] sm:$0xff]
    %v322 = vld [vmem:[#allocation2 + $0x5c0] sm:$0xff]
    %v323 = vld [vmem:[#allocation2 + $0x5c8] sm:$0xff]
    %v324 = vld [vmem:[#allocation2 + $0x5d0] sm:$0xff]
    %v325 = vld [vmem:[#allocation2 + $0x5d8] sm:$0xff]
    %v326 = vld [vmem:[#allocation2 + $0x5e0] sm:$0xff]
    %v327 = vld [vmem:[#allocation2 + $0x5e8] sm:$0xff]
    %v328 = vld [vmem:[#allocation2 + $0x5f0] sm:$0xff]
    %v329 = vld [vmem:[#allocation2 + $0x5f8] sm:$0xff]
    %v330 = vld [vmem:[#allocation2 + $0x600] sm:$0xff]
    %v331 = vld [vmem:[#allocation2 + $0x608] sm:$0xff]
    %v332 = vld [vmem:[#allocation2 + $0x610] sm:$0xff]
    %v333 = vld [vmem:[#allocation2 + $0x618] sm:$0xff]
    %v334 = vld [vmem:[#allocation2 + $0x620] sm:$0xff]
    %v335 = vld [vmem:[#allocation2 + $0x628] sm:$0xff]
    %v336 = vld [vmem:[#allocation2 + $0x630] sm:$0xff]
    %v337 = vld [vmem:[#allocation2 + $0x638] sm:$0xff]
    %v338 = vld [vmem:[#allocation2 + $0x640] sm:$0xff]
    %v339 = vld [vmem:[#allocation2 + $0x648] sm:$0xff]
    %v340 = vld [vmem:[#allocation2 + $0x650] sm:$0xff]
    %v341 = vld [vmem:[#allocation2 + $0x658] sm:$0xff]
    %v342 = vld [vmem:[#allocation2 + $0x660] sm:$0xff]
    %v343 = vld [vmem:[#allocation2 + $0x668] sm:$0xff]
    %v344 = vld [vmem:[#allocation2 + $0x670] sm:$0xff]
    %v345 = vld [vmem:[#allocation2 + $0x678] sm:$0xff]
    %v346 = vld [vmem:[#allocation2 + $0x680] sm:$0xff]
    %v347 = vld [vmem:[#allocation2 + $0x688] sm:$0xff]
    %v348 = vld [vmem:[#allocation2 + $0x690] sm:$0xff]
    %v349 = vld [vmem:[#allocation2 + $0x698] sm:$0xff]
    %v350 = vld [vmem:[#allocation2 + $0x6a0] sm:$0xff]
    %v351 = vld [vmem:[#allocation2 + $0x6a8] sm:$0xff]
    %v352 = vld [vmem:[#allocation2 + $0x6b0] sm:$0xff]
    %v353 = vld [vmem:[#allocation2 + $0x6b8] sm:$0xff]
    %v354 = vld [vmem:[#allocation2 + $0x6c0] sm:$0xff]
    %v355 = vld [vmem:[#allocation2 + $0x6c8] sm:$0xff]
    %v356 = vld [vmem:[#allocation2 + $0x6d0] sm:$0xff]
    %v357 = vld [vmem:[#allocation2 + $0x6d8] sm:$0xff]
    %v358 = vld [vmem:[#allocation2 + $0x6e0] sm:$0xff]
    %v359 = vld [vmem:[#allocation2 + $0x6e8] sm:$0xff]
    %v360 = vld [vmem:[#allocation2 + $0x6f0] sm:$0xff]
    %v361 = vld [vmem:[#allocation2 + $0x6f8] sm:$0xff]
    %v362 = vld [vmem:[#allocation2 + $0x700] sm:$0xff]
    %v363 = vld [vmem:[#allocation2 + $0x708] sm:$0xff]
    %v364 = vld [vmem:[#allocation2 + $0x710] sm:$0xff]
    %v365 = vld [vmem:[#allocation2 + $0x718] sm:$0xff]
    %v366 = vld [vmem:[#allocation2 + $0x720] sm:$0xff]
    %v367 = vld [vmem:[#allocation2 + $0x728] sm:$0xff]
    %v368 = vld [vmem:[#allocation2 + $0x730] sm:$0xff]
    %v369 = vld [vmem:[#allocation2 + $0x738] sm:$0xff]
    %v370 = vld [vmem:[#allocation2 + $0x740] sm:$0xff]
    %v371 = vld [vmem:[#allocation2 + $0x748] sm:$0xff]
    %v372 = vld [vmem:[#allocation2 + $0x750] sm:$0xff]
    %v373 = vld [vmem:[#allocation2 + $0x758] sm:$0xff]
    %v374 = vld [vmem:[#allocation2 + $0x760] sm:$0xff]
    %v375 = vld [vmem:[#allocation2 + $0x768] sm:$0xff]
    %v376 = vld [vmem:[#allocation2 + $0x770] sm:$0xff]
    %v377 = vld [vmem:[#allocation2 + $0x778] sm:$0xff]
    %v378 = vld [vmem:[#allocation2 + $0x780] sm:$0xff]
    %v379 = vld [vmem:[#allocation2 + $0x788] sm:$0xff]
    %v380 = vld [vmem:[#allocation2 + $0x790] sm:$0xff]
    %v381 = vld [vmem:[#allocation2 + $0x798] sm:$0xff]
    %v382 = vld [vmem:[#allocation2 + $0x7a0] sm:$0xff]
    %v383 = vld [vmem:[#allocation2 + $0x7a8] sm:$0xff]
    %v384 = vld [vmem:[#allocation2 + $0x7b0] sm:$0xff]
    %v385 = vld [vmem:[#allocation2 + $0x7b8] sm:$0xff]
    %v386 = vld [vmem:[#allocation2 + $0x7c0] sm:$0xff]
    %v387 = vld [vmem:[#allocation2 + $0x7c8] sm:$0xff]
    %v388 = vld [vmem:[#allocation2 + $0x7d0] sm:$0xff]
    %v389 = vld [vmem:[#allocation2 + $0x7d8] sm:$0xff]
    %v390 = vld [vmem:[#allocation2 + $0x7e0] sm:$0xff]
    %v391 = vld [vmem:[#allocation2 + $0x7e8] sm:$0xff]
    %v392 = vld [vmem:[#allocation2 + $0x7f0] sm:$0xff]
    %v393 = vld [vmem:[#allocation2 + $0x7f8] sm:$0xff]
    %v394 = vld [vmem:[#allocation2 + $0x800] sm:$0xff]
    %v395 = vld [vmem:[#allocation2 + $0x808] sm:$0xff]
    %v396 = vld [vmem:[#allocation2 + $0x810] sm:$0xff]
    %v397 = vld [vmem:[#allocation2 + $0x818] sm:$0xff]
    %v398 = vld [vmem:[#allocation2 + $0x820] sm:$0xff]
    %v399 = vld [vmem:[#allocation2 + $0x828] sm:$0xff]
    %v400 = vld [vmem:[#allocation2 + $0x830] sm:$0xff]
    %v401 = vld [vmem:[#allocation2 + $0x838] sm:$0xff]
    %v402 = vld [vmem:[#allocation2 + $0x840] sm:$0xff]
    %v403 = vld [vmem:[#allocation2 + $0x848] sm:$0xff]
    %v404 = vld [vmem:[#allocation2 + $0x850] sm:$0xff]
    %v405 = vld [vmem:[#allocation2 + $0x858] sm:$0xff]
    %v406 = vld [vmem:[#allocation2 + $0x860] sm:$0xff]
    %v407 = vld [vmem:[#allocation2 + $0x868] sm:$0xff]
    %v408 = vld [vmem:[#allocation2 + $0x870] sm:$0xff]
    %v409 = vld [vmem:[#allocation2 + $0x878] sm:$0xff]
    %v410 = vld [vmem:[#allocation2 + $0x880] sm:$0xff]
    %v411 = vld [vmem:[#allocation2 + $0x888] sm:$0xff]
    %v412 = vld [vmem:[#allocation2 + $0x890] sm:$0xff]
    %v413 = vld [vmem:[#allocation2 + $0x898] sm:$0xff]
    %v414 = vld [vmem:[#allocation2 + $0x8a0] sm:$0xff]
    %v415 = vld [vmem:[#allocation2 + $0x8a8] sm:$0xff]
    %v416 = vld [vmem:[#allocation2 + $0x8b0] sm:$0xff]
    %v417 = vld [vmem:[#allocation2 + $0x8b8] sm:$0xff]
    %v418 = vld [vmem:[#allocation2 + $0x8c0] sm:$0xff]
    %v419 = vld [vmem:[#allocation2 + $0x8c8] sm:$0xff]
    %v420 = vld [vmem:[#allocation2 + $0x8d0] sm:$0xff]
    %v421 = vld [vmem:[#allocation2 + $0x8d8] sm:$0xff]
    %v422 = vld [vmem:[#allocation2 + $0x8e0] sm:$0xff]
    %v423 = vld [vmem:[#allocation2 + $0x8e8] sm:$0xff]
    %v424 = vld [vmem:[#allocation2 + $0x8f0] sm:$0xff]
    %v425 = vld [vmem:[#allocation2 + $0x8f8] sm:$0xff]
    %v426 = vld [vmem:[#allocation2 + $0x900] sm:$0xff]
    %v427 = vld [vmem:[#allocation2 + $0x908] sm:$0xff]
    %v428 = vld [vmem:[#allocation2 + $0x910] sm:$0xff]
    %v429 = vld [vmem:[#allocation2 + $0x918] sm:$0xff]
    %v430 = vld [vmem:[#allocation2 + $0x920] sm:$0xff]
    %v431 = vld [vmem:[#allocation2 + $0x928] sm:$0xff]
    %v432 = vld [vmem:[#allocation2 + $0x930] sm:$0xff]
    %v433 = vld [vmem:[#allocation2 + $0x938] sm:$0xff]
    %v434 = vld [vmem:[#allocation2 + $0x940] sm:$0xff]
    %v435 = vld [vmem:[#allocation2 + $0x948] sm:$0xff]
    %v436 = vld [vmem:[#allocation2 + $0x950] sm:$0xff]
    %v437 = vld [vmem:[#allocation2 + $0x958] sm:$0xff]
    %v438 = vld [vmem:[#allocation2 + $0x960] sm:$0xff]
    %v439 = vld [vmem:[#allocation2 + $0x968] sm:$0xff]
    %v440 = vld [vmem:[#allocation2 + $0x970] sm:$0xff]
    %v441 = vld [vmem:[#allocation2 + $0x978] sm:$0xff]
    %v442 = vld [vmem:[#allocation2 + $0x980] sm:$0xff]
    %v443 = vld [vmem:[#allocation2 + $0x988] sm:$0xff]
    %v444 = vld [vmem:[#allocation2 + $0x990] sm:$0xff]
    %v445 = vld [vmem:[#allocation2 + $0x998] sm:$0xff]
    %v446 = vld [vmem:[#allocation2 + $0x9a0] sm:$0xff]
    %v447 = vld [vmem:[#allocation2 + $0x9a8] sm:$0xff]
    %v448 = vld [vmem:[#allocation2 + $0x9b0] sm:$0xff]
    %v449 = vld [vmem:[#allocation2 + $0x9b8] sm:$0xff]
    %v450 = vld [vmem:[#allocation2 + $0x9c0] sm:$0xff]
    %v451 = vld [vmem:[#allocation2 + $0x9c8] sm:$0xff]
    %v452 = vld [vmem:[#allocation2 + $0x9d0] sm:$0xff]
    %v453 = vld [vmem:[#allocation2 + $0x9d8] sm:$0xff]
    %v454 = vld [vmem:[#allocation2 + $0x9e0] sm:$0xff]
    %v455 = vld [vmem:[#allocation2 + $0x9e8] sm:$0xff]
    %v456 = vld [vmem:[#allocation2 + $0x9f0] sm:$0xff]
    %v457 = vld [vmem:[#allocation2 + $0x9f8] sm:$0xff]
    %v458 = vld [vmem:[#allocation2 + $0xa00] sm:$0xff]
    %v459 = vld [vmem:[#allocation2 + $0xa08] sm:$0xff]
    %v460 = vld [vmem:[#allocation2 + $0xa10] sm:$0xff]
    %v461 = vld [vmem:[#allocation2 + $0xa18] sm:$0xff]
    %v462 = vld [vmem:[#allocation2 + $0xa20] sm:$0xff]
    %v463 = vld [vmem:[#allocation2 + $0xa28] sm:$0xff]
    %v464 = vld [vmem:[#allocation2 + $0xa30] sm:$0xff]
    %v465 = vld [vmem:[#allocation2 + $0xa38] sm:$0xff]
    %v466 = vld [vmem:[#allocation2 + $0xa40] sm:$0xff]
    %v467 = vld [vmem:[#allocation2 + $0xa48] sm:$0xff]
    %v468 = vld [vmem:[#allocation2 + $0xa50] sm:$0xff]
    %v469 = vld [vmem:[#allocation2 + $0xa58] sm:$0xff]
    %v470 = vld [vmem:[#allocation2 + $0xa60] sm:$0xff]
    %v471 = vld [vmem:[#allocation2 + $0xa68] sm:$0xff]
    %v472 = vld [vmem:[#allocation2 + $0xa70] sm:$0xff]
    %v473 = vld [vmem:[#allocation2 + $0xa78] sm:$0xff]
    %v474 = vld [vmem:[#allocation2 + $0xa80] sm:$0xff]
    %v475 = vld [vmem:[#allocation2 + $0xa88] sm:$0xff]
    %v476 = vld [vmem:[#allocation2 + $0xa90] sm:$0xff]
    %v477 = vld [vmem:[#allocation2 + $0xa98] sm:$0xff]
    %v478 = vld [vmem:[#allocation2 + $0xaa0] sm:$0xff]
    %v479 = vld [vmem:[#allocation2 + $0xaa8] sm:$0xff]
    %v480 = vld [vmem:[#allocation2 + $0xab0] sm:$0xff]
    %v481 = vld [vmem:[#allocation2 + $0xab8] sm:$0xff]
    %v482 = vld [vmem:[#allocation5] sm:$0xf]
    %v484 = vlaneseq
    %v485 = vshrl.u32 %v484, 7
    %v486 = vsub.s32 0, %v485
    %v487 = vrot.slane %v482, %v486
    %v488 = vlaneseq
    %v489 = vshrl.u32 %v488, 7
    %v490 = vsub.s32 1, %v489
    %v491 = vrot.slane %v482, %v490
    %v492 = vlaneseq
    %v493 = vshrl.u32 %v492, 7
    %v494 = vsub.s32 2, %v493
    %v495 = vrot.slane %v482, %v494
    %v496 = vlaneseq
    %v497 = vshrl.u32 %v496, 7
    %v498 = vsub.s32 3, %v497
    %v499 = vrot.slane %v482, %v498
    %v600 = vunpack.c.l.b16 %v42
    %v601 = vunpack.c.h.b16 %v42
    %v602 = vunpack.c.l.b16 %v43
    %v603 = vunpack.c.h.b16 %v43
    %v604 = vunpack.c.l.b16 %v44
    %v605 = vunpack.c.h.b16 %v44
    %v606 = vunpack.c.l.b16 %v45
    %v607 = vunpack.c.h.b16 %v45
    %v608 = vunpack.c.l.b16 %v46
    %v609 = vunpack.c.h.b16 %v46
    %v610 = vunpack.c.l.b16 %v47
    %v611 = vunpack.c.l.b16 %v48
    %v612 = vunpack.c.h.b16 %v48
    %v613 = vunpack.c.l.b16 %v49
    %v614 = vunpack.c.h.b16 %v49
    %v615 = vunpack.c.l.b16 %v50
    %v616 = vunpack.c.h.b16 %v50
    %v617 = vunpack.c.l.b16 %v51
    %v618 = vunpack.c.h.b16 %v51
    %v619 = vunpack.c.l.b16 %v52
    %v620 = vunpack.c.h.b16 %v52
    %v621 = vunpack.c.l.b16 %v53
    %v622 = vunpack.c.l.b16 %v54
    %v623 = vunpack.c.h.b16 %v54
    %v624 = vunpack.c.l.b16 %v55
    %v625 = vunpack.c.h.b16 %v55
    %v626 = vunpack.c.l.b16 %v56
    %v627 = vunpack.c.h.b16 %v56
    %v628 = vunpack.c.l.b16 %v57
    %v629 = vunpack.c.h.b16 %v57
    %v630 = vunpack.c.l.b16 %v58
    %v631 = vunpack.c.h.b16 %v58
    %v632 = vunpack.c.l.b16 %v59
    %v633 = vunpack.c.l.b16 %v60
    %v634 = vunpack.c.h.b16 %v60
    %v635 = vunpack.c.l.b16 %v61
    %v636 = vunpack.c.h.b16 %v61
    %v637 = vunpack.c.l.b16 %v62
    %v638 = vunpack.c.h.b16 %v62
    %v639 = vunpack.c.l.b16 %v63
    %v640 = vunpack.c.h.b16 %v63
    %v641 = vunpack.c.l.b16 %v64
    %v642 = vunpack.c.h.b16 %v64
    %v643 = vunpack.c.l.b16 %v65
    %v644 = vunpack.c.l.b16 %v66
    %v645 = vunpack.c.h.b16 %v66
    %v646 = vunpack.c.l.b16 %v67
    %v647 = vunpack.c.h.b16 %v67
    %v648 = vunpack.c.l.b16 %v68
    %v649 = vunpack.c.h.b16 %v68
    %v650 = vunpack.c.l.b16 %v69
    %v651 = vunpack.c.h.b16 %v69
    %v652 = vunpack.c.l.b16 %v70
    %v653 = vunpack.c.h.b16 %v70
    %v654 = vunpack.c.l.b16 %v71
    %v655 = vunpack.c.l.b16 %v72
    %v656 = vunpack.c.h.b16 %v72
    %v657 = vunpack.c.l.b16 %v73
    %v658 = vunpack.c.h.b16 %v73
    %v659 = vunpack.c.l.b16 %v74
    %v660 = vunpack.c.h.b16 %v74
    %v661 = vunpack.c.l.b16 %v75
    %v662 = vunpack.c.h.b16 %v75
    %v663 = vunpack.c.l.b16 %v76
    %v664 = vunpack.c.h.b16 %v76
    %v665 = vunpack.c.l.b16 %v77
    %v666 = vunpack.c.l.b16 %v78
    %v667 = vunpack.c.h.b16 %v78
    %v668 = vunpack.c.l.b16 %v79
    %v669 = vunpack.c.h.b16 %v79
    %v670 = vunpack.c.l.b16 %v80
    %v671 = vunpack.c.h.b16 %v80
    %v672 = vunpack.c.l.b16 %v81
    %v673 = vunpack.c.h.b16 %v81
    %v674 = vunpack.c.l.b16 %v82
    %v675 = vunpack.c.h.b16 %v82
    %v676 = vunpack.c.l.b16 %v83
    %v677 = vunpack.c.l.b16 %v84
    %v678 = vunpack.c.h.b16 %v84
    %v679 = vunpack.c.l.b16 %v85
    %v680 = vunpack.c.h.b16 %v85
    %v681 = vunpack.c.l.b16 %v86
    %v682 = vunpack.c.h.b16 %v86
    %v683 = vunpack.c.l.b16 %v87
    %v684 = vunpack.c.h.b16 %v87
    %v685 = vunpack.c.l.b16 %v88
    %v686 = vunpack.c.h.b16 %v88
    %v687 = vunpack.c.l.b16 %v89
    %v688 = vunpack.c.l.b16 %v90
    %v689 = vunpack.c.h.b16 %v90
    %v690 = vunpack.c.l.b16 %v91
    %v691 = vunpack.c.h.b16 %v91
    %v692 = vunpack.c.l.b16 %v92
    %v693 = vunpack.c.h.b16 %v92
    %v694 = vunpack.c.l.b16 %v93
    %v695 = vunpack.c.h.b16 %v93
    %v696 = vunpack.c.l.b16 %v94
    %v697 = vunpack.c.h.b16 %v94
    %v698 = vunpack.c.l.b16 %v95
    %v699 = vunpack.c.l.b16 %v96
    %v700 = vunpack.c.h.b16 %v96
    %v701 = vunpack.c.l.b16 %v97
    %v702 = vunpack.c.h.b16 %v97
    %v703 = vunpack.c.l.b16 %v98
    %v704 = vunpack.c.h.b16 %v98
    %v705 = vunpack.c.l.b16 %v99
    %v706 = vunpack.c.h.b16 %v99
    %v707 = vunpack.c.l.b16 %v100
    %v708 = vunpack.c.h.b16 %v100
    %v709 = vunpack.c.l.b16 %v101
    %v710 = vunpack.c.l.b16 %v102
    %v711 = vunpack.c.h.b16 %v102
    %v712 = vunpack.c.l.b16 %v103
    %v713 = vunpack.c.h.b16 %v103
    %v714 = vunpack.c.l.b16 %v104
    %v715 = vunpack.c.h.b16 %v104
    %v716 = vunpack.c.l.b16 %v105
    %v717 = vunpack.c.h.b16 %v105
    %v718 = vunpack.c.l.b16 %v106
    %v719 = vunpack.c.h.b16 %v106
    %v720 = vunpack.c.l.b16 %v107
    %v721 = vunpack.c.l.b16 %v108
    %v722 = vunpack.c.h.b16 %v108
    %v723 = vunpack.c.l.b16 %v109
    %v724 = vunpack.c.h.b16 %v109
    %v725 = vunpack.c.l.b16 %v110
    %v726 = vunpack.c.h.b16 %v110
    %v727 = vunpack.c.l.b16 %v111
    %v728 = vunpack.c.h.b16 %v111
    %v729 = vunpack.c.l.b16 %v112
    %v730 = vunpack.c.h.b16 %v112
    %v731 = vunpack.c.l.b16 %v113
    %v732 = vunpack.c.l.b16 %v114
    %v733 = vunpack.c.h.b16 %v114
    %v734 = vunpack.c.l.b16 %v115
    %v735 = vunpack.c.h.b16 %v115
    %v736 = vunpack.c.l.b16 %v116
    %v737 = vunpack.c.h.b16 %v116
    %v738 = vunpack.c.l.b16 %v117
    %v739 = vunpack.c.h.b16 %v117
    %v740 = vunpack.c.l.b16 %v118
    %v741 = vunpack.c.h.b16 %v118
    %v742 = vunpack.c.l.b16 %v119
    %v743 = vunpack.c.l.b16 %v120
    %v744 = vunpack.c.h.b16 %v120
    %v745 = vunpack.c.l.b16 %v121
    %v746 = vunpack.c.h.b16 %v121
    %v747 = vunpack.c.l.b16 %v122
    %v748 = vunpack.c.h.b16 %v122
    %v749 = vunpack.c.l.b16 %v123
    %v750 = vunpack.c.h.b16 %v123
    %v751 = vunpack.c.l.b16 %v124
    %v752 = vunpack.c.h.b16 %v124
    %v753 = vunpack.c.l.b16 %v125
    %v754 = vunpack.c.l.b16 %v126
    %v755 = vunpack.c.h.b16 %v126
    %v756 = vunpack.c.l.b16 %v127
    %v757 = vunpack.c.h.b16 %v127
    %v758 = vunpack.c.l.b16 %v128
    %v759 = vunpack.c.h.b16 %v128
    %v760 = vunpack.c.l.b16 %v129
    %v761 = vunpack.c.h.b16 %v129
    %v762 = vunpack.c.l.b16 %v130
    %v763 = vunpack.c.h.b16 %v130
    %v764 = vunpack.c.l.b16 %v131
    %v765 = vunpack.c.l.b16 %v132
    %v766 = vunpack.c.h.b16 %v132
    %v767 = vunpack.c.l.b16 %v133
    %v768 = vunpack.c.h.b16 %v133
    %v769 = vunpack.c.l.b16 %v134
    %v770 = vunpack.c.h.b16 %v134
    %v771 = vunpack.c.l.b16 %v135
    %v772 = vunpack.c.h.b16 %v135
    %v773 = vunpack.c.l.b16 %v136
    %v774 = vunpack.c.h.b16 %v136
    %v775 = vunpack.c.l.b16 %v137
    %v776 = vpack.c.b16 %v611, %v600
    %v777 = vpack.c.b16 %v612, %v601
    %v778 = vpack.c.b16 %v613, %v602
    %v779 = vpack.c.b16 %v614, %v603
    %v780 = vpack.c.b16 %v615, %v604
    %v781 = vpack.c.b16 %v616, %v605
    %v782 = vpack.c.b16 %v617, %v606
    %v783 = vpack.c.b16 %v618, %v607
    %v784 = vpack.c.b16 %v619, %v608
    %v785 = vpack.c.b16 %v620, %v609
    %v786 = vpack.c.b16 %v621, %v610
    %v787 = vpack.c.b16 %v633, %v622
    %v788 = vpack.c.b16 %v634, %v623
    %v789 = vpack.c.b16 %v635, %v624
    %v790 = vpack.c.b16 %v636, %v625
    %v791 = vpack.c.b16 %v637, %v626
    %v792 = vpack.c.b16 %v638, %v627
    %v793 = vpack.c.b16 %v639, %v628
    %v794 = vpack.c.b16 %v640, %v629
    %v795 = vpack.c.b16 %v641, %v630
    %v796 = vpack.c.b16 %v642, %v631
    %v797 = vpack.c.b16 %v643, %v632
    %v798 = vpack.c.b16 %v655, %v644
    %v799 = vpack.c.b16 %v656, %v645
    %v800 = vpack.c.b16 %v657, %v646
    %v801 = vpack.c.b16 %v658, %v647
    %v802 = vpack.c.b16 %v659, %v648
    %v803 = vpack.c.b16 %v660, %v649
    %v804 = vpack.c.b16 %v661, %v650
    %v805 = vpack.c.b16 %v662, %v651
    %v806 = vpack.c.b16 %v663, %v652
    %v807 = vpack.c.b16 %v664, %v653
    %v808 = vpack.c.b16 %v665, %v654
    %v809 = vpack.c.b16 %v677, %v666
    %v810 = vpack.c.b16 %v678, %v667
    %v811 = vpack.c.b16 %v679, %v668
    %v812 = vpack.c.b16 %v680, %v669
    %v813 = vpack.c.b16 %v681, %v670
    %v814 = vpack.c.b16 %v682, %v671
    %v815 = vpack.c.b16 %v683, %v672
    %v816 = vpack.c.b16 %v684, %v673
    %v817 = vpack.c.b16 %v685, %v674
    %v818 = vpack.c.b16 %v686, %v675
    %v819 = vpack.c.b16 %v687, %v676
    %v820 = vpack.c.b16 %v699, %v688
    %v821 = vpack.c.b16 %v700, %v689
    %v822 = vpack.c.b16 %v701, %v690
    %v823 = vpack.c.b16 %v702, %v691
    %v824 = vpack.c.b16 %v703, %v692
    %v825 = vpack.c.b16 %v704, %v693
    %v826 = vpack.c.b16 %v705, %v694
    %v827 = vpack.c.b16 %v706, %v695
    %v828 = vpack.c.b16 %v707, %v696
    %v829 = vpack.c.b16 %v708, %v697
    %v830 = vpack.c.b16 %v709, %v698
    %v831 = vpack.c.b16 %v721, %v710
    %v832 = vpack.c.b16 %v722, %v711
    %v833 = vpack.c.b16 %v723, %v712
    %v834 = vpack.c.b16 %v724, %v713
    %v835 = vpack.c.b16 %v725, %v714
    %v836 = vpack.c.b16 %v726, %v715
    %v837 = vpack.c.b16 %v727, %v716
    %v838 = vpack.c.b16 %v728, %v717
    %v839 = vpack.c.b16 %v729, %v718
    %v840 = vpack.c.b16 %v730, %v719
    %v841 = vpack.c.b16 %v731, %v720
    %v842 = vpack.c.b16 %v743, %v732
    %v843 = vpack.c.b16 %v744, %v733
    %v844 = vpack.c.b16 %v745, %v734
    %v845 = vpack.c.b16 %v746, %v735
    %v846 = vpack.c.b16 %v747, %v736
    %v847 = vpack.c.b16 %v748, %v737
    %v848 = vpack.c.b16 %v749, %v738
    %v849 = vpack.c.b16 %v750, %v739
    %v850 = vpack.c.b16 %v751, %v740
    %v851 = vpack.c.b16 %v752, %v741
    %v852 = vpack.c.b16 %v753, %v742
    %v853 = vpack.c.b16 %v765, %v754
    %v854 = vpack.c.b16 %v766, %v755
    %v855 = vpack.c.b16 %v767, %v756
    %v856 = vpack.c.b16 %v768, %v757
    %v857 = vpack.c.b16 %v769, %v758
    %v858 = vpack.c.b16 %v770, %v759
    %v859 = vpack.c.b16 %v771, %v760
    %v860 = vpack.c.b16 %v772, %v761
    %v861 = vpack.c.b16 %v773, %v762
    %v862 = vpack.c.b16 %v774, %v763
    %v863 = vpack.c.b16 %v775, %v764
    %v1288 = vunpack.c.l.b16 %v138
    %v1289 = vunpack.c.h.b16 %v138
    %v1290 = vunpack.c.l.b16 %v139
    %v1291 = vunpack.c.h.b16 %v139
    %v1292 = vunpack.c.l.b16 %v140
    %v1293 = vunpack.c.h.b16 %v140
    %v1294 = vunpack.c.l.b16 %v141
    %v1295 = vunpack.c.h.b16 %v141
    %v1296 = vunpack.c.l.b16 %v142
    %v1297 = vunpack.c.h.b16 %v142
    %v1298 = vunpack.c.l.b16 %v143
    %v1299 = vunpack.c.h.b16 %v143
    %v1300 = vunpack.c.l.b16 %v144
    %v1301 = vunpack.c.h.b16 %v144
    %v1302 = vunpack.c.l.b16 %v145
    %v1303 = vunpack.c.h.b16 %v145
    %v1304 = vunpack.c.l.b16 %v146
    %v1305 = vunpack.c.h.b16 %v146
    %v1306 = vunpack.c.l.b16 %v147
    %v1307 = vunpack.c.h.b16 %v147
    %v1308 = vunpack.c.l.b16 %v148
    %v1309 = vunpack.c.h.b16 %v148
    %v1310 = vunpack.c.l.b16 %v149
    %v1311 = vunpack.c.h.b16 %v149
    %v1312 = vunpack.c.l.b16 %v150
    %v1313 = vunpack.c.h.b16 %v150
    %v1314 = vunpack.c.l.b16 %v151
    %v1315 = vunpack.c.h.b16 %v151
    %v1316 = vunpack.c.l.b16 %v152
    %v1317 = vunpack.c.h.b16 %v152
    %v1318 = vunpack.c.l.b16 %v153
    %v1319 = vunpack.c.h.b16 %v153
    %v1320 = vunpack.c.l.b16 %v154
    %v1321 = vunpack.c.h.b16 %v154
    %v1322 = vunpack.c.l.b16 %v155
    %v1323 = vunpack.c.h.b16 %v155
    %v1324 = vunpack.c.l.b16 %v156
    %v1325 = vunpack.c.h.b16 %v156
    %v1326 = vunpack.c.l.b16 %v157
    %v1327 = vunpack.c.h.b16 %v157
    %v1328 = vunpack.c.l.b16 %v158
    %v1329 = vunpack.c.h.b16 %v158
    %v1330 = vunpack.c.l.b16 %v159
    %v1331 = vunpack.c.h.b16 %v159
    %v1332 = vunpack.c.l.b16 %v160
    %v1333 = vunpack.c.h.b16 %v160
    %v1334 = vunpack.c.l.b16 %v161
    %v1335 = vunpack.c.h.b16 %v161
    %v1336 = vunpack.c.l.b16 %v162
    %v1337 = vunpack.c.h.b16 %v162
    %v1338 = vunpack.c.l.b16 %v163
    %v1339 = vunpack.c.h.b16 %v163
    %v1340 = vunpack.c.l.b16 %v164
    %v1341 = vunpack.c.h.b16 %v164
    %v1342 = vunpack.c.l.b16 %v165
    %v1343 = vunpack.c.h.b16 %v165
    %v1344 = vunpack.c.l.b16 %v166
    %v1345 = vunpack.c.h.b16 %v166
    %v1346 = vunpack.c.l.b16 %v167
    %v1347 = vunpack.c.h.b16 %v167
    %v1348 = vunpack.c.l.b16 %v168
    %v1349 = vunpack.c.h.b16 %v168
    %v1350 = vunpack.c.l.b16 %v169
    %v1351 = vunpack.c.h.b16 %v169
    %v1352 = vunpack.c.l.b16 %v170
    %v1353 = vunpack.c.h.b16 %v170
    %v1354 = vunpack.c.l.b16 %v171
    %v1355 = vunpack.c.h.b16 %v171
    %v1356 = vunpack.c.l.b16 %v172
    %v1357 = vunpack.c.h.b16 %v172
    %v1358 = vunpack.c.l.b16 %v173
    %v1359 = vunpack.c.h.b16 %v173
    %v1360 = vunpack.c.l.b16 %v174
    %v1361 = vunpack.c.h.b16 %v174
    %v1362 = vunpack.c.l.b16 %v175
    %v1363 = vunpack.c.h.b16 %v175
    %v1364 = vunpack.c.l.b16 %v176
    %v1365 = vunpack.c.h.b16 %v176
    %v1366 = vunpack.c.l.b16 %v177
    %v1367 = vunpack.c.h.b16 %v177
    %v1368 = vunpack.c.l.b16 %v178
    %v1369 = vunpack.c.h.b16 %v178
    %v1370 = vunpack.c.l.b16 %v179
    %v1371 = vunpack.c.h.b16 %v179
    %v1372 = vunpack.c.l.b16 %v180
    %v1373 = vunpack.c.h.b16 %v180
    %v1374 = vunpack.c.l.b16 %v181
    %v1375 = vunpack.c.h.b16 %v181
    %v1376 = vunpack.c.l.b16 %v182
    %v1377 = vunpack.c.h.b16 %v182
    %v1378 = vunpack.c.l.b16 %v183
    %v1379 = vunpack.c.h.b16 %v183
    %v1380 = vunpack.c.l.b16 %v184
    %v1381 = vunpack.c.h.b16 %v184
    %v1382 = vunpack.c.l.b16 %v185
    %v1383 = vunpack.c.h.b16 %v185
    %v1384 = vunpack.c.l.b16 %v186
    %v1385 = vunpack.c.h.b16 %v186
    %v1386 = vunpack.c.l.b16 %v187
    %v1387 = vunpack.c.h.b16 %v187
    %v1388 = vunpack.c.l.b16 %v188
    %v1389 = vunpack.c.h.b16 %v188
    %v1390 = vunpack.c.l.b16 %v189
    %v1391 = vunpack.c.h.b16 %v189
    %v1392 = vunpack.c.l.b16 %v190
    %v1393 = vunpack.c.h.b16 %v190
    %v1394 = vunpack.c.l.b16 %v191
    %v1395 = vunpack.c.h.b16 %v191
    %v1396 = vunpack.c.l.b16 %v192
    %v1397 = vunpack.c.h.b16 %v192
    %v1398 = vunpack.c.l.b16 %v193
    %v1399 = vunpack.c.h.b16 %v193
    %v1400 = vunpack.c.l.b16 %v194
    %v1401 = vunpack.c.h.b16 %v194
    %v1402 = vunpack.c.l.b16 %v195
    %v1403 = vunpack.c.h.b16 %v195
    %v1404 = vunpack.c.l.b16 %v196
    %v1405 = vunpack.c.h.b16 %v196
    %v1406 = vunpack.c.l.b16 %v197
    %v1407 = vunpack.c.h.b16 %v197
    %v1408 = vunpack.c.l.b16 %v198
    %v1409 = vunpack.c.h.b16 %v198
    %v1410 = vunpack.c.l.b16 %v199
    %v1411 = vunpack.c.h.b16 %v199
    %v1412 = vunpack.c.l.b16 %v200
    %v1413 = vunpack.c.h.b16 %v200
    %v1414 = vunpack.c.l.b16 %v201
    %v1415 = vunpack.c.h.b16 %v201
    %v1416 = vunpack.c.l.b16 %v202
    %v1417 = vunpack.c.h.b16 %v202
    %v1418 = vunpack.c.l.b16 %v203
    %v1419 = vunpack.c.h.b16 %v203
    %v1420 = vunpack.c.l.b16 %v204
    %v1421 = vunpack.c.h.b16 %v204
    %v1422 = vunpack.c.l.b16 %v205
    %v1423 = vunpack.c.h.b16 %v205
    %v1424 = vunpack.c.l.b16 %v206
    %v1425 = vunpack.c.h.b16 %v206
    %v1426 = vunpack.c.l.b16 %v207
    %v1427 = vunpack.c.h.b16 %v207
    %v1428 = vunpack.c.l.b16 %v208
    %v1429 = vunpack.c.h.b16 %v208
    %v1430 = vunpack.c.l.b16 %v209
    %v1431 = vunpack.c.h.b16 %v209
    %v1432 = vunpack.c.l.b16 %v210
    %v1433 = vunpack.c.h.b16 %v210
    %v1434 = vunpack.c.l.b16 %v211
    %v1435 = vunpack.c.h.b16 %v211
    %v1436 = vunpack.c.l.b16 %v212
    %v1437 = vunpack.c.h.b16 %v212
    %v1438 = vunpack.c.l.b16 %v213
    %v1439 = vunpack.c.h.b16 %v213
    %v1440 = vunpack.c.l.b16 %v214
    %v1441 = vunpack.c.h.b16 %v214
    %v1442 = vunpack.c.l.b16 %v215
    %v1443 = vunpack.c.h.b16 %v215
    %v1444 = vunpack.c.l.b16 %v216
    %v1445 = vunpack.c.h.b16 %v216
    %v1446 = vunpack.c.l.b16 %v217
    %v1447 = vunpack.c.h.b16 %v217
    %v1448 = vunpack.c.l.b16 %v218
    %v1449 = vunpack.c.h.b16 %v218
    %v1450 = vunpack.c.l.b16 %v219
    %v1451 = vunpack.c.h.b16 %v219
    %v1452 = vunpack.c.l.b16 %v220
    %v1453 = vunpack.c.h.b16 %v220
    %v1454 = vunpack.c.l.b16 %v221
    %v1455 = vunpack.c.h.b16 %v221
    %v1456 = vunpack.c.l.b16 %v222
    %v1457 = vunpack.c.h.b16 %v222
    %v1458 = vunpack.c.l.b16 %v223
    %v1459 = vunpack.c.h.b16 %v223
    %v1460 = vunpack.c.l.b16 %v224
    %v1461 = vunpack.c.h.b16 %v224
    %v1462 = vunpack.c.l.b16 %v225
    %v1463 = vunpack.c.h.b16 %v225
    %v1464 = vunpack.c.l.b16 %v226
    %v1465 = vunpack.c.h.b16 %v226
    %v1466 = vunpack.c.l.b16 %v227
    %v1467 = vunpack.c.h.b16 %v227
    %v1468 = vunpack.c.l.b16 %v228
    %v1469 = vunpack.c.h.b16 %v228
    %v1470 = vunpack.c.l.b16 %v229
    %v1471 = vunpack.c.h.b16 %v229
    %v1472 = vunpack.c.l.b16 %v230
    %v1473 = vunpack.c.h.b16 %v230
    %v1474 = vunpack.c.l.b16 %v231
    %v1475 = vunpack.c.h.b16 %v231
    %v1476 = vunpack.c.l.b16 %v232
    %v1477 = vunpack.c.h.b16 %v232
    %v1478 = vunpack.c.l.b16 %v233
    %v1479 = vunpack.c.h.b16 %v233
    %v1480 = vunpack.c.l.b16 %v234
    %v1481 = vunpack.c.h.b16 %v234
    %v1482 = vunpack.c.l.b16 %v235
    %v1483 = vunpack.c.h.b16 %v235
    %v1484 = vunpack.c.l.b16 %v236
    %v1485 = vunpack.c.h.b16 %v236
    %v1486 = vunpack.c.l.b16 %v237
    %v1487 = vunpack.c.h.b16 %v237
    %v1488 = vunpack.c.l.b16 %v238
    %v1489 = vunpack.c.h.b16 %v238
    %v1490 = vunpack.c.l.b16 %v239
    %v1491 = vunpack.c.h.b16 %v239
    %v1492 = vunpack.c.l.b16 %v240
    %v1493 = vunpack.c.h.b16 %v240
    %v1494 = vunpack.c.l.b16 %v241
    %v1495 = vunpack.c.h.b16 %v241
    %v1496 = vunpack.c.l.b16 %v242
    %v1497 = vunpack.c.h.b16 %v242
    %v1498 = vunpack.c.l.b16 %v243
    %v1499 = vunpack.c.h.b16 %v243
    %v1500 = vunpack.c.l.b16 %v244
    %v1501 = vunpack.c.h.b16 %v244
    %v1502 = vunpack.c.l.b16 %v245
    %v1503 = vunpack.c.h.b16 %v245
    %v1504 = vunpack.c.l.b16 %v246
    %v1505 = vunpack.c.h.b16 %v246
    %v1506 = vunpack.c.l.b16 %v247
    %v1507 = vunpack.c.h.b16 %v247
    %v1508 = vunpack.c.l.b16 %v248
    %v1509 = vunpack.c.h.b16 %v248
    %v1510 = vunpack.c.l.b16 %v249
    %v1511 = vunpack.c.h.b16 %v249
    %v1512 = vunpack.c.l.b16 %v250
    %v1513 = vunpack.c.h.b16 %v250
    %v1514 = vunpack.c.l.b16 %v251
    %v1515 = vunpack.c.h.b16 %v251
    %v1516 = vunpack.c.l.b16 %v252
    %v1517 = vunpack.c.h.b16 %v252
    %v1518 = vunpack.c.l.b16 %v253
    %v1519 = vunpack.c.h.b16 %v253
    %v1520 = vunpack.c.l.b16 %v254
    %v1521 = vunpack.c.h.b16 %v254
    %v1522 = vunpack.c.l.b16 %v255
    %v1523 = vunpack.c.h.b16 %v255
    %v1524 = vunpack.c.l.b16 %v256
    %v1525 = vunpack.c.h.b16 %v256
    %v1526 = vunpack.c.l.b16 %v257
    %v1527 = vunpack.c.h.b16 %v257
    %v1528 = vunpack.c.l.b16 %v258
    %v1529 = vunpack.c.h.b16 %v258
    %v1530 = vunpack.c.l.b16 %v259
    %v1531 = vunpack.c.h.b16 %v259
    %v1532 = vunpack.c.l.b16 %v260
    %v1533 = vunpack.c.h.b16 %v260
    %v1534 = vunpack.c.l.b16 %v261
    %v1535 = vunpack.c.h.b16 %v261
    %v1536 = vunpack.c.l.b16 %v262
    %v1537 = vunpack.c.h.b16 %v262
    %v1538 = vunpack.c.l.b16 %v263
    %v1539 = vunpack.c.h.b16 %v263
    %v1540 = vunpack.c.l.b16 %v264
    %v1541 = vunpack.c.h.b16 %v264
    %v1542 = vunpack.c.l.b16 %v265
    %v1543 = vunpack.c.h.b16 %v265
    %v1544 = vunpack.c.l.b16 %v266
    %v1545 = vunpack.c.h.b16 %v266
    %v1546 = vunpack.c.l.b16 %v267
    %v1547 = vunpack.c.h.b16 %v267
    %v1548 = vunpack.c.l.b16 %v268
    %v1549 = vunpack.c.h.b16 %v268
    %v1550 = vunpack.c.l.b16 %v269
    %v1551 = vunpack.c.h.b16 %v269
    %v1552 = vunpack.c.l.b16 %v270
    %v1553 = vunpack.c.h.b16 %v270
    %v1554 = vunpack.c.l.b16 %v271
    %v1555 = vunpack.c.h.b16 %v271
    %v1556 = vunpack.c.l.b16 %v272
    %v1557 = vunpack.c.h.b16 %v272
    %v1558 = vunpack.c.l.b16 %v273
    %v1559 = vunpack.c.h.b16 %v273
    %v1560 = vunpack.c.l.b16 %v274
    %v1561 = vunpack.c.h.b16 %v274
    %v1562 = vunpack.c.l.b16 %v275
    %v1563 = vunpack.c.h.b16 %v275
    %v1564 = vunpack.c.l.b16 %v276
    %v1565 = vunpack.c.h.b16 %v276
    %v1566 = vunpack.c.l.b16 %v277
    %v1567 = vunpack.c.h.b16 %v277
    %v1568 = vunpack.c.l.b16 %v278
    %v1569 = vunpack.c.h.b16 %v278
    %v1570 = vunpack.c.l.b16 %v279
    %v1571 = vunpack.c.h.b16 %v279
    %v1572 = vunpack.c.l.b16 %v280
    %v1573 = vunpack.c.h.b16 %v280
    %v1574 = vunpack.c.l.b16 %v281
    %v1575 = vunpack.c.h.b16 %v281
    %v1576 = vunpack.c.l.b16 %v282
    %v1577 = vunpack.c.h.b16 %v282
    %v1578 = vunpack.c.l.b16 %v283
    %v1579 = vunpack.c.h.b16 %v283
    %v1580 = vunpack.c.l.b16 %v284
    %v1581 = vunpack.c.h.b16 %v284
    %v1582 = vunpack.c.l.b16 %v285
    %v1583 = vunpack.c.h.b16 %v285
    %v1584 = vunpack.c.l.b16 %v286
    %v1585 = vunpack.c.h.b16 %v286
    %v1586 = vunpack.c.l.b16 %v287
    %v1587 = vunpack.c.h.b16 %v287
    %v1588 = vunpack.c.l.b16 %v288
    %v1589 = vunpack.c.h.b16 %v288
    %v1590 = vunpack.c.l.b16 %v289
    %v1591 = vunpack.c.h.b16 %v289
    %v1592 = vunpack.c.l.b16 %v290
    %v1593 = vunpack.c.h.b16 %v290
    %v1594 = vunpack.c.l.b16 %v291
    %v1595 = vunpack.c.h.b16 %v291
    %v1596 = vunpack.c.l.b16 %v292
    %v1597 = vunpack.c.h.b16 %v292
    %v1598 = vunpack.c.l.b16 %v293
    %v1599 = vunpack.c.h.b16 %v293
    %v1600 = vunpack.c.l.b16 %v294
    %v1601 = vunpack.c.h.b16 %v294
    %v1602 = vunpack.c.l.b16 %v295
    %v1603 = vunpack.c.h.b16 %v295
    %v1604 = vunpack.c.l.b16 %v296
    %v1605 = vunpack.c.h.b16 %v296
    %v1606 = vunpack.c.l.b16 %v297
    %v1607 = vunpack.c.h.b16 %v297
    %v1608 = vunpack.c.l.b16 %v298
    %v1609 = vunpack.c.h.b16 %v298
    %v1610 = vunpack.c.l.b16 %v299
    %v1611 = vunpack.c.h.b16 %v299
    %v1612 = vunpack.c.l.b16 %v300
    %v1613 = vunpack.c.h.b16 %v300
    %v1614 = vunpack.c.l.b16 %v301
    %v1615 = vunpack.c.h.b16 %v301
    %v1616 = vunpack.c.l.b16 %v302
    %v1617 = vunpack.c.h.b16 %v302
    %v1618 = vunpack.c.l.b16 %v303
    %v1619 = vunpack.c.h.b16 %v303
    %v1620 = vunpack.c.l.b16 %v304
    %v1621 = vunpack.c.h.b16 %v304
    %v1622 = vunpack.c.l.b16 %v305
    %v1623 = vunpack.c.h.b16 %v305
    %v1624 = vunpack.c.l.b16 %v306
    %v1625 = vunpack.c.h.b16 %v306
    %v1626 = vunpack.c.l.b16 %v307
    %v1627 = vunpack.c.h.b16 %v307
    %v1628 = vunpack.c.l.b16 %v308
    %v1629 = vunpack.c.h.b16 %v308
    %v1630 = vunpack.c.l.b16 %v309
    %v1631 = vunpack.c.h.b16 %v309
    %v1632 = vunpack.c.l.b16 %v310
    %v1633 = vunpack.c.h.b16 %v310
    %v1634 = vunpack.c.l.b16 %v311
    %v1635 = vunpack.c.h.b16 %v311
    %v1636 = vunpack.c.l.b16 %v312
    %v1637 = vunpack.c.h.b16 %v312
    %v1638 = vunpack.c.l.b16 %v313
    %v1639 = vunpack.c.h.b16 %v313
    %v1640 = vunpack.c.l.b16 %v314
    %v1641 = vunpack.c.h.b16 %v314
    %v1642 = vunpack.c.l.b16 %v315
    %v1643 = vunpack.c.h.b16 %v315
    %v1644 = vunpack.c.l.b16 %v316
    %v1645 = vunpack.c.h.b16 %v316
    %v1646 = vunpack.c.l.b16 %v317
    %v1647 = vunpack.c.h.b16 %v317
    %v1648 = vunpack.c.l.b16 %v318
    %v1649 = vunpack.c.h.b16 %v318
    %v1650 = vunpack.c.l.b16 %v319
    %v1651 = vunpack.c.h.b16 %v319
    %v1652 = vunpack.c.l.b16 %v320
    %v1653 = vunpack.c.h.b16 %v320
    %v1654 = vunpack.c.l.b16 %v321
    %v1655 = vunpack.c.h.b16 %v321
    %v1656 = vunpack.c.l.b16 %v322
    %v1657 = vunpack.c.h.b16 %v322
    %v1658 = vunpack.c.l.b16 %v323
    %v1659 = vunpack.c.h.b16 %v323
    %v1660 = vunpack.c.l.b16 %v324
    %v1661 = vunpack.c.h.b16 %v324
    %v1662 = vunpack.c.l.b16 %v325
    %v1663 = vunpack.c.h.b16 %v325
    %v1664 = vunpack.c.l.b16 %v326
    %v1665 = vunpack.c.h.b16 %v326
    %v1666 = vunpack.c.l.b16 %v327
    %v1667 = vunpack.c.h.b16 %v327
    %v1668 = vunpack.c.l.b16 %v328
    %v1669 = vunpack.c.h.b16 %v328
    %v1670 = vunpack.c.l.b16 %v329
    %v1671 = vunpack.c.h.b16 %v329
    %v1672 = vunpack.c.l.b16 %v330
    %v1673 = vunpack.c.h.b16 %v330
    %v1674 = vunpack.c.l.b16 %v331
    %v1675 = vunpack.c.h.b16 %v331
    %v1676 = vunpack.c.l.b16 %v332
    %v1677 = vunpack.c.h.b16 %v332
    %v1678 = vunpack.c.l.b16 %v333
    %v1679 = vunpack.c.h.b16 %v333
    %v1680 = vunpack.c.l.b16 %v334
    %v1681 = vunpack.c.h.b16 %v334
    %v1682 = vunpack.c.l.b16 %v335
    %v1683 = vunpack.c.h.b16 %v335
    %v1684 = vunpack.c.l.b16 %v336
    %v1685 = vunpack.c.h.b16 %v336
    %v1686 = vunpack.c.l.b16 %v337
    %v1687 = vunpack.c.h.b16 %v337
    %v1688 = vunpack.c.l.b16 %v338
    %v1689 = vunpack.c.h.b16 %v338
    %v1690 = vunpack.c.l.b16 %v339
    %v1691 = vunpack.c.h.b16 %v339
    %v1692 = vunpack.c.l.b16 %v340
    %v1693 = vunpack.c.h.b16 %v340
    %v1694 = vunpack.c.l.b16 %v341
    %v1695 = vunpack.c.h.b16 %v341
    %v1696 = vunpack.c.l.b16 %v342
    %v1697 = vunpack.c.h.b16 %v342
    %v1698 = vunpack.c.l.b16 %v343
    %v1699 = vunpack.c.h.b16 %v343
    %v1700 = vunpack.c.l.b16 %v344
    %v1701 = vunpack.c.h.b16 %v344
    %v1702 = vunpack.c.l.b16 %v345
    %v1703 = vunpack.c.h.b16 %v345
    %v1704 = vunpack.c.l.b16 %v346
    %v1705 = vunpack.c.h.b16 %v346
    %v1706 = vunpack.c.l.b16 %v347
    %v1707 = vunpack.c.h.b16 %v347
    %v1708 = vunpack.c.l.b16 %v348
    %v1709 = vunpack.c.h.b16 %v348
    %v1710 = vunpack.c.l.b16 %v349
    %v1711 = vunpack.c.h.b16 %v349
    %v1712 = vunpack.c.l.b16 %v350
    %v1713 = vunpack.c.h.b16 %v350
    %v1714 = vunpack.c.l.b16 %v351
    %v1715 = vunpack.c.h.b16 %v351
    %v1716 = vunpack.c.l.b16 %v352
    %v1717 = vunpack.c.h.b16 %v352
    %v1718 = vunpack.c.l.b16 %v353
    %v1719 = vunpack.c.h.b16 %v353
    %v1720 = vunpack.c.l.b16 %v354
    %v1721 = vunpack.c.h.b16 %v354
    %v1722 = vunpack.c.l.b16 %v355
    %v1723 = vunpack.c.h.b16 %v355
    %v1724 = vunpack.c.l.b16 %v356
    %v1725 = vunpack.c.h.b16 %v356
    %v1726 = vunpack.c.l.b16 %v357
    %v1727 = vunpack.c.h.b16 %v357
    %v1728 = vunpack.c.l.b16 %v358
    %v1729 = vunpack.c.h.b16 %v358
    %v1730 = vunpack.c.l.b16 %v359
    %v1731 = vunpack.c.h.b16 %v359
    %v1732 = vunpack.c.l.b16 %v360
    %v1733 = vunpack.c.h.b16 %v360
    %v1734 = vunpack.c.l.b16 %v361
    %v1735 = vunpack.c.h.b16 %v361
    %v1736 = vunpack.c.l.b16 %v362
    %v1737 = vunpack.c.h.b16 %v362
    %v1738 = vunpack.c.l.b16 %v363
    %v1739 = vunpack.c.h.b16 %v363
    %v1740 = vunpack.c.l.b16 %v364
    %v1741 = vunpack.c.h.b16 %v364
    %v1742 = vunpack.c.l.b16 %v365
    %v1743 = vunpack.c.h.b16 %v365
    %v1744 = vunpack.c.l.b16 %v366
    %v1745 = vunpack.c.h.b16 %v366
    %v1746 = vunpack.c.l.b16 %v367
    %v1747 = vunpack.c.h.b16 %v367
    %v1748 = vunpack.c.l.b16 %v368
    %v1749 = vunpack.c.h.b16 %v368
    %v1750 = vunpack.c.l.b16 %v369
    %v1751 = vunpack.c.h.b16 %v369
    %v1752 = vunpack.c.l.b16 %v370
    %v1753 = vunpack.c.h.b16 %v370
    %v1754 = vunpack.c.l.b16 %v371
    %v1755 = vunpack.c.h.b16 %v371
    %v1756 = vunpack.c.l.b16 %v372
    %v1757 = vunpack.c.h.b16 %v372
    %v1758 = vunpack.c.l.b16 %v373
    %v1759 = vunpack.c.h.b16 %v373
    %v1760 = vunpack.c.l.b16 %v374
    %v1761 = vunpack.c.h.b16 %v374
    %v1762 = vunpack.c.l.b16 %v375
    %v1763 = vunpack.c.h.b16 %v375
    %v1764 = vunpack.c.l.b16 %v376
    %v1765 = vunpack.c.h.b16 %v376
    %v1766 = vunpack.c.l.b16 %v377
    %v1767 = vunpack.c.h.b16 %v377
    %v1768 = vunpack.c.l.b16 %v378
    %v1769 = vunpack.c.h.b16 %v378
    %v1770 = vunpack.c.l.b16 %v379
    %v1771 = vunpack.c.h.b16 %v379
    %v1772 = vunpack.c.l.b16 %v380
    %v1773 = vunpack.c.h.b16 %v380
    %v1774 = vunpack.c.l.b16 %v381
    %v1775 = vunpack.c.h.b16 %v381
    %v1776 = vunpack.c.l.b16 %v382
    %v1777 = vunpack.c.h.b16 %v382
    %v1778 = vunpack.c.l.b16 %v383
    %v1779 = vunpack.c.h.b16 %v383
    %v1780 = vunpack.c.l.b16 %v384
    %v1781 = vunpack.c.h.b16 %v384
    %v1782 = vunpack.c.l.b16 %v385
    %v1783 = vunpack.c.h.b16 %v385
    %v1784 = vunpack.c.l.b16 %v386
    %v1785 = vunpack.c.h.b16 %v386
    %v1786 = vunpack.c.l.b16 %v387
    %v1787 = vunpack.c.h.b16 %v387
    %v1788 = vunpack.c.l.b16 %v388
    %v1789 = vunpack.c.h.b16 %v388
    %v1790 = vunpack.c.l.b16 %v389
    %v1791 = vunpack.c.h.b16 %v389
    %v1792 = vunpack.c.l.b16 %v390
    %v1793 = vunpack.c.h.b16 %v390
    %v1794 = vunpack.c.l.b16 %v391
    %v1795 = vunpack.c.h.b16 %v391
    %v1796 = vunpack.c.l.b16 %v392
    %v1797 = vunpack.c.h.b16 %v392
    %v1798 = vunpack.c.l.b16 %v393
    %v1799 = vunpack.c.h.b16 %v393
    %v1800 = vunpack.c.l.b16 %v394
    %v1801 = vunpack.c.h.b16 %v394
    %v1802 = vunpack.c.l.b16 %v395
    %v1803 = vunpack.c.h.b16 %v395
    %v1804 = vunpack.c.l.b16 %v396
    %v1805 = vunpack.c.h.b16 %v396
    %v1806 = vunpack.c.l.b16 %v397
    %v1807 = vunpack.c.h.b16 %v397
    %v1808 = vunpack.c.l.b16 %v398
    %v1809 = vunpack.c.h.b16 %v398
    %v1810 = vunpack.c.l.b16 %v399
    %v1811 = vunpack.c.h.b16 %v399
    %v1812 = vunpack.c.l.b16 %v400
    %v1813 = vunpack.c.h.b16 %v400
    %v1814 = vunpack.c.l.b16 %v401
    %v1815 = vunpack.c.h.b16 %v401
    %v1816 = vunpack.c.l.b16 %v402
    %v1817 = vunpack.c.h.b16 %v402
    %v1818 = vunpack.c.l.b16 %v403
    %v1819 = vunpack.c.h.b16 %v403
    %v1820 = vunpack.c.l.b16 %v404
    %v1821 = vunpack.c.h.b16 %v404
    %v1822 = vunpack.c.l.b16 %v405
    %v1823 = vunpack.c.h.b16 %v405
    %v1824 = vunpack.c.l.b16 %v406
    %v1825 = vunpack.c.h.b16 %v406
    %v1826 = vunpack.c.l.b16 %v407
    %v1827 = vunpack.c.h.b16 %v407
    %v1828 = vunpack.c.l.b16 %v408
    %v1829 = vunpack.c.h.b16 %v408
    %v1830 = vunpack.c.l.b16 %v409
    %v1831 = vunpack.c.h.b16 %v409
    %v1832 = vunpack.c.l.b16 %v410
    %v1833 = vunpack.c.h.b16 %v410
    %v1834 = vunpack.c.l.b16 %v411
    %v1835 = vunpack.c.h.b16 %v411
    %v1836 = vunpack.c.l.b16 %v412
    %v1837 = vunpack.c.h.b16 %v412
    %v1838 = vunpack.c.l.b16 %v413
    %v1839 = vunpack.c.h.b16 %v413
    %v1840 = vunpack.c.l.b16 %v414
    %v1841 = vunpack.c.h.b16 %v414
    %v1842 = vunpack.c.l.b16 %v415
    %v1843 = vunpack.c.h.b16 %v415
    %v1844 = vunpack.c.l.b16 %v416
    %v1845 = vunpack.c.h.b16 %v416
    %v1846 = vunpack.c.l.b16 %v417
    %v1847 = vunpack.c.h.b16 %v417
    %v1848 = vunpack.c.l.b16 %v418
    %v1849 = vunpack.c.h.b16 %v418
    %v1850 = vunpack.c.l.b16 %v419
    %v1851 = vunpack.c.h.b16 %v419
    %v1852 = vunpack.c.l.b16 %v420
    %v1853 = vunpack.c.h.b16 %v420
    %v1854 = vunpack.c.l.b16 %v421
    %v1855 = vunpack.c.h.b16 %v421
    %v1856 = vunpack.c.l.b16 %v422
    %v1857 = vunpack.c.h.b16 %v422
    %v1858 = vunpack.c.l.b16 %v423
    %v1859 = vunpack.c.h.b16 %v423
    %v1860 = vunpack.c.l.b16 %v424
    %v1861 = vunpack.c.h.b16 %v424
    %v1862 = vunpack.c.l.b16 %v425
    %v1863 = vunpack.c.h.b16 %v425
    %v1864 = vunpack.c.l.b16 %v426
    %v1865 = vunpack.c.h.b16 %v426
    %v1866 = vunpack.c.l.b16 %v427
    %v1867 = vunpack.c.h.b16 %v427
    %v1868 = vunpack.c.l.b16 %v428
    %v1869 = vunpack.c.h.b16 %v428
    %v1870 = vunpack.c.l.b16 %v429
    %v1871 = vunpack.c.h.b16 %v429
    %v1872 = vunpack.c.l.b16 %v430
    %v1873 = vunpack.c.h.b16 %v430
    %v1874 = vunpack.c.l.b16 %v431
    %v1875 = vunpack.c.h.b16 %v431
    %v1876 = vunpack.c.l.b16 %v432
    %v1877 = vunpack.c.h.b16 %v432
    %v1878 = vunpack.c.l.b16 %v433
    %v1879 = vunpack.c.h.b16 %v433
    %v1880 = vunpack.c.l.b16 %v434
    %v1881 = vunpack.c.h.b16 %v434
    %v1882 = vunpack.c.l.b16 %v435
    %v1883 = vunpack.c.h.b16 %v435
    %v1884 = vunpack.c.l.b16 %v436
    %v1885 = vunpack.c.h.b16 %v436
    %v1886 = vunpack.c.l.b16 %v437
    %v1887 = vunpack.c.h.b16 %v437
    %v1888 = vunpack.c.l.b16 %v438
    %v1889 = vunpack.c.h.b16 %v438
    %v1890 = vunpack.c.l.b16 %v439
    %v1891 = vunpack.c.h.b16 %v439
    %v1892 = vunpack.c.l.b16 %v440
    %v1893 = vunpack.c.h.b16 %v440
    %v1894 = vunpack.c.l.b16 %v441
    %v1895 = vunpack.c.h.b16 %v441
    %v1896 = vunpack.c.l.b16 %v442
    %v1897 = vunpack.c.h.b16 %v442
    %v1898 = vunpack.c.l.b16 %v443
    %v1899 = vunpack.c.h.b16 %v443
    %v1900 = vunpack.c.l.b16 %v444
    %v1901 = vunpack.c.h.b16 %v444
    %v1902 = vunpack.c.l.b16 %v445
    %v1903 = vunpack.c.h.b16 %v445
    %v1904 = vunpack.c.l.b16 %v446
    %v1905 = vunpack.c.h.b16 %v446
    %v1906 = vunpack.c.l.b16 %v447
    %v1907 = vunpack.c.h.b16 %v447
    %v1908 = vunpack.c.l.b16 %v448
    %v1909 = vunpack.c.h.b16 %v448
    %v1910 = vunpack.c.l.b16 %v449
    %v1911 = vunpack.c.h.b16 %v449
    %v1912 = vunpack.c.l.b16 %v450
    %v1913 = vunpack.c.h.b16 %v450
    %v1914 = vunpack.c.l.b16 %v451
    %v1915 = vunpack.c.h.b16 %v451
    %v1916 = vunpack.c.l.b16 %v452
    %v1917 = vunpack.c.h.b16 %v452
    %v1918 = vunpack.c.l.b16 %v453
    %v1919 = vunpack.c.h.b16 %v453
    %v1920 = vunpack.c.l.b16 %v454
    %v1921 = vunpack.c.h.b16 %v454
    %v1922 = vunpack.c.l.b16 %v455
    %v1923 = vunpack.c.h.b16 %v455
    %v1924 = vunpack.c.l.b16 %v456
    %v1925 = vunpack.c.h.b16 %v456
    %v1926 = vunpack.c.l.b16 %v457
    %v1927 = vunpack.c.h.b16 %v457
    %v1928 = vunpack.c.l.b16 %v458
    %v1929 = vunpack.c.h.b16 %v458
    %v1930 = vunpack.c.l.b16 %v459
    %v1931 = vunpack.c.h.b16 %v459
    %v1932 = vunpack.c.l.b16 %v460
    %v1933 = vunpack.c.h.b16 %v460
    %v1934 = vunpack.c.l.b16 %v461
    %v1935 = vunpack.c.h.b16 %v461
    %v1936 = vunpack.c.l.b16 %v462
    %v1937 = vunpack.c.h.b16 %v462
    %v1938 = vunpack.c.l.b16 %v463
    %v1939 = vunpack.c.h.b16 %v463
    %v1940 = vunpack.c.l.b16 %v464
    %v1941 = vunpack.c.h.b16 %v464
    %v1942 = vunpack.c.l.b16 %v465
    %v1943 = vunpack.c.h.b16 %v465
    %v1944 = vunpack.c.l.b16 %v466
    %v1945 = vunpack.c.h.b16 %v466
    %v1946 = vunpack.c.l.b16 %v467
    %v1947 = vunpack.c.h.b16 %v467
    %v1948 = vunpack.c.l.b16 %v468
    %v1949 = vunpack.c.h.b16 %v468
    %v1950 = vunpack.c.l.b16 %v469
    %v1951 = vunpack.c.h.b16 %v469
    %v1952 = vunpack.c.l.b16 %v470
    %v1953 = vunpack.c.h.b16 %v470
    %v1954 = vunpack.c.l.b16 %v471
    %v1955 = vunpack.c.h.b16 %v471
    %v1956 = vunpack.c.l.b16 %v472
    %v1957 = vunpack.c.h.b16 %v472
    %v1958 = vunpack.c.l.b16 %v473
    %v1959 = vunpack.c.h.b16 %v473
    %v1960 = vunpack.c.l.b16 %v474
    %v1961 = vunpack.c.h.b16 %v474
    %v1962 = vunpack.c.l.b16 %v475
    %v1963 = vunpack.c.h.b16 %v475
    %v1964 = vunpack.c.l.b16 %v476
    %v1965 = vunpack.c.h.b16 %v476
    %v1966 = vunpack.c.l.b16 %v477
    %v1967 = vunpack.c.h.b16 %v477
    %v1968 = vunpack.c.l.b16 %v478
    %v1969 = vunpack.c.h.b16 %v478
    %v1970 = vunpack.c.l.b16 %v479
    %v1971 = vunpack.c.h.b16 %v479
    %v1972 = vunpack.c.l.b16 %v480
    %v1973 = vunpack.c.h.b16 %v480
    %v1974 = vunpack.c.l.b16 %v481
    %v1975 = vunpack.c.h.b16 %v481
    %v1976 = vpack.c.b16 %v1292, %v1288
    %v1977 = vpack.c.b16 %v1293, %v1289
    %v1978 = vpack.c.b16 %v1294, %v1290
    %v1979 = vpack.c.b16 %v1295, %v1291
    %v1980 = vpack.c.b16 %v1300, %v1296
    %v1981 = vpack.c.b16 %v1301, %v1297
    %v1982 = vpack.c.b16 %v1302, %v1298
    %v1983 = vpack.c.b16 %v1303, %v1299
    %v1984 = vpack.c.b16 %v1308, %v1304
    %v1985 = vpack.c.b16 %v1309, %v1305
    %v1986 = vpack.c.b16 %v1310, %v1306
    %v1987 = vpack.c.b16 %v1311, %v1307
    %v1988 = vpack.c.b16 %v1316, %v1312
    %v1989 = vpack.c.b16 %v1317, %v1313
    %v1990 = vpack.c.b16 %v1318, %v1314
    %v1991 = vpack.c.b16 %v1319, %v1315
    %v1992 = vpack.c.b16 %v1324, %v1320
    %v1993 = vpack.c.b16 %v1325, %v1321
    %v1994 = vpack.c.b16 %v1326, %v1322
    %v1995 = vpack.c.b16 %v1327, %v1323
    %v1996 = vpack.c.b16 %v1332, %v1328
    %v1997 = vpack.c.b16 %v1333, %v1329
    %v1998 = vpack.c.b16 %v1334, %v1330
    %v1999 = vpack.c.b16 %v1335, %v1331
    %v2000 = vpack.c.b16 %v1340, %v1336
    %v2001 = vpack.c.b16 %v1341, %v1337
    %v2002 = vpack.c.b16 %v1342, %v1338
    %v2003 = vpack.c.b16 %v1343, %v1339
    %v2004 = vpack.c.b16 %v1348, %v1344
    %v2005 = vpack.c.b16 %v1349, %v1345
    %v2006 = vpack.c.b16 %v1350, %v1346
    %v2007 = vpack.c.b16 %v1351, %v1347
    %v2008 = vpack.c.b16 %v1356, %v1352
    %v2009 = vpack.c.b16 %v1357, %v1353
    %v2010 = vpack.c.b16 %v1358, %v1354
    %v2011 = vpack.c.b16 %v1359, %v1355
    %v2012 = vpack.c.b16 %v1364, %v1360
    %v2013 = vpack.c.b16 %v1365, %v1361
    %v2014 = vpack.c.b16 %v1366, %v1362
    %v2015 = vpack.c.b16 %v1367, %v1363
    %v2016 = vpack.c.b16 %v1372, %v1368
    %v2017 = vpack.c.b16 %v1373, %v1369
    %v2018 = vpack.c.b16 %v1374, %v1370
    %v2019 = vpack.c.b16 %v1375, %v1371
    %v2020 = vpack.c.b16 %v1380, %v1376
    %v2021 = vpack.c.b16 %v1381, %v1377
    %v2022 = vpack.c.b16 %v1382, %v1378
    %v2023 = vpack.c.b16 %v1383, %v1379
    %v2024 = vpack.c.b16 %v1388, %v1384
    %v2025 = vpack.c.b16 %v1389, %v1385
    %v2026 = vpack.c.b16 %v1390, %v1386
    %v2027 = vpack.c.b16 %v1391, %v1387
    %v2028 = vpack.c.b16 %v1396, %v1392
    %v2029 = vpack.c.b16 %v1397, %v1393
    %v2030 = vpack.c.b16 %v1398, %v1394
    %v2031 = vpack.c.b16 %v1399, %v1395
    %v2032 = vpack.c.b16 %v1404, %v1400
    %v2033 = vpack.c.b16 %v1405, %v1401
    %v2034 = vpack.c.b16 %v1406, %v1402
    %v2035 = vpack.c.b16 %v1407, %v1403
    %v2036 = vpack.c.b16 %v1412, %v1408
    %v2037 = vpack.c.b16 %v1413, %v1409
    %v2038 = vpack.c.b16 %v1414, %v1410
    %v2039 = vpack.c.b16 %v1415, %v1411
    %v2040 = vpack.c.b16 %v1420, %v1416
    %v2041 = vpack.c.b16 %v1421, %v1417
    %v2042 = vpack.c.b16 %v1422, %v1418
    %v2043 = vpack.c.b16 %v1423, %v1419
    %v2044 = vpack.c.b16 %v1428, %v1424
    %v2045 = vpack.c.b16 %v1429, %v1425
    %v2046 = vpack.c.b16 %v1430, %v1426
    %v2047 = vpack.c.b16 %v1431, %v1427
    %v2048 = vpack.c.b16 %v1436, %v1432
    %v2049 = vpack.c.b16 %v1437, %v1433
    %v2050 = vpack.c.b16 %v1438, %v1434
    %v2051 = vpack.c.b16 %v1439, %v1435
    %v2052 = vpack.c.b16 %v1444, %v1440
    %v2053 = vpack.c.b16 %v1445, %v1441
    %v2054 = vpack.c.b16 %v1446, %v1442
    %v2055 = vpack.c.b16 %v1447, %v1443
    %v2056 = vpack.c.b16 %v1452, %v1448
    %v2057 = vpack.c.b16 %v1453, %v1449
    %v2058 = vpack.c.b16 %v1454, %v1450
    %v2059 = vpack.c.b16 %v1455, %v1451
    %v2060 = vpack.c.b16 %v1460, %v1456
    %v2061 = vpack.c.b16 %v1461, %v1457
    %v2062 = vpack.c.b16 %v1462, %v1458
    %v2063 = vpack.c.b16 %v1463, %v1459
    %v2064 = vpack.c.b16 %v1468, %v1464
    %v2065 = vpack.c.b16 %v1469, %v1465
    %v2066 = vpack.c.b16 %v1470, %v1466
    %v2067 = vpack.c.b16 %v1471, %v1467
    %v2068 = vpack.c.b16 %v1476, %v1472
    %v2069 = vpack.c.b16 %v1477, %v1473
    %v2070 = vpack.c.b16 %v1478, %v1474
    %v2071 = vpack.c.b16 %v1479, %v1475
    %v2072 = vpack.c.b16 %v1484, %v1480
    %v2073 = vpack.c.b16 %v1485, %v1481
    %v2074 = vpack.c.b16 %v1486, %v1482
    %v2075 = vpack.c.b16 %v1487, %v1483
    %v2076 = vpack.c.b16 %v1492, %v1488
    %v2077 = vpack.c.b16 %v1493, %v1489
    %v2078 = vpack.c.b16 %v1494, %v1490
    %v2079 = vpack.c.b16 %v1495, %v1491
    %v2080 = vpack.c.b16 %v1500, %v1496
    %v2081 = vpack.c.b16 %v1501, %v1497
    %v2082 = vpack.c.b16 %v1502, %v1498
    %v2083 = vpack.c.b16 %v1503, %v1499
    %v2084 = vpack.c.b16 %v1508, %v1504
    %v2085 = vpack.c.b16 %v1509, %v1505
    %v2086 = vpack.c.b16 %v1510, %v1506
    %v2087 = vpack.c.b16 %v1511, %v1507
    %v2088 = vpack.c.b16 %v1516, %v1512
    %v2089 = vpack.c.b16 %v1517, %v1513
    %v2090 = vpack.c.b16 %v1518, %v1514
    %v2091 = vpack.c.b16 %v1519, %v1515
    %v2092 = vpack.c.b16 %v1524, %v1520
    %v2093 = vpack.c.b16 %v1525, %v1521
    %v2094 = vpack.c.b16 %v1526, %v1522
    %v2095 = vpack.c.b16 %v1527, %v1523
    %v2096 = vpack.c.b16 %v1532, %v1528
    %v2097 = vpack.c.b16 %v1533, %v1529
    %v2098 = vpack.c.b16 %v1534, %v1530
    %v2099 = vpack.c.b16 %v1535, %v1531
    %v2100 = vpack.c.b16 %v1540, %v1536
    %v2101 = vpack.c.b16 %v1541, %v1537
    %v2102 = vpack.c.b16 %v1542, %v1538
    %v2103 = vpack.c.b16 %v1543, %v1539
    %v2104 = vpack.c.b16 %v1548, %v1544
    %v2105 = vpack.c.b16 %v1549, %v1545
    %v2106 = vpack.c.b16 %v1550, %v1546
    %v2107 = vpack.c.b16 %v1551, %v1547
    %v2108 = vpack.c.b16 %v1556, %v1552
    %v2109 = vpack.c.b16 %v1557, %v1553
    %v2110 = vpack.c.b16 %v1558, %v1554
    %v2111 = vpack.c.b16 %v1559, %v1555
    %v2112 = vpack.c.b16 %v1564, %v1560
    %v2113 = vpack.c.b16 %v1565, %v1561
    %v2114 = vpack.c.b16 %v1566, %v1562
    %v2115 = vpack.c.b16 %v1567, %v1563
    %v2116 = vpack.c.b16 %v1572, %v1568
    %v2117 = vpack.c.b16 %v1573, %v1569
    %v2118 = vpack.c.b16 %v1574, %v1570
    %v2119 = vpack.c.b16 %v1575, %v1571
    %v2120 = vpack.c.b16 %v1580, %v1576
    %v2121 = vpack.c.b16 %v1581, %v1577
    %v2122 = vpack.c.b16 %v1582, %v1578
    %v2123 = vpack.c.b16 %v1583, %v1579
    %v2124 = vpack.c.b16 %v1588, %v1584
    %v2125 = vpack.c.b16 %v1589, %v1585
    %v2126 = vpack.c.b16 %v1590, %v1586
    %v2127 = vpack.c.b16 %v1591, %v1587
    %v2128 = vpack.c.b16 %v1596, %v1592
    %v2129 = vpack.c.b16 %v1597, %v1593
    %v2130 = vpack.c.b16 %v1598, %v1594
    %v2131 = vpack.c.b16 %v1599, %v1595
    %v2132 = vpack.c.b16 %v1604, %v1600
    %v2133 = vpack.c.b16 %v1605, %v1601
    %v2134 = vpack.c.b16 %v1606, %v1602
    %v2135 = vpack.c.b16 %v1607, %v1603
    %v2136 = vpack.c.b16 %v1612, %v1608
    %v2137 = vpack.c.b16 %v1613, %v1609
    %v2138 = vpack.c.b16 %v1614, %v1610
    %v2139 = vpack.c.b16 %v1615, %v1611
    %v2140 = vpack.c.b16 %v1620, %v1616
    %v2141 = vpack.c.b16 %v1621, %v1617
    %v2142 = vpack.c.b16 %v1622, %v1618
    %v2143 = vpack.c.b16 %v1623, %v1619
    %v2144 = vpack.c.b16 %v1628, %v1624
    %v2145 = vpack.c.b16 %v1629, %v1625
    %v2146 = vpack.c.b16 %v1630, %v1626
    %v2147 = vpack.c.b16 %v1631, %v1627
    %v2148 = vpack.c.b16 %v1636, %v1632
    %v2149 = vpack.c.b16 %v1637, %v1633
    %v2150 = vpack.c.b16 %v1638, %v1634
    %v2151 = vpack.c.b16 %v1639, %v1635
    %v2152 = vpack.c.b16 %v1644, %v1640
    %v2153 = vpack.c.b16 %v1645, %v1641
    %v2154 = vpack.c.b16 %v1646, %v1642
    %v2155 = vpack.c.b16 %v1647, %v1643
    %v2156 = vpack.c.b16 %v1652, %v1648
    %v2157 = vpack.c.b16 %v1653, %v1649
    %v2158 = vpack.c.b16 %v1654, %v1650
    %v2159 = vpack.c.b16 %v1655, %v1651
    %v2160 = vpack.c.b16 %v1660, %v1656
    %v2161 = vpack.c.b16 %v1661, %v1657
    %v2162 = vpack.c.b16 %v1662, %v1658
    %v2163 = vpack.c.b16 %v1663, %v1659
    %v2164 = vpack.c.b16 %v1668, %v1664
    %v2165 = vpack.c.b16 %v1669, %v1665
    %v2166 = vpack.c.b16 %v1670, %v1666
    %v2167 = vpack.c.b16 %v1671, %v1667
    %v2168 = vpack.c.b16 %v1676, %v1672
    %v2169 = vpack.c.b16 %v1677, %v1673
    %v2170 = vpack.c.b16 %v1678, %v1674
    %v2171 = vpack.c.b16 %v1679, %v1675
    %v2172 = vpack.c.b16 %v1684, %v1680
    %v2173 = vpack.c.b16 %v1685, %v1681
    %v2174 = vpack.c.b16 %v1686, %v1682
    %v2175 = vpack.c.b16 %v1687, %v1683
    %v2176 = vpack.c.b16 %v1692, %v1688
    %v2177 = vpack.c.b16 %v1693, %v1689
    %v2178 = vpack.c.b16 %v1694, %v1690
    %v2179 = vpack.c.b16 %v1695, %v1691
    %v2180 = vpack.c.b16 %v1700, %v1696
    %v2181 = vpack.c.b16 %v1701, %v1697
    %v2182 = vpack.c.b16 %v1702, %v1698
    %v2183 = vpack.c.b16 %v1703, %v1699
    %v2184 = vpack.c.b16 %v1708, %v1704
    %v2185 = vpack.c.b16 %v1709, %v1705
    %v2186 = vpack.c.b16 %v1710, %v1706
    %v2187 = vpack.c.b16 %v1711, %v1707
    %v2188 = vpack.c.b16 %v1716, %v1712
    %v2189 = vpack.c.b16 %v1717, %v1713
    %v2190 = vpack.c.b16 %v1718, %v1714
    %v2191 = vpack.c.b16 %v1719, %v1715
    %v2192 = vpack.c.b16 %v1724, %v1720
    %v2193 = vpack.c.b16 %v1725, %v1721
    %v2194 = vpack.c.b16 %v1726, %v1722
    %v2195 = vpack.c.b16 %v1727, %v1723
    %v2196 = vpack.c.b16 %v1732, %v1728
    %v2197 = vpack.c.b16 %v1733, %v1729
    %v2198 = vpack.c.b16 %v1734, %v1730
    %v2199 = vpack.c.b16 %v1735, %v1731
    %v2200 = vpack.c.b16 %v1740, %v1736
    %v2201 = vpack.c.b16 %v1741, %v1737
    %v2202 = vpack.c.b16 %v1742, %v1738
    %v2203 = vpack.c.b16 %v1743, %v1739
    %v2204 = vpack.c.b16 %v1748, %v1744
    %v2205 = vpack.c.b16 %v1749, %v1745
    %v2206 = vpack.c.b16 %v1750, %v1746
    %v2207 = vpack.c.b16 %v1751, %v1747
    %v2208 = vpack.c.b16 %v1756, %v1752
    %v2209 = vpack.c.b16 %v1757, %v1753
    %v2210 = vpack.c.b16 %v1758, %v1754
    %v2211 = vpack.c.b16 %v1759, %v1755
    %v2212 = vpack.c.b16 %v1764, %v1760
    %v2213 = vpack.c.b16 %v1765, %v1761
    %v2214 = vpack.c.b16 %v1766, %v1762
    %v2215 = vpack.c.b16 %v1767, %v1763
    %v2216 = vpack.c.b16 %v1772, %v1768
    %v2217 = vpack.c.b16 %v1773, %v1769
    %v2218 = vpack.c.b16 %v1774, %v1770
    %v2219 = vpack.c.b16 %v1775, %v1771
    %v2220 = vpack.c.b16 %v1780, %v1776
    %v2221 = vpack.c.b16 %v1781, %v1777
    %v2222 = vpack.c.b16 %v1782, %v1778
    %v2223 = vpack.c.b16 %v1783, %v1779
    %v2224 = vpack.c.b16 %v1788, %v1784
    %v2225 = vpack.c.b16 %v1789, %v1785
    %v2226 = vpack.c.b16 %v1790, %v1786
    %v2227 = vpack.c.b16 %v1791, %v1787
    %v2228 = vpack.c.b16 %v1796, %v1792
    %v2229 = vpack.c.b16 %v1797, %v1793
    %v2230 = vpack.c.b16 %v1798, %v1794
    %v2231 = vpack.c.b16 %v1799, %v1795
    %v2232 = vpack.c.b16 %v1804, %v1800
    %v2233 = vpack.c.b16 %v1805, %v1801
    %v2234 = vpack.c.b16 %v1806, %v1802
    %v2235 = vpack.c.b16 %v1807, %v1803
    %v2236 = vpack.c.b16 %v1812, %v1808
    %v2237 = vpack.c.b16 %v1813, %v1809
    %v2238 = vpack.c.b16 %v1814, %v1810
    %v2239 = vpack.c.b16 %v1815, %v1811
    %v2240 = vpack.c.b16 %v1820, %v1816
    %v2241 = vpack.c.b16 %v1821, %v1817
    %v2242 = vpack.c.b16 %v1822, %v1818
    %v2243 = vpack.c.b16 %v1823, %v1819
    %v2244 = vpack.c.b16 %v1828, %v1824
    %v2245 = vpack.c.b16 %v1829, %v1825
    %v2246 = vpack.c.b16 %v1830, %v1826
    %v2247 = vpack.c.b16 %v1831, %v1827
    %v2248 = vpack.c.b16 %v1836, %v1832
    %v2249 = vpack.c.b16 %v1837, %v1833
    %v2250 = vpack.c.b16 %v1838, %v1834
    %v2251 = vpack.c.b16 %v1839, %v1835
    %v2252 = vpack.c.b16 %v1844, %v1840
    %v2253 = vpack.c.b16 %v1845, %v1841
    %v2254 = vpack.c.b16 %v1846, %v1842
    %v2255 = vpack.c.b16 %v1847, %v1843
    %v2256 = vpack.c.b16 %v1852, %v1848
    %v2257 = vpack.c.b16 %v1853, %v1849
    %v2258 = vpack.c.b16 %v1854, %v1850
    %v2259 = vpack.c.b16 %v1855, %v1851
    %v2260 = vpack.c.b16 %v1860, %v1856
    %v2261 = vpack.c.b16 %v1861, %v1857
    %v2262 = vpack.c.b16 %v1862, %v1858
    %v2263 = vpack.c.b16 %v1863, %v1859
    %v2264 = vpack.c.b16 %v1868, %v1864
    %v2265 = vpack.c.b16 %v1869, %v1865
    %v2266 = vpack.c.b16 %v1870, %v1866
    %v2267 = vpack.c.b16 %v1871, %v1867
    %v2268 = vpack.c.b16 %v1876, %v1872
    %v2269 = vpack.c.b16 %v1877, %v1873
    %v2270 = vpack.c.b16 %v1878, %v1874
    %v2271 = vpack.c.b16 %v1879, %v1875
    %v2272 = vpack.c.b16 %v1884, %v1880
    %v2273 = vpack.c.b16 %v1885, %v1881
    %v2274 = vpack.c.b16 %v1886, %v1882
    %v2275 = vpack.c.b16 %v1887, %v1883
    %v2276 = vpack.c.b16 %v1892, %v1888
    %v2277 = vpack.c.b16 %v1893, %v1889
    %v2278 = vpack.c.b16 %v1894, %v1890
    %v2279 = vpack.c.b16 %v1895, %v1891
    %v2280 = vpack.c.b16 %v1900, %v1896
    %v2281 = vpack.c.b16 %v1901, %v1897
    %v2282 = vpack.c.b16 %v1902, %v1898
    %v2283 = vpack.c.b16 %v1903, %v1899
    %v2284 = vpack.c.b16 %v1908, %v1904
    %v2285 = vpack.c.b16 %v1909, %v1905
    %v2286 = vpack.c.b16 %v1910, %v1906
    %v2287 = vpack.c.b16 %v1911, %v1907
    %v2288 = vpack.c.b16 %v1916, %v1912
    %v2289 = vpack.c.b16 %v1917, %v1913
    %v2290 = vpack.c.b16 %v1918, %v1914
    %v2291 = vpack.c.b16 %v1919, %v1915
    %v2292 = vpack.c.b16 %v1924, %v1920
    %v2293 = vpack.c.b16 %v1925, %v1921
    %v2294 = vpack.c.b16 %v1926, %v1922
    %v2295 = vpack.c.b16 %v1927, %v1923
    %v2296 = vpack.c.b16 %v1932, %v1928
    %v2297 = vpack.c.b16 %v1933, %v1929
    %v2298 = vpack.c.b16 %v1934, %v1930
    %v2299 = vpack.c.b16 %v1935, %v1931
    %v2300 = vpack.c.b16 %v1940, %v1936
    %v2301 = vpack.c.b16 %v1941, %v1937
    %v2302 = vpack.c.b16 %v1942, %v1938
    %v2303 = vpack.c.b16 %v1943, %v1939
    %v2304 = vpack.c.b16 %v1948, %v1944
    %v2305 = vpack.c.b16 %v1949, %v1945
    %v2306 = vpack.c.b16 %v1950, %v1946
    %v2307 = vpack.c.b16 %v1951, %v1947
    %v2308 = vpack.c.b16 %v1956, %v1952
    %v2309 = vpack.c.b16 %v1957, %v1953
    %v2310 = vpack.c.b16 %v1958, %v1954
    %v2311 = vpack.c.b16 %v1959, %v1955
    %v2312 = vpack.c.b16 %v1964, %v1960
    %v2313 = vpack.c.b16 %v1965, %v1961
    %v2314 = vpack.c.b16 %v1966, %v1962
    %v2315 = vpack.c.b16 %v1967, %v1963
    %v2316 = vpack.c.b16 %v1972, %v1968
    %v2317 = vpack.c.b16 %v1973, %v1969
    %v2318 = vpack.c.b16 %v1974, %v1970
    %v2319 = vpack.c.b16 %v1975, %v1971
    %vm2664 = vcmask 785408
    %v2666 = vsel %vm2664, %v786, 0
    %v2669 = vsel %vm2664, %v797, 0
    %v2672 = vsel %vm2664, %v808, 0
    %v2675 = vsel %vm2664, %v819, 0
    %v2678 = vsel %vm2664, %v830, 0
    %v2681 = vsel %vm2664, %v841, 0
    %v2684 = vsel %vm2664, %v852, 0
    %v2687 = vsel %vm2664, %v863, 0
    %2689 = vmatprep.subr.bf16.mxu0 %v1977
    %2690 = vmatpush1.bf16.msra.mxu0 %v1976
    %2691 = vmatprep.subr.bf16.mxu0 %v1981
    %2692 = vmatpush1.bf16.msra.mxu0 %v1980
    %2693 = vmatprep.subr.bf16.mxu0 %v1985
    %2694 = vmatpush1.bf16.msra.mxu0 %v1984
    %2695 = vmatprep.subr.bf16.mxu0 %v1989
    %2696 = vmatpush1.bf16.msra.mxu0 %v1988
    %2697 = vmatprep.subr.bf16.mxu0 %v1993
    %2698 = vmatpush1.bf16.msra.mxu0 %v1992
    %2699 = vmatprep.subr.bf16.mxu0 %v1997
    %2700 = vmatpush1.bf16.msra.mxu0 %v1996
    %2701 = vmatprep.subr.bf16.mxu0 %v2001
    %2702 = vmatpush1.bf16.msra.mxu0 %v2000
    %2703 = vmatprep.subr.bf16.mxu0 %v2005
    %2704 = vmatpush1.bf16.msra.mxu0 %v2004
    %2705 = vmatprep.subr.bf16.mxu0 %v2009
    %2706 = vmatpush1.bf16.msra.mxu0 %v2008
    %2707 = vmatprep.subr.bf16.mxu0 %v2013
    %2708 = vmatpush1.bf16.msra.mxu0 %v2012
    %2709 = vmatprep.subr.bf16.mxu0 %v2017
    %2710 = vmatpush1.bf16.msra.mxu0 %v2016
    %2711 = vmatprep.subr.bf16.mxu0 %v2021
    %2712 = vmatpush1.bf16.msra.mxu0 %v2020
    %2713 = vmatprep.subr.bf16.mxu0 %v2025
    %2714 = vmatpush1.bf16.msra.mxu0 %v2024
    %2715 = vmatprep.subr.bf16.mxu0 %v2029
    %2716 = vmatpush1.bf16.msra.mxu0 %v2028
    %2717 = vmatprep.subr.bf16.mxu0 %v2033
    %2718 = vmatpush1.bf16.msra.mxu0 %v2032
    %2719 = vmatprep.subr.bf16.mxu0 %v2037
    %2720 = vmatpush1.bf16.msra.mxu0 %v2036
    %2721 = vmatprep.mubr.bf16.mxu0 %v777
    %2722 = vmatmul.mubr.bf16.gmra.mrb[0].mxu0 %v776
    %v2723 = vpop.f32.mrb[0].mxu0
    %v2724 = vadd.f32 %v487, %v2723
    %v2725 = vpop.f32.mrb[0].mxu0
    %v2726 = vadd.f32 %v491, %v2725
    %v2727 = vpop.f32.mrb[0].mxu0
    %v2728 = vadd.f32 %v487, %v2727
    %v2729 = vpop.f32.mrb[0].mxu0
    %v2730 = vadd.f32 %v491, %v2729
    %2731 = vmatprep.mubr.bf16.mxu0 %v788
    %2732 = vmatmul.mubr.bf16.gmra.mrb[0].mxu0 %v787
    %v2733 = vpop.f32.mrb[0].mxu0
    %v2734 = vadd.f32 %v487, %v2733
    %v2735 = vpop.f32.mrb[0].mxu0
    %v2736 = vadd.f32 %v491, %v2735
    %v2737 = vpop.f32.mrb[0].mxu0
    %v2738 = vadd.f32 %v487, %v2737
    %v2739 = vpop.f32.mrb[0].mxu0
    %v2740 = vadd.f32 %v491, %v2739
    %2741 = vmatprep.mubr.bf16.mxu0 %v799
    %2742 = vmatmul.mubr.bf16.gmra.mrb[0].mxu0 %v798
    %v2743 = vpop.f32.mrb[0].mxu0
    %v2744 = vadd.f32 %v487, %v2743
    %v2745 = vpop.f32.mrb[0].mxu0
    %v2746 = vadd.f32 %v491, %v2745
    %v2747 = vpop.f32.mrb[0].mxu0
    %v2748 = vadd.f32 %v487, %v2747
    %v2749 = vpop.f32.mrb[0].mxu0
    %v2750 = vadd.f32 %v491, %v2749
    %2751 = vmatprep.mubr.bf16.mxu0 %v810
    %2752 = vmatmul.mubr.bf16.gmra.mrb[0].mxu0 %v809
    %v2753 = vpop.f32.mrb[0].mxu0
    %v2754 = vadd.f32 %v487, %v2753
    %v2755 = vpop.f32.mrb[0].mxu0
    %v2756 = vadd.f32 %v491, %v2755
    %v2757 = vpop.f32.mrb[0].mxu0
    %v2758 = vadd.f32 %v487, %v2757
    %v2759 = vpop.f32.mrb[0].mxu0
    %v2760 = vadd.f32 %v491, %v2759
    %2761 = vmatprep.mubr.bf16.mxu0 %v821
    %2762 = vmatmul.mubr.bf16.gmra.mrb[0].mxu0 %v820
    %v2763 = vpop.f32.mrb[0].mxu0
    %v2764 = vadd.f32 %v487, %v2763
    %v2765 = vpop.f32.mrb[0].mxu0
    %v2766 = vadd.f32 %v491, %v2765
    %v2767 = vpop.f32.mrb[0].mxu0
    %v2768 = vadd.f32 %v487, %v2767
    %v2769 = vpop.f32.mrb[0].mxu0
    %v2770 = vadd.f32 %v491, %v2769
    %2771 = vmatprep.mubr.bf16.mxu0 %v832
    %2772 = vmatmul.mubr.bf16.gmra.mrb[0].mxu0 %v831
    %v2773 = vpop.f32.mrb[0].mxu0
    %v2774 = vadd.f32 %v487, %v2773
    %v2775 = vpop.f32.mrb[0].mxu0
    %v2776 = vadd.f32 %v491, %v2775
    %v2777 = vpop.f32.mrb[0].mxu0
    %v2778 = vadd.f32 %v487, %v2777
    %v2779 = vpop.f32.mrb[0].mxu0
    %v2780 = vadd.f32 %v491, %v2779
    %2781 = vmatprep.mubr.bf16.mxu0 %v843
    %2782 = vmatmul.mubr.bf16.gmra.mrb[0].mxu0 %v842
    %v2783 = vpop.f32.mrb[0].mxu0
    %v2784 = vadd.f32 %v487, %v2783
    %v2785 = vpop.f32.mrb[0].mxu0
    %v2786 = vadd.f32 %v491, %v2785
    %v2787 = vpop.f32.mrb[0].mxu0
    %v2788 = vadd.f32 %v487, %v2787
    %v2789 = vpop.f32.mrb[0].mxu0
    %v2790 = vadd.f32 %v491, %v2789
    %2791 = vmatprep.mubr.bf16.mxu0 %v854
    %2792 = vmatmul.mubr.bf16.gmra.mrb[0].mxu0 %v853
    %v2793 = vpop.f32.mrb[0].mxu0
    %v2794 = vadd.f32 %v487, %v2793
    %v2795 = vpop.f32.mrb[0].mxu0
    %v2796 = vadd.f32 %v491, %v2795
    %v2797 = vpop.f32.mrb[0].mxu0
    %v2798 = vadd.f32 %v487, %v2797
    %v2799 = vpop.f32.mrb[0].mxu0
    %v2800 = vadd.f32 %v491, %v2799
    %2801 = vdwg.mxu0
    %2802 = vmatprep.subr.bf16.mxu0 %v2041
    %2803 = vmatpush1.bf16.msra.mxu0 %v2040
    %2804 = vmatprep.subr.bf16.mxu0 %v2045
    %2805 = vmatpush1.bf16.msra.mxu0 %v2044
    %2806 = vmatprep.subr.bf16.mxu0 %v2049
    %2807 = vmatpush1.bf16.msra.mxu0 %v2048
    %2808 = vmatprep.subr.bf16.mxu0 %v2053
    %2809 = vmatpush1.bf16.msra.mxu0 %v2052
    %2810 = vmatprep.subr.bf16.mxu0 %v2057
    %2811 = vmatpush1.bf16.msra.mxu0 %v2056
    %2812 = vmatprep.subr.bf16.mxu0 %v2061
    %2813 = vmatpush1.bf16.msra.mxu0 %v2060
    %2814 = vmatprep.subr.bf16.mxu0 %v2065
    %2815 = vmatpush1.bf16.msra.mxu0 %v2064
    %2816 = vmatprep.subr.bf16.mxu0 %v2069
    %2817 = vmatpush1.bf16.msra.mxu0 %v2068
    %2818 = vmatprep.subr.bf16.mxu0 %v2073
    %2819 = vmatpush1.bf16.msra.mxu0 %v2072
    %2820 = vmatprep.subr.bf16.mxu0 %v2077
    %2821 = vmatpush1.bf16.msra.mxu0 %v2076
    %2822 = vmatprep.subr.bf16.mxu0 %v2081
    %2823 = vmatpush1.bf16.msra.mxu0 %v2080
    %2824 = vmatprep.subr.bf16.mxu0 %v2085
    %2825 = vmatpush1.bf16.msra.mxu0 %v2084
    %2826 = vmatprep.subr.bf16.mxu0 %v2089
    %2827 = vmatpush1.bf16.msra.mxu0 %v2088
    %2828 = vmatprep.subr.bf16.mxu0 %v2093
    %2829 = vmatpush1.bf16.msra.mxu0 %v2092
    %2830 = vmatprep.subr.bf16.mxu0 %v2097
    %2831 = vmatpush1.bf16.msra.mxu0 %v2096
    %2832 = vmatprep.subr.bf16.mxu0 %v2101
    %2833 = vmatpush1.bf16.msra.mxu0 %v2100
    %2834 = vmatprep.mubr.bf16.mxu0 %v779
    %2835 = vmatmul.mubr.bf16.gmra.mrb[0].mxu0 %v778
    %v2836 = vpop.f32.mrb[0].mxu0
    %v2837 = vadd.f32 %v2724, %v2836
    %v2838 = vpop.f32.mrb[0].mxu0
    %v2839 = vadd.f32 %v2726, %v2838
    %v2840 = vpop.f32.mrb[0].mxu0
    %v2841 = vadd.f32 %v2728, %v2840
    %v2842 = vpop.f32.mrb[0].mxu0
    %v2843 = vadd.f32 %v2730, %v2842
    %2844 = vmatprep.mubr.bf16.mxu0 %v790
    %2845 = vmatmul.mubr.bf16.gmra.mrb[0].mxu0 %v789
    %v2846 = vpop.f32.mrb[0].mxu0
    %v2847 = vadd.f32 %v2734, %v2846
    %v2848 = vpop.f32.mrb[0].mxu0
    %v2849 = vadd.f32 %v2736, %v2848
    %v2850 = vpop.f32.mrb[0].mxu0
    %v2851 = vadd.f32 %v2738, %v2850
    %v2852 = vpop.f32.mrb[0].mxu0
    %v2853 = vadd.f32 %v2740, %v2852
    %2854 = vmatprep.mubr.bf16.mxu0 %v801
    %2855 = vmatmul.mubr.bf16.gmra.mrb[0].mxu0 %v800
    %v2856 = vpop.f32.mrb[0].mxu0
    %v2857 = vadd.f32 %v2744, %v2856
    %v2858 = vpop.f32.mrb[0].mxu0
    %v2859 = vadd.f32 %v2746, %v2858
    %v2860 = vpop.f32.mrb[0].mxu0
    %v2861 = vadd.f32 %v2748, %v2860
    %v2862 = vpop.f32.mrb[0].mxu0
    %v2863 = vadd.f32 %v2750, %v2862
    %2864 = vmatprep.mubr.bf16.mxu0 %v812
    %2865 = vmatmul.mubr.bf16.gmra.mrb[0].mxu0 %v811
    %v2866 = vpop.f32.mrb[0].mxu0
    %v2867 = vadd.f32 %v2754, %v2866
    %v2868 = vpop.f32.mrb[0].mxu0
    %v2869 = vadd.f32 %v2756, %v2868
    %v2870 = vpop.f32.mrb[0].mxu0
    %v2871 = vadd.f32 %v2758, %v2870
    %v2872 = vpop.f32.mrb[0].mxu0
    %v2873 = vadd.f32 %v2760, %v2872
    %2874 = vmatprep.mubr.bf16.mxu0 %v823
    %2875 = vmatmul.mubr.bf16.gmra.mrb[0].mxu0 %v822
    %v2876 = vpop.f32.mrb[0].mxu0
    %v2877 = vadd.f32 %v2764, %v2876
    %v2878 = vpop.f32.mrb[0].mxu0
    %v2879 = vadd.f32 %v2766, %v2878
    %v2880 = vpop.f32.mrb[0].mxu0
    %v2881 = vadd.f32 %v2768, %v2880
    %v2882 = vpop.f32.mrb[0].mxu0
    %v2883 = vadd.f32 %v2770, %v2882
    %2884 = vmatprep.mubr.bf16.mxu0 %v834
    %2885 = vmatmul.mubr.bf16.gmra.mrb[0].mxu0 %v833
    %v2886 = vpop.f32.mrb[0].mxu0
    %v2887 = vadd.f32 %v2774, %v2886
    %v2888 = vpop.f32.mrb[0].mxu0
    %v2889 = vadd.f32 %v2776, %v2888
    %v2890 = vpop.f32.mrb[0].mxu0
    %v2891 = vadd.f32 %v2778, %v2890
    %v2892 = vpop.f32.mrb[0].mxu0
    %v2893 = vadd.f32 %v2780, %v2892
    %2894 = vmatprep.mubr.bf16.mxu0 %v845
    %2895 = vmatmul.mubr.bf16.gmra.mrb[0].mxu0 %v844
    %v2896 = vpop.f32.mrb[0].mxu0
    %v2897 = vadd.f32 %v2784, %v2896
    %v2898 = vpop.f32.mrb[0].mxu0
    %v2899 = vadd.f32 %v2786, %v2898
    %v2900 = vpop.f32.mrb[0].mxu0
    %v2901 = vadd.f32 %v2788, %v2900
    %v2902 = vpop.f32.mrb[0].mxu0
    %v2903 = vadd.f32 %v2790, %v2902
    %2904 = vmatprep.mubr.bf16.mxu0 %v856
    %2905 = vmatmul.mubr.bf16.gmra.mrb[0].mxu0 %v855
    %v2906 = vpop.f32.mrb[0].mxu0
    %v2907 = vadd.f32 %v2794, %v2906
    %v2908 = vpop.f32.mrb[0].mxu0
    %v2909 = vadd.f32 %v2796, %v2908
    %v2910 = vpop.f32.mrb[0].mxu0
    %v2911 = vadd.f32 %v2798, %v2910
    %v2912 = vpop.f32.mrb[0].mxu0
    %v2913 = vadd.f32 %v2800, %v2912
    %2914 = vdwg.mxu0
    %2915 = vmatprep.subr.bf16.mxu0 %v2105
    %2916 = vmatpush1.bf16.msra.mxu0 %v2104
    %2917 = vmatprep.subr.bf16.mxu0 %v2109
    %2918 = vmatpush1.bf16.msra.mxu0 %v2108
    %2919 = vmatprep.subr.bf16.mxu0 %v2113
    %2920 = vmatpush1.bf16.msra.mxu0 %v2112
    %2921 = vmatprep.subr.bf16.mxu0 %v2117
    %2922 = vmatpush1.bf16.msra.mxu0 %v2116
    %2923 = vmatprep.subr.bf16.mxu0 %v2121
    %2924 = vmatpush1.bf16.msra.mxu0 %v2120
    %2925 = vmatprep.subr.bf16.mxu0 %v2125
    %2926 = vmatpush1.bf16.msra.mxu0 %v2124
    %2927 = vmatprep.subr.bf16.mxu0 %v2129
    %2928 = vmatpush1.bf16.msra.mxu0 %v2128
    %2929 = vmatprep.subr.bf16.mxu0 %v2133
    %2930 = vmatpush1.bf16.msra.mxu0 %v2132
    %2931 = vmatprep.subr.bf16.mxu0 %v2137
    %2932 = vmatpush1.bf16.msra.mxu0 %v2136
    %2933 = vmatprep.subr.bf16.mxu0 %v2141
    %2934 = vmatpush1.bf16.msra.mxu0 %v2140
    %2935 = vmatprep.subr.bf16.mxu0 %v2145
    %2936 = vmatpush1.bf16.msra.mxu0 %v2144
    %2937 = vmatprep.subr.bf16.mxu0 %v2149
    %2938 = vmatpush1.bf16.msra.mxu0 %v2148
    %2939 = vmatprep.subr.bf16.mxu0 %v2153
    %2940 = vmatpush1.bf16.msra.mxu0 %v2152
    %2941 = vmatprep.subr.bf16.mxu0 %v2157
    %2942 = vmatpush1.bf16.msra.mxu0 %v2156
    %2943 = vmatprep.subr.bf16.mxu0 %v2161
    %2944 = vmatpush1.bf16.msra.mxu0 %v2160
    %2945 = vmatprep.subr.bf16.mxu0 %v2165
    %2946 = vmatpush1.bf16.msra.mxu0 %v2164
    %2947 = vmatprep.mubr.bf16.mxu0 %v781
    %2948 = vmatmul.mubr.bf16.gmra.mrb[0].mxu0 %v780
    %v2949 = vpop.f32.mrb[0].mxu0
    %v2950 = vadd.f32 %v2837, %v2949
    %v2951 = vpop.f32.mrb[0].mxu0
    %v2952 = vadd.f32 %v2839, %v2951
    %v2953 = vpop.f32.mrb[0].mxu0
    %v2954 = vadd.f32 %v2841, %v2953
    %v2955 = vpop.f32.mrb[0].mxu0
    %v2956 = vadd.f32 %v2843, %v2955
    %2957 = vmatprep.mubr.bf16.mxu0 %v792
    %2958 = vmatmul.mubr.bf16.gmra.mrb[0].mxu0 %v791
    %v2959 = vpop.f32.mrb[0].mxu0
    %v2960 = vadd.f32 %v2847, %v2959
    %v2961 = vpop.f32.mrb[0].mxu0
    %v2962 = vadd.f32 %v2849, %v2961
    %v2963 = vpop.f32.mrb[0].mxu0
    %v2964 = vadd.f32 %v2851, %v2963
    %v2965 = vpop.f32.mrb[0].mxu0
    %v2966 = vadd.f32 %v2853, %v2965
    %2967 = vmatprep.mubr.bf16.mxu0 %v803
    %2968 = vmatmul.mubr.bf16.gmra.mrb[0].mxu0 %v802
    %v2969 = vpop.f32.mrb[0].mxu0
    %v2970 = vadd.f32 %v2857, %v2969
    %v2971 = vpop.f32.mrb[0].mxu0
    %v2972 = vadd.f32 %v2859, %v2971
    %v2973 = vpop.f32.mrb[0].mxu0
    %v2974 = vadd.f32 %v2861, %v2973
    %v2975 = vpop.f32.mrb[0].mxu0
    %v2976 = vadd.f32 %v2863, %v2975
    %2977 = vmatprep.mubr.bf16.mxu0 %v814
    %2978 = vmatmul.mubr.bf16.gmra.mrb[0].mxu0 %v813
    %v2979 = vpop.f32.mrb[0].mxu0
    %v2980 = vadd.f32 %v2867, %v2979
    %v2981 = vpop.f32.mrb[0].mxu0
    %v2982 = vadd.f32 %v2869, %v2981
    %v2983 = vpop.f32.mrb[0].mxu0
    %v2984 = vadd.f32 %v2871, %v2983
    %v2985 = vpop.f32.mrb[0].mxu0
    %v2986 = vadd.f32 %v2873, %v2985
    %2987 = vmatprep.mubr.bf16.mxu0 %v825
    %2988 = vmatmul.mubr.bf16.gmra.mrb[0].mxu0 %v824
    %v2989 = vpop.f32.mrb[0].mxu0
    %v2990 = vadd.f32 %v2877, %v2989
    %v2991 = vpop.f32.mrb[0].mxu0
    %v2992 = vadd.f32 %v2879, %v2991
    %v2993 = vpop.f32.mrb[0].mxu0
    %v2994 = vadd.f32 %v2881, %v2993
    %v2995 = vpop.f32.mrb[0].mxu0
    %v2996 = vadd.f32 %v2883, %v2995
    %2997 = vmatprep.mubr.bf16.mxu0 %v836
    %2998 = vmatmul.mubr.bf16.gmra.mrb[0].mxu0 %v835
    %v2999 = vpop.f32.mrb[0].mxu0
    %v3000 = vadd.f32 %v2887, %v2999
    %v3001 = vpop.f32.mrb[0].mxu0
    %v3002 = vadd.f32 %v2889, %v3001
    %v3003 = vpop.f32.mrb[0].mxu0
    %v3004 = vadd.f32 %v2891, %v3003
    %v3005 = vpop.f32.mrb[0].mxu0
    %v3006 = vadd.f32 %v2893, %v3005
    %3007 = vmatprep.mubr.bf16.mxu0 %v847
    %3008 = vmatmul.mubr.bf16.gmra.mrb[0].mxu0 %v846
    %v3009 = vpop.f32.mrb[0].mxu0
    %v3010 = vadd.f32 %v2897, %v3009
    %v3011 = vpop.f32.mrb[0].mxu0
    %v3012 = vadd.f32 %v2899, %v3011
    %v3013 = vpop.f32.mrb[0].mxu0
    %v3014 = vadd.f32 %v2901, %v3013
    %v3015 = vpop.f32.mrb[0].mxu0
    %v3016 = vadd.f32 %v2903, %v3015
    %3017 = vmatprep.mubr.bf16.mxu0 %v858
    %3018 = vmatmul.mubr.bf16.gmra.mrb[0].mxu0 %v857
    %v3019 = vpop.f32.mrb[0].mxu0
    %v3020 = vadd.f32 %v2907, %v3019
    %v3021 = vpop.f32.mrb[0].mxu0
    %v3022 = vadd.f32 %v2909, %v3021
    %v3023 = vpop.f32.mrb[0].mxu0
    %v3024 = vadd.f32 %v2911, %v3023
    %v3025 = vpop.f32.mrb[0].mxu0
    %v3026 = vadd.f32 %v2913, %v3025
    %3027 = vdwg.mxu0
    %3028 = vmatprep.subr.bf16.mxu0 %v2169
    %3029 = vmatpush1.bf16.msra.mxu0 %v2168
    %3030 = vmatprep.subr.bf16.mxu0 %v2173
    %3031 = vmatpush1.bf16.msra.mxu0 %v2172
    %3032 = vmatprep.subr.bf16.mxu0 %v2177
    %3033 = vmatpush1.bf16.msra.mxu0 %v2176
    %3034 = vmatprep.subr.bf16.mxu0 %v2181
    %3035 = vmatpush1.bf16.msra.mxu0 %v2180
    %3036 = vmatprep.subr.bf16.mxu0 %v2185
    %3037 = vmatpush1.bf16.msra.mxu0 %v2184
    %3038 = vmatprep.subr.bf16.mxu0 %v2189
    %3039 = vmatpush1.bf16.msra.mxu0 %v2188
    %3040 = vmatprep.subr.bf16.mxu0 %v2193
    %3041 = vmatpush1.bf16.msra.mxu0 %v2192
    %3042 = vmatprep.subr.bf16.mxu0 %v2197
    %3043 = vmatpush1.bf16.msra.mxu0 %v2196
    %3044 = vmatprep.subr.bf16.mxu0 %v2201
    %3045 = vmatpush1.bf16.msra.mxu0 %v2200
    %3046 = vmatprep.subr.bf16.mxu0 %v2205
    %3047 = vmatpush1.bf16.msra.mxu0 %v2204
    %3048 = vmatprep.subr.bf16.mxu0 %v2209
    %3049 = vmatpush1.bf16.msra.mxu0 %v2208
    %3050 = vmatprep.subr.bf16.mxu0 %v2213
    %3051 = vmatpush1.bf16.msra.mxu0 %v2212
    %3052 = vmatprep.subr.bf16.mxu0 %v2217
    %3053 = vmatpush1.bf16.msra.mxu0 %v2216
    %3054 = vmatprep.subr.bf16.mxu0 %v2221
    %3055 = vmatpush1.bf16.msra.mxu0 %v2220
    %3056 = vmatprep.subr.bf16.mxu0 %v2225
    %3057 = vmatpush1.bf16.msra.mxu0 %v2224
    %3058 = vmatprep.subr.bf16.mxu0 %v2229
    %3059 = vmatpush1.bf16.msra.mxu0 %v2228
    %3060 = vmatprep.mubr.bf16.mxu0 %v783
    %3061 = vmatmul.mubr.bf16.gmra.mrb[0].mxu0 %v782
    %v3062 = vpop.f32.mrb[0].mxu0
    %v3063 = vadd.f32 %v2950, %v3062
    %v3064 = vpop.f32.mrb[0].mxu0
    %v3065 = vadd.f32 %v2952, %v3064
    %v3066 = vpop.f32.mrb[0].mxu0
    %v3067 = vadd.f32 %v2954, %v3066
    %v3068 = vpop.f32.mrb[0].mxu0
    %v3069 = vadd.f32 %v2956, %v3068
    %3070 = vmatprep.mubr.bf16.mxu0 %v794
    %3071 = vmatmul.mubr.bf16.gmra.mrb[0].mxu0 %v793
    %v3072 = vpop.f32.mrb[0].mxu0
    %v3073 = vadd.f32 %v2960, %v3072
    %v3074 = vpop.f32.mrb[0].mxu0
    %v3075 = vadd.f32 %v2962, %v3074
    %v3076 = vpop.f32.mrb[0].mxu0
    %v3077 = vadd.f32 %v2964, %v3076
    %v3078 = vpop.f32.mrb[0].mxu0
    %v3079 = vadd.f32 %v2966, %v3078
    %3080 = vmatprep.mubr.bf16.mxu0 %v805
    %3081 = vmatmul.mubr.bf16.gmra.mrb[0].mxu0 %v804
    %v3082 = vpop.f32.mrb[0].mxu0
    %v3083 = vadd.f32 %v2970, %v3082
    %v3084 = vpop.f32.mrb[0].mxu0
    %v3085 = vadd.f32 %v2972, %v3084
    %v3086 = vpop.f32.mrb[0].mxu0
    %v3087 = vadd.f32 %v2974, %v3086
    %v3088 = vpop.f32.mrb[0].mxu0
    %v3089 = vadd.f32 %v2976, %v3088
    %3090 = vmatprep.mubr.bf16.mxu0 %v816
    %3091 = vmatmul.mubr.bf16.gmra.mrb[0].mxu0 %v815
    %v3092 = vpop.f32.mrb[0].mxu0
    %v3093 = vadd.f32 %v2980, %v3092
    %v3094 = vpop.f32.mrb[0].mxu0
    %v3095 = vadd.f32 %v2982, %v3094
    %v3096 = vpop.f32.mrb[0].mxu0
    %v3097 = vadd.f32 %v2984, %v3096
    %v3098 = vpop.f32.mrb[0].mxu0
    %v3099 = vadd.f32 %v2986, %v3098
    %3100 = vmatprep.mubr.bf16.mxu0 %v827
    %3101 = vmatmul.mubr.bf16.gmra.mrb[0].mxu0 %v826
    %v3102 = vpop.f32.mrb[0].mxu0
    %v3103 = vadd.f32 %v2990, %v3102
    %v3104 = vpop.f32.mrb[0].mxu0
    %v3105 = vadd.f32 %v2992, %v3104
    %v3106 = vpop.f32.mrb[0].mxu0
    %v3107 = vadd.f32 %v2994, %v3106
    %v3108 = vpop.f32.mrb[0].mxu0
    %v3109 = vadd.f32 %v2996, %v3108
    %3110 = vmatprep.mubr.bf16.mxu0 %v838
    %3111 = vmatmul.mubr.bf16.gmra.mrb[0].mxu0 %v837
    %v3112 = vpop.f32.mrb[0].mxu0
    %v3113 = vadd.f32 %v3000, %v3112
    %v3114 = vpop.f32.mrb[0].mxu0
    %v3115 = vadd.f32 %v3002, %v3114
    %v3116 = vpop.f32.mrb[0].mxu0
    %v3117 = vadd.f32 %v3004, %v3116
    %v3118 = vpop.f32.mrb[0].mxu0
    %v3119 = vadd.f32 %v3006, %v3118
    %3120 = vmatprep.mubr.bf16.mxu0 %v849
    %3121 = vmatmul.mubr.bf16.gmra.mrb[0].mxu0 %v848
    %v3122 = vpop.f32.mrb[0].mxu0
    %v3123 = vadd.f32 %v3010, %v3122
    %v3124 = vpop.f32.mrb[0].mxu0
    %v3125 = vadd.f32 %v3012, %v3124
    %v3126 = vpop.f32.mrb[0].mxu0
    %v3127 = vadd.f32 %v3014, %v3126
    %v3128 = vpop.f32.mrb[0].mxu0
    %v3129 = vadd.f32 %v3016, %v3128
    %3130 = vmatprep.mubr.bf16.mxu0 %v860
    %3131 = vmatmul.mubr.bf16.gmra.mrb[0].mxu0 %v859
    %v3132 = vpop.f32.mrb[0].mxu0
    %v3133 = vadd.f32 %v3020, %v3132
    %v3134 = vpop.f32.mrb[0].mxu0
    %v3135 = vadd.f32 %v3022, %v3134
    %v3136 = vpop.f32.mrb[0].mxu0
    %v3137 = vadd.f32 %v3024, %v3136
    %v3138 = vpop.f32.mrb[0].mxu0
    %v3139 = vadd.f32 %v3026, %v3138
    %3140 = vdwg.mxu0
    %3141 = vmatprep.subr.bf16.mxu0 %v2233
    %3142 = vmatpush1.bf16.msra.mxu0 %v2232
    %3143 = vmatprep.subr.bf16.mxu0 %v2237
    %3144 = vmatpush1.bf16.msra.mxu0 %v2236
    %3145 = vmatprep.subr.bf16.mxu0 %v2241
    %3146 = vmatpush1.bf16.msra.mxu0 %v2240
    %3147 = vmatprep.subr.bf16.mxu0 %v2245
    %3148 = vmatpush1.bf16.msra.mxu0 %v2244
    %3149 = vmatprep.subr.bf16.mxu0 %v2249
    %3150 = vmatpush1.bf16.msra.mxu0 %v2248
    %3151 = vmatprep.subr.bf16.mxu0 %v2253
    %3152 = vmatpush1.bf16.msra.mxu0 %v2252
    %3153 = vmatprep.subr.bf16.mxu0 %v2257
    %3154 = vmatpush1.bf16.msra.mxu0 %v2256
    %3155 = vmatprep.subr.bf16.mxu0 %v2261
    %3156 = vmatpush1.bf16.msra.mxu0 %v2260
    %3157 = vmatprep.subr.bf16.mxu0 %v2265
    %3158 = vmatpush1.bf16.msra.mxu0 %v2264
    %3159 = vmatprep.subr.bf16.mxu0 %v2269
    %3160 = vmatpush1.bf16.msra.mxu0 %v2268
    %3161 = vmatprep.subr.bf16.mxu0 %v2273
    %3162 = vmatpush1.bf16.msra.mxu0 %v2272
    %3163 = vmatprep.subr.bf16.mxu0 %v2277
    %3164 = vmatpush1.bf16.msra.mxu0 %v2276
    %3165 = vmatprep.subr.bf16.mxu0 %v2281
    %3166 = vmatpush1.bf16.msra.mxu0 %v2280
    %3167 = vmatprep.subr.bf16.mxu0 %v2285
    %3168 = vmatpush1.bf16.msra.mxu0 %v2284
    %3169 = vmatprep.subr.bf16.mxu0 %v2289
    %3170 = vmatpush1.bf16.msra.mxu0 %v2288
    %3171 = vmatprep.subr.bf16.mxu0 %v2293
    %3172 = vmatpush1.bf16.msra.mxu0 %v2292
    %3173 = vmatprep.mubr.bf16.mxu0 %v785
    %3174 = vmatmul.mubr.bf16.gmra.mrb[0].mxu0 %v784
    %v3175 = vpop.f32.mrb[0].mxu0
    %v3176 = vadd.f32 %v3063, %v3175
    %v3177 = vpop.f32.mrb[0].mxu0
    %v3178 = vadd.f32 %v3065, %v3177
    %v3179 = vpop.f32.mrb[0].mxu0
    %v3180 = vadd.f32 %v3067, %v3179
    %v3181 = vpop.f32.mrb[0].mxu0
    %v3182 = vadd.f32 %v3069, %v3181
    %3183 = vmatprep.mubr.bf16.mxu0 %v796
    %3184 = vmatmul.mubr.bf16.gmra.mrb[0].mxu0 %v795
    %v3185 = vpop.f32.mrb[0].mxu0
    %v3186 = vadd.f32 %v3073, %v3185
    %v3187 = vpop.f32.mrb[0].mxu0
    %v3188 = vadd.f32 %v3075, %v3187
    %v3189 = vpop.f32.mrb[0].mxu0
    %v3190 = vadd.f32 %v3077, %v3189
    %v3191 = vpop.f32.mrb[0].mxu0
    %v3192 = vadd.f32 %v3079, %v3191
    %3193 = vmatprep.mubr.bf16.mxu0 %v807
    %3194 = vmatmul.mubr.bf16.gmra.mrb[0].mxu0 %v806
    %v3195 = vpop.f32.mrb[0].mxu0
    %v3196 = vadd.f32 %v3083, %v3195
    %v3197 = vpop.f32.mrb[0].mxu0
    %v3198 = vadd.f32 %v3085, %v3197
    %v3199 = vpop.f32.mrb[0].mxu0
    %v3200 = vadd.f32 %v3087, %v3199
    %v3201 = vpop.f32.mrb[0].mxu0
    %v3202 = vadd.f32 %v3089, %v3201
    %3203 = vmatprep.mubr.bf16.mxu0 %v818
    %3204 = vmatmul.mubr.bf16.gmra.mrb[0].mxu0 %v817
    %v3205 = vpop.f32.mrb[0].mxu0
    %v3206 = vadd.f32 %v3093, %v3205
    %v3207 = vpop.f32.mrb[0].mxu0
    %v3208 = vadd.f32 %v3095, %v3207
    %v3209 = vpop.f32.mrb[0].mxu0
    %v3210 = vadd.f32 %v3097, %v3209
    %v3211 = vpop.f32.mrb[0].mxu0
    %v3212 = vadd.f32 %v3099, %v3211
    %3213 = vmatprep.mubr.bf16.mxu0 %v829
    %3214 = vmatmul.mubr.bf16.gmra.mrb[0].mxu0 %v828
    %v3215 = vpop.f32.mrb[0].mxu0
    %v3216 = vadd.f32 %v3103, %v3215
    %v3217 = vpop.f32.mrb[0].mxu0
    %v3218 = vadd.f32 %v3105, %v3217
    %v3219 = vpop.f32.mrb[0].mxu0
    %v3220 = vadd.f32 %v3107, %v3219
    %v3221 = vpop.f32.mrb[0].mxu0
    %v3222 = vadd.f32 %v3109, %v3221
    %3223 = vmatprep.mubr.bf16.mxu0 %v840
    %3224 = vmatmul.mubr.bf16.gmra.mrb[0].mxu0 %v839
    %v3225 = vpop.f32.mrb[0].mxu0
    %v3226 = vadd.f32 %v3113, %v3225
    %v3227 = vpop.f32.mrb[0].mxu0
    %v3228 = vadd.f32 %v3115, %v3227
    %v3229 = vpop.f32.mrb[0].mxu0
    %v3230 = vadd.f32 %v3117, %v3229
    %v3231 = vpop.f32.mrb[0].mxu0
    %v3232 = vadd.f32 %v3119, %v3231
    %3233 = vmatprep.mubr.bf16.mxu0 %v851
    %3234 = vmatmul.mubr.bf16.gmra.mrb[0].mxu0 %v850
    %v3235 = vpop.f32.mrb[0].mxu0
    %v3236 = vadd.f32 %v3123, %v3235
    %v3237 = vpop.f32.mrb[0].mxu0
    %v3238 = vadd.f32 %v3125, %v3237
    %v3239 = vpop.f32.mrb[0].mxu0
    %v3240 = vadd.f32 %v3127, %v3239
    %v3241 = vpop.f32.mrb[0].mxu0
    %v3242 = vadd.f32 %v3129, %v3241
    %3243 = vmatprep.mubr.bf16.mxu0 %v862
    %3244 = vmatmul.mubr.bf16.gmra.mrb[0].mxu0 %v861
    %v3245 = vpop.f32.mrb[0].mxu0
    %v3246 = vadd.f32 %v3133, %v3245
    %v3247 = vpop.f32.mrb[0].mxu0
    %v3248 = vadd.f32 %v3135, %v3247
    %v3249 = vpop.f32.mrb[0].mxu0
    %v3250 = vadd.f32 %v3137, %v3249
    %v3251 = vpop.f32.mrb[0].mxu0
    %v3252 = vadd.f32 %v3139, %v3251
    %3253 = vdwg.mxu0
    %3254 = vmatprep.subr.bf16.mxu0 %v2297
    %3255 = vmatpush1.bf16.msra.mxu0 %v2296
    %3256 = vmatprep.subr.bf16.mxu0 %v2301
    %3257 = vmatpush1.bf16.msra.mxu0 %v2300
    %3258 = vmatprep.subr.bf16.mxu0 %v2305
    %3259 = vmatpush1.bf16.msra.mxu0 %v2304
    %3260 = vmatprep.subr.bf16.mxu0 %v2309
    %3261 = vmatpush1.bf16.msra.mxu0 %v2308
    %3262 = vmatprep.subr.bf16.mxu0 %v2313
    %3263 = vmatpush1.bf16.msra.mxu0 %v2312
    %3264 = vmatprep.subr.bf16.mxu0 %v2317
    %3265 = vmatpush1.bf16.msra.mxu0 %v2316
    %3266 = vmatprep.subr.bf16.mxu0 0
    %3267 = vmatpush1.bf16.msra.mxu0 0
    %3268 = vmatprep.subr.bf16.mxu0 0
    %3269 = vmatpush1.bf16.msra.mxu0 0
    %3270 = vmatprep.subr.bf16.mxu0 0
    %3271 = vmatpush1.bf16.msra.mxu0 0
    %3272 = vmatprep.subr.bf16.mxu0 0
    %3273 = vmatpush1.bf16.msra.mxu0 0
    %3274 = vmatprep.subr.bf16.mxu0 0
    %3275 = vmatpush1.bf16.msra.mxu0 0
    %3276 = vmatprep.subr.bf16.mxu0 0
    %3277 = vmatpush1.bf16.msra.mxu0 0
    %3278 = vmatprep.subr.bf16.mxu0 0
    %3279 = vmatpush1.bf16.msra.mxu0 0
    %3280 = vmatprep.subr.bf16.mxu0 0
    %3281 = vmatpush1.bf16.msra.mxu0 0
    %3282 = vmatprep.subr.bf16.mxu0 0
    %3283 = vmatpush1.bf16.msra.mxu0 0
    %3284 = vmatprep.subr.bf16.mxu0 0
    %3285 = vmatpush1.bf16.msra.mxu0 0
    %3286 = vmatprep.mubr.bf16.mxu0 0
    %3287 = vmatmul.mubr.bf16.gmra.mrb[0].mxu0 %v2666
    %v3288 = vpop.f32.mrb[0].mxu0
    %v3289 = vadd.f32 %v3176, %v3288
    %v3290 = vpop.f32.mrb[0].mxu0
    %v3291 = vadd.f32 %v3178, %v3290
    %v3292 = vpop.f32.mrb[0].mxu0
    %v3293 = vadd.f32 %v3180, %v3292
    %v3294 = vpop.f32.mrb[0].mxu0
    %v3295 = vadd.f32 %v3182, %v3294
    %3296 = vmatprep.mubr.bf16.mxu0 0
    %3297 = vmatmul.mubr.bf16.gmra.mrb[0].mxu0 %v2669
    %v3298 = vpop.f32.mrb[0].mxu0
    %v3299 = vadd.f32 %v3186, %v3298
    %v3300 = vpop.f32.mrb[0].mxu0
    %v3301 = vadd.f32 %v3188, %v3300
    %v3302 = vpop.f32.mrb[0].mxu0
    %v3303 = vadd.f32 %v3190, %v3302
    %v3304 = vpop.f32.mrb[0].mxu0
    %v3305 = vadd.f32 %v3192, %v3304
    %3306 = vmatprep.mubr.bf16.mxu0 0
    %3307 = vmatmul.mubr.bf16.gmra.mrb[0].mxu0 %v2672
    %v3308 = vpop.f32.mrb[0].mxu0
    %v3309 = vadd.f32 %v3196, %v3308
    %v3310 = vpop.f32.mrb[0].mxu0
    %v3311 = vadd.f32 %v3198, %v3310
    %v3312 = vpop.f32.mrb[0].mxu0
    %v3313 = vadd.f32 %v3200, %v3312
    %v3314 = vpop.f32.mrb[0].mxu0
    %v3315 = vadd.f32 %v3202, %v3314
    %3316 = vmatprep.mubr.bf16.mxu0 0
    %3317 = vmatmul.mubr.bf16.gmra.mrb[0].mxu0 %v2675
    %v3318 = vpop.f32.mrb[0].mxu0
    %v3319 = vadd.f32 %v3206, %v3318
    %v3320 = vpop.f32.mrb[0].mxu0
    %v3321 = vadd.f32 %v3208, %v3320
    %v3322 = vpop.f32.mrb[0].mxu0
    %v3323 = vadd.f32 %v3210, %v3322
    %v3324 = vpop.f32.mrb[0].mxu0
    %v3325 = vadd.f32 %v3212, %v3324
    %3326 = vmatprep.mubr.bf16.mxu0 0
    %3327 = vmatmul.mubr.bf16.gmra.mrb[0].mxu0 %v2678
    %v3328 = vpop.f32.mrb[0].mxu0
    %v3329 = vadd.f32 %v3216, %v3328
    %v3330 = vpop.f32.mrb[0].mxu0
    %v3331 = vadd.f32 %v3218, %v3330
    %v3332 = vpop.f32.mrb[0].mxu0
    %v3333 = vadd.f32 %v3220, %v3332
    %v3334 = vpop.f32.mrb[0].mxu0
    %v3335 = vadd.f32 %v3222, %v3334
    %3336 = vmatprep.mubr.bf16.mxu0 0
    %3337 = vmatmul.mubr.bf16.gmra.mrb[0].mxu0 %v2681
    %v3338 = vpop.f32.mrb[0].mxu0
    %v3339 = vadd.f32 %v3226, %v3338
    %v3340 = vpop.f32.mrb[0].mxu0
    %v3341 = vadd.f32 %v3228, %v3340
    %v3342 = vpop.f32.mrb[0].mxu0
    %v3343 = vadd.f32 %v3230, %v3342
    %v3344 = vpop.f32.mrb[0].mxu0
    %v3345 = vadd.f32 %v3232, %v3344
    %3346 = vmatprep.mubr.bf16.mxu0 0
    %3347 = vmatmul.mubr.bf16.gmra.mrb[0].mxu0 %v2684
    %v3348 = vpop.f32.mrb[0].mxu0
    %v3349 = vadd.f32 %v3236, %v3348
    %v3350 = vpop.f32.mrb[0].mxu0
    %v3351 = vadd.f32 %v3238, %v3350
    %v3352 = vpop.f32.mrb[0].mxu0
    %v3353 = vadd.f32 %v3240, %v3352
    %v3354 = vpop.f32.mrb[0].mxu0
    %v3355 = vadd.f32 %v3242, %v3354
    %3356 = vmatprep.mubr.bf16.mxu0 0
    %3357 = vmatmul.mubr.bf16.gmra.mrb[0].mxu0 %v2687
    %v3358 = vpop.f32.mrb[0].mxu0
    %v3359 = vadd.f32 %v3246, %v3358
    %v3360 = vpop.f32.mrb[0].mxu0
    %v3361 = vadd.f32 %v3248, %v3360
    %v3362 = vpop.f32.mrb[0].mxu0
    %v3363 = vadd.f32 %v3250, %v3362
    %v3364 = vpop.f32.mrb[0].mxu0
    %v3365 = vadd.f32 %v3252, %v3364
    %3366 = vdwg.mxu0
    %3367 = vmatprep.subr.bf16.mxu0 %v1979
    %3368 = vmatpush1.bf16.msra.mxu0 %v1978
    %3369 = vmatprep.subr.bf16.mxu0 %v1983
    %3370 = vmatpush1.bf16.msra.mxu0 %v1982
    %3371 = vmatprep.subr.bf16.mxu0 %v1987
    %3372 = vmatpush1.bf16.msra.mxu0 %v1986
    %3373 = vmatprep.subr.bf16.mxu0 %v1991
    %3374 = vmatpush1.bf16.msra.mxu0 %v1990
    %3375 = vmatprep.subr.bf16.mxu0 %v1995
    %3376 = vmatpush1.bf16.msra.mxu0 %v1994
    %3377 = vmatprep.subr.bf16.mxu0 %v1999
    %3378 = vmatpush1.bf16.msra.mxu0 %v1998
    %3379 = vmatprep.subr.bf16.mxu0 %v2003
    %3380 = vmatpush1.bf16.msra.mxu0 %v2002
    %3381 = vmatprep.subr.bf16.mxu0 %v2007
    %3382 = vmatpush1.bf16.msra.mxu0 %v2006
    %3383 = vmatprep.subr.bf16.mxu0 %v2011
    %3384 = vmatpush1.bf16.msra.mxu0 %v2010
    %3385 = vmatprep.subr.bf16.mxu0 %v2015
    %3386 = vmatpush1.bf16.msra.mxu0 %v2014
    %3387 = vmatprep.subr.bf16.mxu0 %v2019
    %3388 = vmatpush1.bf16.msra.mxu0 %v2018
    %3389 = vmatprep.subr.bf16.mxu0 %v2023
    %3390 = vmatpush1.bf16.msra.mxu0 %v2022
    %3391 = vmatprep.subr.bf16.mxu0 %v2027
    %3392 = vmatpush1.bf16.msra.mxu0 %v2026
    %3393 = vmatprep.subr.bf16.mxu0 %v2031
    %3394 = vmatpush1.bf16.msra.mxu0 %v2030
    %3395 = vmatprep.subr.bf16.mxu0 %v2035
    %3396 = vmatpush1.bf16.msra.mxu0 %v2034
    %3397 = vmatprep.subr.bf16.mxu0 %v2039
    %3398 = vmatpush1.bf16.msra.mxu0 %v2038
    %3399 = vmatprep.mubr.bf16.mxu0 %v777
    %3400 = vmatmul.mubr.bf16.gmra.mrb[0].mxu0 %v776
    %v3401 = vpop.f32.mrb[0].mxu0
    %v3402 = vadd.f32 %v495, %v3401
    %v3403 = vpop.f32.mrb[0].mxu0
    %v3404 = vadd.f32 %v499, %v3403
    %v3405 = vpop.f32.mrb[0].mxu0
    %v3406 = vadd.f32 %v495, %v3405
    %v3407 = vpop.f32.mrb[0].mxu0
    %v3408 = vadd.f32 %v499, %v3407
    %3409 = vmatprep.mubr.bf16.mxu0 %v788
    %3410 = vmatmul.mubr.bf16.gmra.mrb[0].mxu0 %v787
    %v3411 = vpop.f32.mrb[0].mxu0
    %v3412 = vadd.f32 %v495, %v3411
    %v3413 = vpop.f32.mrb[0].mxu0
    %v3414 = vadd.f32 %v499, %v3413
    %v3415 = vpop.f32.mrb[0].mxu0
    %v3416 = vadd.f32 %v495, %v3415
    %v3417 = vpop.f32.mrb[0].mxu0
    %v3418 = vadd.f32 %v499, %v3417
    %3419 = vmatprep.mubr.bf16.mxu0 %v799
    %3420 = vmatmul.mubr.bf16.gmra.mrb[0].mxu0 %v798
    %v3421 = vpop.f32.mrb[0].mxu0
    %v3422 = vadd.f32 %v495, %v3421
    %v3423 = vpop.f32.mrb[0].mxu0
    %v3424 = vadd.f32 %v499, %v3423
    %v3425 = vpop.f32.mrb[0].mxu0
    %v3426 = vadd.f32 %v495, %v3425
    %v3427 = vpop.f32.mrb[0].mxu0
    %v3428 = vadd.f32 %v499, %v3427
    %3429 = vmatprep.mubr.bf16.mxu0 %v810
    %3430 = vmatmul.mubr.bf16.gmra.mrb[0].mxu0 %v809
    %v3431 = vpop.f32.mrb[0].mxu0
    %v3432 = vadd.f32 %v495, %v3431
    %v3433 = vpop.f32.mrb[0].mxu0
    %v3434 = vadd.f32 %v499, %v3433
    %v3435 = vpop.f32.mrb[0].mxu0
    %v3436 = vadd.f32 %v495, %v3435
    %v3437 = vpop.f32.mrb[0].mxu0
    %v3438 = vadd.f32 %v499, %v3437
    %3439 = vmatprep.mubr.bf16.mxu0 %v821
    %3440 = vmatmul.mubr.bf16.gmra.mrb[0].mxu0 %v820
    %v3441 = vpop.f32.mrb[0].mxu0
    %v3442 = vadd.f32 %v495, %v3441
    %v3443 = vpop.f32.mrb[0].mxu0
    %v3444 = vadd.f32 %v499, %v3443
    %v3445 = vpop.f32.mrb[0].mxu0
    %v3446 = vadd.f32 %v495, %v3445
    %v3447 = vpop.f32.mrb[0].mxu0
    %v3448 = vadd.f32 %v499, %v3447
    %3449 = vmatprep.mubr.bf16.mxu0 %v832
    %3450 = vmatmul.mubr.bf16.gmra.mrb[0].mxu0 %v831
    %v3451 = vpop.f32.mrb[0].mxu0
    %v3452 = vadd.f32 %v495, %v3451
    %v3453 = vpop.f32.mrb[0].mxu0
    %v3454 = vadd.f32 %v499, %v3453
    %v3455 = vpop.f32.mrb[0].mxu0
    %v3456 = vadd.f32 %v495, %v3455
    %v3457 = vpop.f32.mrb[0].mxu0
    %v3458 = vadd.f32 %v499, %v3457
    %3459 = vmatprep.mubr.bf16.mxu0 %v843
    %3460 = vmatmul.mubr.bf16.gmra.mrb[0].mxu0 %v842
    %v3461 = vpop.f32.mrb[0].mxu0
    %v3462 = vadd.f32 %v495, %v3461
    %v3463 = vpop.f32.mrb[0].mxu0
    %v3464 = vadd.f32 %v499, %v3463
    %v3465 = vpop.f32.mrb[0].mxu0
    %v3466 = vadd.f32 %v495, %v3465
    %v3467 = vpop.f32.mrb[0].mxu0
    %v3468 = vadd.f32 %v499, %v3467
    %3469 = vmatprep.mubr.bf16.mxu0 %v854
    %3470 = vmatmul.mubr.bf16.gmra.mrb[0].mxu0 %v853
    %v3471 = vpop.f32.mrb[0].mxu0
    %v3472 = vadd.f32 %v495, %v3471
    %v3473 = vpop.f32.mrb[0].mxu0
    %v3474 = vadd.f32 %v499, %v3473
    %v3475 = vpop.f32.mrb[0].mxu0
    %v3476 = vadd.f32 %v495, %v3475
    %v3477 = vpop.f32.mrb[0].mxu0
    %v3478 = vadd.f32 %v499, %v3477
    %3479 = vdwg.mxu0
    %3480 = vmatprep.subr.bf16.mxu0 %v2043
    %3481 = vmatpush1.bf16.msra.mxu0 %v2042
    %3482 = vmatprep.subr.bf16.mxu0 %v2047
    %3483 = vmatpush1.bf16.msra.mxu0 %v2046
    %3484 = vmatprep.subr.bf16.mxu0 %v2051
    %3485 = vmatpush1.bf16.msra.mxu0 %v2050
    %3486 = vmatprep.subr.bf16.mxu0 %v2055
    %3487 = vmatpush1.bf16.msra.mxu0 %v2054
    %3488 = vmatprep.subr.bf16.mxu0 %v2059
    %3489 = vmatpush1.bf16.msra.mxu0 %v2058
    %3490 = vmatprep.subr.bf16.mxu0 %v2063
    %3491 = vmatpush1.bf16.msra.mxu0 %v2062
    %3492 = vmatprep.subr.bf16.mxu0 %v2067
    %3493 = vmatpush1.bf16.msra.mxu0 %v2066
    %3494 = vmatprep.subr.bf16.mxu0 %v2071
    %3495 = vmatpush1.bf16.msra.mxu0 %v2070
    %3496 = vmatprep.subr.bf16.mxu0 %v2075
    %3497 = vmatpush1.bf16.msra.mxu0 %v2074
    %3498 = vmatprep.subr.bf16.mxu0 %v2079
    %3499 = vmatpush1.bf16.msra.mxu0 %v2078
    %3500 = vmatprep.subr.bf16.mxu0 %v2083
    %3501 = vmatpush1.bf16.msra.mxu0 %v2082
    %3502 = vmatprep.subr.bf16.mxu0 %v2087
    %3503 = vmatpush1.bf16.msra.mxu0 %v2086
    %3504 = vmatprep.subr.bf16.mxu0 %v2091
    %3505 = vmatpush1.bf16.msra.mxu0 %v2090
    %3506 = vmatprep.subr.bf16.mxu0 %v2095
    %3507 = vmatpush1.bf16.msra.mxu0 %v2094
    %3508 = vmatprep.subr.bf16.mxu0 %v2099
    %3509 = vmatpush1.bf16.msra.mxu0 %v2098
    %3510 = vmatprep.subr.bf16.mxu0 %v2103
    %3511 = vmatpush1.bf16.msra.mxu0 %v2102
    %3512 = vmatprep.mubr.bf16.mxu0 %v779
    %3513 = vmatmul.mubr.bf16.gmra.mrb[0].mxu0 %v778
    %v3514 = vpop.f32.mrb[0].mxu0
    %v3515 = vadd.f32 %v3402, %v3514
    %v3516 = vpop.f32.mrb[0].mxu0
    %v3517 = vadd.f32 %v3404, %v3516
    %v3518 = vpop.f32.mrb[0].mxu0
    %v3519 = vadd.f32 %v3406, %v3518
    %v3520 = vpop.f32.mrb[0].mxu0
    %v3521 = vadd.f32 %v3408, %v3520
    %3522 = vmatprep.mubr.bf16.mxu0 %v790
    %3523 = vmatmul.mubr.bf16.gmra.mrb[0].mxu0 %v789
    %v3524 = vpop.f32.mrb[0].mxu0
    %v3525 = vadd.f32 %v3412, %v3524
    %v3526 = vpop.f32.mrb[0].mxu0
    %v3527 = vadd.f32 %v3414, %v3526
    %v3528 = vpop.f32.mrb[0].mxu0
    %v3529 = vadd.f32 %v3416, %v3528
    %v3530 = vpop.f32.mrb[0].mxu0
    %v3531 = vadd.f32 %v3418, %v3530
    %3532 = vmatprep.mubr.bf16.mxu0 %v801
    %3533 = vmatmul.mubr.bf16.gmra.mrb[0].mxu0 %v800
    %v3534 = vpop.f32.mrb[0].mxu0
    %v3535 = vadd.f32 %v3422, %v3534
    %v3536 = vpop.f32.mrb[0].mxu0
    %v3537 = vadd.f32 %v3424, %v3536
    %v3538 = vpop.f32.mrb[0].mxu0
    %v3539 = vadd.f32 %v3426, %v3538
    %v3540 = vpop.f32.mrb[0].mxu0
    %v3541 = vadd.f32 %v3428, %v3540
    %3542 = vmatprep.mubr.bf16.mxu0 %v812
    %3543 = vmatmul.mubr.bf16.gmra.mrb[0].mxu0 %v811
    %v3544 = vpop.f32.mrb[0].mxu0
    %v3545 = vadd.f32 %v3432, %v3544
    %v3546 = vpop.f32.mrb[0].mxu0
    %v3547 = vadd.f32 %v3434, %v3546
    %v3548 = vpop.f32.mrb[0].mxu0
    %v3549 = vadd.f32 %v3436, %v3548
    %v3550 = vpop.f32.mrb[0].mxu0
    %v3551 = vadd.f32 %v3438, %v3550
    %3552 = vmatprep.mubr.bf16.mxu0 %v823
    %3553 = vmatmul.mubr.bf16.gmra.mrb[0].mxu0 %v822
    %v3554 = vpop.f32.mrb[0].mxu0
    %v3555 = vadd.f32 %v3442, %v3554
    %v3556 = vpop.f32.mrb[0].mxu0
    %v3557 = vadd.f32 %v3444, %v3556
    %v3558 = vpop.f32.mrb[0].mxu0
    %v3559 = vadd.f32 %v3446, %v3558
    %v3560 = vpop.f32.mrb[0].mxu0
    %v3561 = vadd.f32 %v3448, %v3560
    %3562 = vmatprep.mubr.bf16.mxu0 %v834
    %3563 = vmatmul.mubr.bf16.gmra.mrb[0].mxu0 %v833
    %v3564 = vpop.f32.mrb[0].mxu0
    %v3565 = vadd.f32 %v3452, %v3564
    %v3566 = vpop.f32.mrb[0].mxu0
    %v3567 = vadd.f32 %v3454, %v3566
    %v3568 = vpop.f32.mrb[0].mxu0
    %v3569 = vadd.f32 %v3456, %v3568
    %v3570 = vpop.f32.mrb[0].mxu0
    %v3571 = vadd.f32 %v3458, %v3570
    %3572 = vmatprep.mubr.bf16.mxu0 %v845
    %3573 = vmatmul.mubr.bf16.gmra.mrb[0].mxu0 %v844
    %v3574 = vpop.f32.mrb[0].mxu0
    %v3575 = vadd.f32 %v3462, %v3574
    %v3576 = vpop.f32.mrb[0].mxu0
    %v3577 = vadd.f32 %v3464, %v3576
    %v3578 = vpop.f32.mrb[0].mxu0
    %v3579 = vadd.f32 %v3466, %v3578
    %v3580 = vpop.f32.mrb[0].mxu0
    %v3581 = vadd.f32 %v3468, %v3580
    %3582 = vmatprep.mubr.bf16.mxu0 %v856
    %3583 = vmatmul.mubr.bf16.gmra.mrb[0].mxu0 %v855
    %v3584 = vpop.f32.mrb[0].mxu0
    %v3585 = vadd.f32 %v3472, %v3584
    %v3586 = vpop.f32.mrb[0].mxu0
    %v3587 = vadd.f32 %v3474, %v3586
    %v3588 = vpop.f32.mrb[0].mxu0
    %v3589 = vadd.f32 %v3476, %v3588
    %v3590 = vpop.f32.mrb[0].mxu0
    %v3591 = vadd.f32 %v3478, %v3590
    %3592 = vdwg.mxu0
    %3593 = vmatprep.subr.bf16.mxu0 %v2107
    %3594 = vmatpush1.bf16.msra.mxu0 %v2106
    %3595 = vmatprep.subr.bf16.mxu0 %v2111
    %3596 = vmatpush1.bf16.msra.mxu0 %v2110
    %3597 = vmatprep.subr.bf16.mxu0 %v2115
    %3598 = vmatpush1.bf16.msra.mxu0 %v2114
    %3599 = vmatprep.subr.bf16.mxu0 %v2119
    %3600 = vmatpush1.bf16.msra.mxu0 %v2118
    %3601 = vmatprep.subr.bf16.mxu0 %v2123
    %3602 = vmatpush1.bf16.msra.mxu0 %v2122
    %3603 = vmatprep.subr.bf16.mxu0 %v2127
    %3604 = vmatpush1.bf16.msra.mxu0 %v2126
    %3605 = vmatprep.subr.bf16.mxu0 %v2131
    %3606 = vmatpush1.bf16.msra.mxu0 %v2130
    %3607 = vmatprep.subr.bf16.mxu0 %v2135
    %3608 = vmatpush1.bf16.msra.mxu0 %v2134
    %3609 = vmatprep.subr.bf16.mxu0 %v2139
    %3610 = vmatpush1.bf16.msra.mxu0 %v2138
    %3611 = vmatprep.subr.bf16.mxu0 %v2143
    %3612 = vmatpush1.bf16.msra.mxu0 %v2142
    %3613 = vmatprep.subr.bf16.mxu0 %v2147
    %3614 = vmatpush1.bf16.msra.mxu0 %v2146
    %3615 = vmatprep.subr.bf16.mxu0 %v2151
    %3616 = vmatpush1.bf16.msra.mxu0 %v2150
    %3617 = vmatprep.subr.bf16.mxu0 %v2155
    %3618 = vmatpush1.bf16.msra.mxu0 %v2154
    %3619 = vmatprep.subr.bf16.mxu0 %v2159
    %3620 = vmatpush1.bf16.msra.mxu0 %v2158
    %3621 = vmatprep.subr.bf16.mxu0 %v2163
    %3622 = vmatpush1.bf16.msra.mxu0 %v2162
    %3623 = vmatprep.subr.bf16.mxu0 %v2167
    %3624 = vmatpush1.bf16.msra.mxu0 %v2166
    %3625 = vmatprep.mubr.bf16.mxu0 %v781
    %3626 = vmatmul.mubr.bf16.gmra.mrb[0].mxu0 %v780
    %v3627 = vpop.f32.mrb[0].mxu0
    %v3628 = vadd.f32 %v3515, %v3627
    %v3629 = vpop.f32.mrb[0].mxu0
    %v3630 = vadd.f32 %v3517, %v3629
    %v3631 = vpop.f32.mrb[0].mxu0
    %v3632 = vadd.f32 %v3519, %v3631
    %v3633 = vpop.f32.mrb[0].mxu0
    %v3634 = vadd.f32 %v3521, %v3633
    %3635 = vmatprep.mubr.bf16.mxu0 %v792
    %3636 = vmatmul.mubr.bf16.gmra.mrb[0].mxu0 %v791
    %v3637 = vpop.f32.mrb[0].mxu0
    %v3638 = vadd.f32 %v3525, %v3637
    %v3639 = vpop.f32.mrb[0].mxu0
    %v3640 = vadd.f32 %v3527, %v3639
    %v3641 = vpop.f32.mrb[0].mxu0
    %v3642 = vadd.f32 %v3529, %v3641
    %v3643 = vpop.f32.mrb[0].mxu0
    %v3644 = vadd.f32 %v3531, %v3643
    %3645 = vmatprep.mubr.bf16.mxu0 %v803
    %3646 = vmatmul.mubr.bf16.gmra.mrb[0].mxu0 %v802
    %v3647 = vpop.f32.mrb[0].mxu0
    %v3648 = vadd.f32 %v3535, %v3647
    %v3649 = vpop.f32.mrb[0].mxu0
    %v3650 = vadd.f32 %v3537, %v3649
    %v3651 = vpop.f32.mrb[0].mxu0
    %v3652 = vadd.f32 %v3539, %v3651
    %v3653 = vpop.f32.mrb[0].mxu0
    %v3654 = vadd.f32 %v3541, %v3653
    %3655 = vmatprep.mubr.bf16.mxu0 %v814
    %3656 = vmatmul.mubr.bf16.gmra.mrb[0].mxu0 %v813
    %v3657 = vpop.f32.mrb[0].mxu0
    %v3658 = vadd.f32 %v3545, %v3657
    %v3659 = vpop.f32.mrb[0].mxu0
    %v3660 = vadd.f32 %v3547, %v3659
    %v3661 = vpop.f32.mrb[0].mxu0
    %v3662 = vadd.f32 %v3549, %v3661
    %v3663 = vpop.f32.mrb[0].mxu0
    %v3664 = vadd.f32 %v3551, %v3663
    %3665 = vmatprep.mubr.bf16.mxu0 %v825
    %3666 = vmatmul.mubr.bf16.gmra.mrb[0].mxu0 %v824
    %v3667 = vpop.f32.mrb[0].mxu0
    %v3668 = vadd.f32 %v3555, %v3667
    %v3669 = vpop.f32.mrb[0].mxu0
    %v3670 = vadd.f32 %v3557, %v3669
    %v3671 = vpop.f32.mrb[0].mxu0
    %v3672 = vadd.f32 %v3559, %v3671
    %v3673 = vpop.f32.mrb[0].mxu0
    %v3674 = vadd.f32 %v3561, %v3673
    %3675 = vmatprep.mubr.bf16.mxu0 %v836
    %3676 = vmatmul.mubr.bf16.gmra.mrb[0].mxu0 %v835
    %v3677 = vpop.f32.mrb[0].mxu0
    %v3678 = vadd.f32 %v3565, %v3677
    %v3679 = vpop.f32.mrb[0].mxu0
    %v3680 = vadd.f32 %v3567, %v3679
    %v3681 = vpop.f32.mrb[0].mxu0
    %v3682 = vadd.f32 %v3569, %v3681
    %v3683 = vpop.f32.mrb[0].mxu0
    %v3684 = vadd.f32 %v3571, %v3683
    %3685 = vmatprep.mubr.bf16.mxu0 %v847
    %3686 = vmatmul.mubr.bf16.gmra.mrb[0].mxu0 %v846
    %v3687 = vpop.f32.mrb[0].mxu0
    %v3688 = vadd.f32 %v3575, %v3687
    %v3689 = vpop.f32.mrb[0].mxu0
    %v3690 = vadd.f32 %v3577, %v3689
    %v3691 = vpop.f32.mrb[0].mxu0
    %v3692 = vadd.f32 %v3579, %v3691
    %v3693 = vpop.f32.mrb[0].mxu0
    %v3694 = vadd.f32 %v3581, %v3693
    %3695 = vmatprep.mubr.bf16.mxu0 %v858
    %3696 = vmatmul.mubr.bf16.gmra.mrb[0].mxu0 %v857
    %v3697 = vpop.f32.mrb[0].mxu0
    %v3698 = vadd.f32 %v3585, %v3697
    %v3699 = vpop.f32.mrb[0].mxu0
    %v3700 = vadd.f32 %v3587, %v3699
    %v3701 = vpop.f32.mrb[0].mxu0
    %v3702 = vadd.f32 %v3589, %v3701
    %v3703 = vpop.f32.mrb[0].mxu0
    %v3704 = vadd.f32 %v3591, %v3703
    %3705 = vdwg.mxu0
    %3706 = vmatprep.subr.bf16.mxu0 %v2171
    %3707 = vmatpush1.bf16.msra.mxu0 %v2170
    %3708 = vmatprep.subr.bf16.mxu0 %v2175
    %3709 = vmatpush1.bf16.msra.mxu0 %v2174
    %3710 = vmatprep.subr.bf16.mxu0 %v2179
    %3711 = vmatpush1.bf16.msra.mxu0 %v2178
    %3712 = vmatprep.subr.bf16.mxu0 %v2183
    %3713 = vmatpush1.bf16.msra.mxu0 %v2182
    %3714 = vmatprep.subr.bf16.mxu0 %v2187
    %3715 = vmatpush1.bf16.msra.mxu0 %v2186
    %3716 = vmatprep.subr.bf16.mxu0 %v2191
    %3717 = vmatpush1.bf16.msra.mxu0 %v2190
    %3718 = vmatprep.subr.bf16.mxu0 %v2195
    %3719 = vmatpush1.bf16.msra.mxu0 %v2194
    %3720 = vmatprep.subr.bf16.mxu0 %v2199
    %3721 = vmatpush1.bf16.msra.mxu0 %v2198
    %3722 = vmatprep.subr.bf16.mxu0 %v2203
    %3723 = vmatpush1.bf16.msra.mxu0 %v2202
    %3724 = vmatprep.subr.bf16.mxu0 %v2207
    %3725 = vmatpush1.bf16.msra.mxu0 %v2206
    %3726 = vmatprep.subr.bf16.mxu0 %v2211
    %3727 = vmatpush1.bf16.msra.mxu0 %v2210
    %3728 = vmatprep.subr.bf16.mxu0 %v2215
    %3729 = vmatpush1.bf16.msra.mxu0 %v2214
    %3730 = vmatprep.subr.bf16.mxu0 %v2219
    %3731 = vmatpush1.bf16.msra.mxu0 %v2218
    %3732 = vmatprep.subr.bf16.mxu0 %v2223
    %3733 = vmatpush1.bf16.msra.mxu0 %v2222
    %3734 = vmatprep.subr.bf16.mxu0 %v2227
    %3735 = vmatpush1.bf16.msra.mxu0 %v2226
    %3736 = vmatprep.subr.bf16.mxu0 %v2231
    %3737 = vmatpush1.bf16.msra.mxu0 %v2230
    %3738 = vmatprep.mubr.bf16.mxu0 %v783
    %3739 = vmatmul.mubr.bf16.gmra.mrb[0].mxu0 %v782
    %v3740 = vpop.f32.mrb[0].mxu0
    %v3741 = vadd.f32 %v3628, %v3740
    %v3742 = vpop.f32.mrb[0].mxu0
    %v3743 = vadd.f32 %v3630, %v3742
    %v3744 = vpop.f32.mrb[0].mxu0
    %v3745 = vadd.f32 %v3632, %v3744
    %v3746 = vpop.f32.mrb[0].mxu0
    %v3747 = vadd.f32 %v3634, %v3746
    %3748 = vmatprep.mubr.bf16.mxu0 %v794
    %3749 = vmatmul.mubr.bf16.gmra.mrb[0].mxu0 %v793
    %v3750 = vpop.f32.mrb[0].mxu0
    %v3751 = vadd.f32 %v3638, %v3750
    %v3752 = vpop.f32.mrb[0].mxu0
    %v3753 = vadd.f32 %v3640, %v3752
    %v3754 = vpop.f32.mrb[0].mxu0
    %v3755 = vadd.f32 %v3642, %v3754
    %v3756 = vpop.f32.mrb[0].mxu0
    %v3757 = vadd.f32 %v3644, %v3756
    %3758 = vmatprep.mubr.bf16.mxu0 %v805
    %3759 = vmatmul.mubr.bf16.gmra.mrb[0].mxu0 %v804
    %v3760 = vpop.f32.mrb[0].mxu0
    %v3761 = vadd.f32 %v3648, %v3760
    %v3762 = vpop.f32.mrb[0].mxu0
    %v3763 = vadd.f32 %v3650, %v3762
    %v3764 = vpop.f32.mrb[0].mxu0
    %v3765 = vadd.f32 %v3652, %v3764
    %v3766 = vpop.f32.mrb[0].mxu0
    %v3767 = vadd.f32 %v3654, %v3766
    %3768 = vmatprep.mubr.bf16.mxu0 %v816
    %3769 = vmatmul.mubr.bf16.gmra.mrb[0].mxu0 %v815
    %v3770 = vpop.f32.mrb[0].mxu0
    %v3771 = vadd.f32 %v3658, %v3770
    %v3772 = vpop.f32.mrb[0].mxu0
    %v3773 = vadd.f32 %v3660, %v3772
    %v3774 = vpop.f32.mrb[0].mxu0
    %v3775 = vadd.f32 %v3662, %v3774
    %v3776 = vpop.f32.mrb[0].mxu0
    %v3777 = vadd.f32 %v3664, %v3776
    %3778 = vmatprep.mubr.bf16.mxu0 %v827
    %3779 = vmatmul.mubr.bf16.gmra.mrb[0].mxu0 %v826
    %v3780 = vpop.f32.mrb[0].mxu0
    %v3781 = vadd.f32 %v3668, %v3780
    %v3782 = vpop.f32.mrb[0].mxu0
    %v3783 = vadd.f32 %v3670, %v3782
    %v3784 = vpop.f32.mrb[0].mxu0
    %v3785 = vadd.f32 %v3672, %v3784
    %v3786 = vpop.f32.mrb[0].mxu0
    %v3787 = vadd.f32 %v3674, %v3786
    %3788 = vmatprep.mubr.bf16.mxu0 %v838
    %3789 = vmatmul.mubr.bf16.gmra.mrb[0].mxu0 %v837
    %v3790 = vpop.f32.mrb[0].mxu0
    %v3791 = vadd.f32 %v3678, %v3790
    %v3792 = vpop.f32.mrb[0].mxu0
    %v3793 = vadd.f32 %v3680, %v3792
    %v3794 = vpop.f32.mrb[0].mxu0
    %v3795 = vadd.f32 %v3682, %v3794
    %v3796 = vpop.f32.mrb[0].mxu0
    %v3797 = vadd.f32 %v3684, %v3796
    %3798 = vmatprep.mubr.bf16.mxu0 %v849
    %3799 = vmatmul.mubr.bf16.gmra.mrb[0].mxu0 %v848
    %v3800 = vpop.f32.mrb[0].mxu0
    %v3801 = vadd.f32 %v3688, %v3800
    %v3802 = vpop.f32.mrb[0].mxu0
    %v3803 = vadd.f32 %v3690, %v3802
    %v3804 = vpop.f32.mrb[0].mxu0
    %v3805 = vadd.f32 %v3692, %v3804
    %v3806 = vpop.f32.mrb[0].mxu0
    %v3807 = vadd.f32 %v3694, %v3806
    %3808 = vmatprep.mubr.bf16.mxu0 %v860
    %3809 = vmatmul.mubr.bf16.gmra.mrb[0].mxu0 %v859
    %v3810 = vpop.f32.mrb[0].mxu0
    %v3811 = vadd.f32 %v3698, %v3810
    %v3812 = vpop.f32.mrb[0].mxu0
    %v3813 = vadd.f32 %v3700, %v3812
    %v3814 = vpop.f32.mrb[0].mxu0
    %v3815 = vadd.f32 %v3702, %v3814
    %v3816 = vpop.f32.mrb[0].mxu0
    %v3817 = vadd.f32 %v3704, %v3816
    %3818 = vdwg.mxu0
    %3819 = vmatprep.subr.bf16.mxu0 %v2235
    %3820 = vmatpush1.bf16.msra.mxu0 %v2234
    %3821 = vmatprep.subr.bf16.mxu0 %v2239
    %3822 = vmatpush1.bf16.msra.mxu0 %v2238
    %3823 = vmatprep.subr.bf16.mxu0 %v2243
    %3824 = vmatpush1.bf16.msra.mxu0 %v2242
    %3825 = vmatprep.subr.bf16.mxu0 %v2247
    %3826 = vmatpush1.bf16.msra.mxu0 %v2246
    %3827 = vmatprep.subr.bf16.mxu0 %v2251
    %3828 = vmatpush1.bf16.msra.mxu0 %v2250
    %3829 = vmatprep.subr.bf16.mxu0 %v2255
    %3830 = vmatpush1.bf16.msra.mxu0 %v2254
    %3831 = vmatprep.subr.bf16.mxu0 %v2259
    %3832 = vmatpush1.bf16.msra.mxu0 %v2258
    %3833 = vmatprep.subr.bf16.mxu0 %v2263
    %3834 = vmatpush1.bf16.msra.mxu0 %v2262
    %3835 = vmatprep.subr.bf16.mxu0 %v2267
    %3836 = vmatpush1.bf16.msra.mxu0 %v2266
    %3837 = vmatprep.subr.bf16.mxu0 %v2271
    %3838 = vmatpush1.bf16.msra.mxu0 %v2270
    %3839 = vmatprep.subr.bf16.mxu0 %v2275
    %3840 = vmatpush1.bf16.msra.mxu0 %v2274
    %3841 = vmatprep.subr.bf16.mxu0 %v2279
    %3842 = vmatpush1.bf16.msra.mxu0 %v2278
    %3843 = vmatprep.subr.bf16.mxu0 %v2283
    %3844 = vmatpush1.bf16.msra.mxu0 %v2282
    %3845 = vmatprep.subr.bf16.mxu0 %v2287
    %3846 = vmatpush1.bf16.msra.mxu0 %v2286
    %3847 = vmatprep.subr.bf16.mxu0 %v2291
    %3848 = vmatpush1.bf16.msra.mxu0 %v2290
    %3849 = vmatprep.subr.bf16.mxu0 %v2295
    %3850 = vmatpush1.bf16.msra.mxu0 %v2294
    %3851 = vmatprep.mubr.bf16.mxu0 %v785
    %3852 = vmatmul.mubr.bf16.gmra.mrb[0].mxu0 %v784
    %v3853 = vpop.f32.mrb[0].mxu0
    %v3854 = vadd.f32 %v3741, %v3853
    %v3855 = vpop.f32.mrb[0].mxu0
    %v3856 = vadd.f32 %v3743, %v3855
    %v3857 = vpop.f32.mrb[0].mxu0
    %v3858 = vadd.f32 %v3745, %v3857
    %v3859 = vpop.f32.mrb[0].mxu0
    %v3860 = vadd.f32 %v3747, %v3859
    %3861 = vmatprep.mubr.bf16.mxu0 %v796
    %3862 = vmatmul.mubr.bf16.gmra.mrb[0].mxu0 %v795
    %v3863 = vpop.f32.mrb[0].mxu0
    %v3864 = vadd.f32 %v3751, %v3863
    %v3865 = vpop.f32.mrb[0].mxu0
    %v3866 = vadd.f32 %v3753, %v3865
    %v3867 = vpop.f32.mrb[0].mxu0
    %v3868 = vadd.f32 %v3755, %v3867
    %v3869 = vpop.f32.mrb[0].mxu0
    %v3870 = vadd.f32 %v3757, %v3869
    %3871 = vmatprep.mubr.bf16.mxu0 %v807
    %3872 = vmatmul.mubr.bf16.gmra.mrb[0].mxu0 %v806
    %v3873 = vpop.f32.mrb[0].mxu0
    %v3874 = vadd.f32 %v3761, %v3873
    %v3875 = vpop.f32.mrb[0].mxu0
    %v3876 = vadd.f32 %v3763, %v3875
    %v3877 = vpop.f32.mrb[0].mxu0
    %v3878 = vadd.f32 %v3765, %v3877
    %v3879 = vpop.f32.mrb[0].mxu0
    %v3880 = vadd.f32 %v3767, %v3879
    %3881 = vmatprep.mubr.bf16.mxu0 %v818
    %3882 = vmatmul.mubr.bf16.gmra.mrb[0].mxu0 %v817
    %v3883 = vpop.f32.mrb[0].mxu0
    %v3884 = vadd.f32 %v3771, %v3883
    %v3885 = vpop.f32.mrb[0].mxu0
    %v3886 = vadd.f32 %v3773, %v3885
    %v3887 = vpop.f32.mrb[0].mxu0
    %v3888 = vadd.f32 %v3775, %v3887
    %v3889 = vpop.f32.mrb[0].mxu0
    %v3890 = vadd.f32 %v3777, %v3889
    %3891 = vmatprep.mubr.bf16.mxu0 %v829
    %3892 = vmatmul.mubr.bf16.gmra.mrb[0].mxu0 %v828
    %v3893 = vpop.f32.mrb[0].mxu0
    %v3894 = vadd.f32 %v3781, %v3893
    %v3895 = vpop.f32.mrb[0].mxu0
    %v3896 = vadd.f32 %v3783, %v3895
    %v3897 = vpop.f32.mrb[0].mxu0
    %v3898 = vadd.f32 %v3785, %v3897
    %v3899 = vpop.f32.mrb[0].mxu0
    %v3900 = vadd.f32 %v3787, %v3899
    %3901 = vmatprep.mubr.bf16.mxu0 %v840
    %3902 = vmatmul.mubr.bf16.gmra.mrb[0].mxu0 %v839
    %v3903 = vpop.f32.mrb[0].mxu0
    %v3904 = vadd.f32 %v3791, %v3903
    %v3905 = vpop.f32.mrb[0].mxu0
    %v3906 = vadd.f32 %v3793, %v3905
    %v3907 = vpop.f32.mrb[0].mxu0
    %v3908 = vadd.f32 %v3795, %v3907
    %v3909 = vpop.f32.mrb[0].mxu0
    %v3910 = vadd.f32 %v3797, %v3909
    %3911 = vmatprep.mubr.bf16.mxu0 %v851
    %3912 = vmatmul.mubr.bf16.gmra.mrb[0].mxu0 %v850
    %v3913 = vpop.f32.mrb[0].mxu0
    %v3914 = vadd.f32 %v3801, %v3913
    %v3915 = vpop.f32.mrb[0].mxu0
    %v3916 = vadd.f32 %v3803, %v3915
    %v3917 = vpop.f32.mrb[0].mxu0
    %v3918 = vadd.f32 %v3805, %v3917
    %v3919 = vpop.f32.mrb[0].mxu0
    %v3920 = vadd.f32 %v3807, %v3919
    %3921 = vmatprep.mubr.bf16.mxu0 %v862
    %3922 = vmatmul.mubr.bf16.gmra.mrb[0].mxu0 %v861
    %v3923 = vpop.f32.mrb[0].mxu0
    %v3924 = vadd.f32 %v3811, %v3923
    %v3925 = vpop.f32.mrb[0].mxu0
    %v3926 = vadd.f32 %v3813, %v3925
    %v3927 = vpop.f32.mrb[0].mxu0
    %v3928 = vadd.f32 %v3815, %v3927
    %v3929 = vpop.f32.mrb[0].mxu0
    %v3930 = vadd.f32 %v3817, %v3929
    %3931 = vdwg.mxu0
    %3932 = vmatprep.subr.bf16.mxu0 %v2299
    %3933 = vmatpush1.bf16.msra.mxu0 %v2298
    %3934 = vmatprep.subr.bf16.mxu0 %v2303
    %3935 = vmatpush1.bf16.msra.mxu0 %v2302
    %3936 = vmatprep.subr.bf16.mxu0 %v2307
    %3937 = vmatpush1.bf16.msra.mxu0 %v2306
    %3938 = vmatprep.subr.bf16.mxu0 %v2311
    %3939 = vmatpush1.bf16.msra.mxu0 %v2310
    %3940 = vmatprep.subr.bf16.mxu0 %v2315
    %3941 = vmatpush1.bf16.msra.mxu0 %v2314
    %3942 = vmatprep.subr.bf16.mxu0 %v2319
    %3943 = vmatpush1.bf16.msra.mxu0 %v2318
    %3944 = vmatprep.subr.bf16.mxu0 0
    %3945 = vmatpush1.bf16.msra.mxu0 0
    %3946 = vmatprep.subr.bf16.mxu0 0
    %3947 = vmatpush1.bf16.msra.mxu0 0
    %3948 = vmatprep.subr.bf16.mxu0 0
    %3949 = vmatpush1.bf16.msra.mxu0 0
    %3950 = vmatprep.subr.bf16.mxu0 0
    %3951 = vmatpush1.bf16.msra.mxu0 0
    %3952 = vmatprep.subr.bf16.mxu0 0
    %3953 = vmatpush1.bf16.msra.mxu0 0
    %3954 = vmatprep.subr.bf16.mxu0 0
    %3955 = vmatpush1.bf16.msra.mxu0 0
    %3956 = vmatprep.subr.bf16.mxu0 0
    %3957 = vmatpush1.bf16.msra.mxu0 0
    %3958 = vmatprep.subr.bf16.mxu0 0
    %3959 = vmatpush1.bf16.msra.mxu0 0
    %3960 = vmatprep.subr.bf16.mxu0 0
    %3961 = vmatpush1.bf16.msra.mxu0 0
    %3962 = vmatprep.subr.bf16.mxu0 0
    %3963 = vmatpush1.bf16.msra.mxu0 0
    %3964 = vmatprep.mubr.bf16.mxu0 0
    %3965 = vmatmul.mubr.bf16.gmra.mrb[0].mxu0 %v2666
    %v3966 = vpop.f32.mrb[0].mxu0
    %v3967 = vadd.f32 %v3854, %v3966
    %v3968 = vpop.f32.mrb[0].mxu0
    %v3969 = vadd.f32 %v3856, %v3968
    %v3970 = vpop.f32.mrb[0].mxu0
    %v3971 = vadd.f32 %v3858, %v3970
    %v3972 = vpop.f32.mrb[0].mxu0
    %v3973 = vadd.f32 %v3860, %v3972
    %3974 = vmatprep.mubr.bf16.mxu0 0
    %3975 = vmatmul.mubr.bf16.gmra.mrb[0].mxu0 %v2669
    %v3976 = vpop.f32.mrb[0].mxu0
    %v3977 = vadd.f32 %v3864, %v3976
    %v3978 = vpop.f32.mrb[0].mxu0
    %v3979 = vadd.f32 %v3866, %v3978
    %v3980 = vpop.f32.mrb[0].mxu0
    %v3981 = vadd.f32 %v3868, %v3980
    %v3982 = vpop.f32.mrb[0].mxu0
    %v3983 = vadd.f32 %v3870, %v3982
    %3984 = vmatprep.mubr.bf16.mxu0 0
    %3985 = vmatmul.mubr.bf16.gmra.mrb[0].mxu0 %v2672
    %v3986 = vpop.f32.mrb[0].mxu0
    %v3987 = vadd.f32 %v3874, %v3986
    %v3988 = vpop.f32.mrb[0].mxu0
    %v3989 = vadd.f32 %v3876, %v3988
    %v3990 = vpop.f32.mrb[0].mxu0
    %v3991 = vadd.f32 %v3878, %v3990
    %v3992 = vpop.f32.mrb[0].mxu0
    %v3993 = vadd.f32 %v3880, %v3992
    %3994 = vmatprep.mubr.bf16.mxu0 0
    %3995 = vmatmul.mubr.bf16.gmra.mrb[0].mxu0 %v2675
    %v3996 = vpop.f32.mrb[0].mxu0
    %v3997 = vadd.f32 %v3884, %v3996
    %v3998 = vpop.f32.mrb[0].mxu0
    %v3999 = vadd.f32 %v3886, %v3998
    %v4000 = vpop.f32.mrb[0].mxu0
    %v4001 = vadd.f32 %v3888, %v4000
    %v4002 = vpop.f32.mrb[0].mxu0
    %v4003 = vadd.f32 %v3890, %v4002
    %4004 = vmatprep.mubr.bf16.mxu0 0
    %4005 = vmatmul.mubr.bf16.gmra.mrb[0].mxu0 %v2678
    %v4006 = vpop.f32.mrb[0].mxu0
    %v4007 = vadd.f32 %v3894, %v4006
    %v4008 = vpop.f32.mrb[0].mxu0
    %v4009 = vadd.f32 %v3896, %v4008
    %v4010 = vpop.f32.mrb[0].mxu0
    %v4011 = vadd.f32 %v3898, %v4010
    %v4012 = vpop.f32.mrb[0].mxu0
    %v4013 = vadd.f32 %v3900, %v4012
    %4014 = vmatprep.mubr.bf16.mxu0 0
    %4015 = vmatmul.mubr.bf16.gmra.mrb[0].mxu0 %v2681
    %v4016 = vpop.f32.mrb[0].mxu0
    %v4017 = vadd.f32 %v3904, %v4016
    %v4018 = vpop.f32.mrb[0].mxu0
    %v4019 = vadd.f32 %v3906, %v4018
    %v4020 = vpop.f32.mrb[0].mxu0
    %v4021 = vadd.f32 %v3908, %v4020
    %v4022 = vpop.f32.mrb[0].mxu0
    %v4023 = vadd.f32 %v3910, %v4022
    %4024 = vmatprep.mubr.bf16.mxu0 0
    %4025 = vmatmul.mubr.bf16.gmra.mrb[0].mxu0 %v2684
    %v4026 = vpop.f32.mrb[0].mxu0
    %v4027 = vadd.f32 %v3914, %v4026
    %v4028 = vpop.f32.mrb[0].mxu0
    %v4029 = vadd.f32 %v3916, %v4028
    %v4030 = vpop.f32.mrb[0].mxu0
    %v4031 = vadd.f32 %v3918, %v4030
    %v4032 = vpop.f32.mrb[0].mxu0
    %v4033 = vadd.f32 %v3920, %v4032
    %4034 = vmatprep.mubr.bf16.mxu0 0
    %4035 = vmatmul.mubr.bf16.gmra.mrb[0].mxu0 %v2687
    %v4036 = vpop.f32.mrb[0].mxu0
    %v4037 = vadd.f32 %v3924, %v4036
    %v4038 = vpop.f32.mrb[0].mxu0
    %v4039 = vadd.f32 %v3926, %v4038
    %v4040 = vpop.f32.mrb[0].mxu0
    %v4041 = vadd.f32 %v3928, %v4040
    %v4042 = vpop.f32.mrb[0].mxu0
    %v4043 = vadd.f32 %v3930, %v4042
    %4044 = vdwg.mxu0
    %v4045 = vmax.f32 %v3289, 0.0
    %v4046 = vmax.f32 %v3291, 0.0
    %v4047 = vmax.f32 %v3967, 0.0
    %v4048 = vmax.f32 %v3969, 0.0
    %v4049 = vmax.f32 %v3293, 0.0
    %v4050 = vmax.f32 %v3295, 0.0
    %v4051 = vmax.f32 %v3971, 0.0
    %v4052 = vmax.f32 %v3973, 0.0
    %v4053 = vmax.f32 %v3299, 0.0
    %v4054 = vmax.f32 %v3301, 0.0
    %v4055 = vmax.f32 %v3977, 0.0
    %v4056 = vmax.f32 %v3979, 0.0
    %v4057 = vmax.f32 %v3303, 0.0
    %v4058 = vmax.f32 %v3305, 0.0
    %v4059 = vmax.f32 %v3981, 0.0
    %v4060 = vmax.f32 %v3983, 0.0
    %v4061 = vmax.f32 %v3309, 0.0
    %v4062 = vmax.f32 %v3311, 0.0
    %v4063 = vmax.f32 %v3987, 0.0
    %v4064 = vmax.f32 %v3989, 0.0
    %v4065 = vmax.f32 %v3313, 0.0
    %v4066 = vmax.f32 %v3315, 0.0
    %v4067 = vmax.f32 %v3991, 0.0
    %v4068 = vmax.f32 %v3993, 0.0
    %v4069 = vmax.f32 %v3319, 0.0
    %v4070 = vmax.f32 %v3321, 0.0
    %v4071 = vmax.f32 %v3997, 0.0
    %v4072 = vmax.f32 %v3999, 0.0
    %v4073 = vmax.f32 %v3323, 0.0
    %v4074 = vmax.f32 %v3325, 0.0
    %v4075 = vmax.f32 %v4001, 0.0
    %v4076 = vmax.f32 %v4003, 0.0
    %v4077 = vmax.f32 %v3329, 0.0
    %v4078 = vmax.f32 %v3331, 0.0
    %v4079 = vmax.f32 %v4007, 0.0
    %v4080 = vmax.f32 %v4009, 0.0
    %v4081 = vmax.f32 %v3333, 0.0
    %v4082 = vmax.f32 %v3335, 0.0
    %v4083 = vmax.f32 %v4011, 0.0
    %v4084 = vmax.f32 %v4013, 0.0
    %v4085 = vmax.f32 %v3339, 0.0
    %v4086 = vmax.f32 %v3341, 0.0
    %v4087 = vmax.f32 %v4017, 0.0
    %v4088 = vmax.f32 %v4019, 0.0
    %v4089 = vmax.f32 %v3343, 0.0
    %v4090 = vmax.f32 %v3345, 0.0
    %v4091 = vmax.f32 %v4021, 0.0
    %v4092 = vmax.f32 %v4023, 0.0
    %v4093 = vmax.f32 %v3349, 0.0
    %v4094 = vmax.f32 %v3351, 0.0
    %v4095 = vmax.f32 %v4027, 0.0
    %v4096 = vmax.f32 %v4029, 0.0
    %v4097 = vmax.f32 %v3353, 0.0
    %v4098 = vmax.f32 %v3355, 0.0
    %v4099 = vmax.f32 %v4031, 0.0
    %v4100 = vmax.f32 %v4033, 0.0
    %v4101 = vmax.f32 %v3359, 0.0
    %v4102 = vmax.f32 %v3361, 0.0
    %v4103 = vmax.f32 %v4037, 0.0
    %v4104 = vmax.f32 %v4039, 0.0
    %v4105 = vmax.f32 %v3363, 0.0
    %v4106 = vmax.f32 %v3365, 0.0
    %v4107 = vmax.f32 %v4041, 0.0
    %v4108 = vmax.f32 %v4043, 0.0
    %4109 = vst [vmem:[#allocation7] sm:$0xff] %v4045
    %4110 = vst [vmem:[#allocation7 + $0x8] sm:$0xff] %v4046
    %4111 = vst [vmem:[#allocation7 + $0x10] sm:$0xff] %v4047
    %4112 = vst [vmem:[#allocation7 + $0x18] sm:$0xff] %v4048
    %4113 = vst [vmem:[#allocation7 + $0x20] sm:$0xff] %v4049
    %4114 = vst [vmem:[#allocation7 + $0x28] sm:$0xff] %v4050
    %4115 = vst [vmem:[#allocation7 + $0x30] sm:$0xff] %v4051
    %4116 = vst [vmem:[#allocation7 + $0x38] sm:$0xff] %v4052
    %4117 = vst [vmem:[#allocation7 + $0x40] sm:$0xff] %v4053
    %4118 = vst [vmem:[#allocation7 + $0x48] sm:$0xff] %v4054
    %4119 = vst [vmem:[#allocation7 + $0x50] sm:$0xff] %v4055
    %4120 = vst [vmem:[#allocation7 + $0x58] sm:$0xff] %v4056
    %4121 = vst [vmem:[#allocation7 + $0x60] sm:$0xff] %v4057
    %4122 = vst [vmem:[#allocation7 + $0x68] sm:$0xff] %v4058
    %4123 = vst [vmem:[#allocation7 + $0x70] sm:$0xff] %v4059
    %4124 = vst [vmem:[#allocation7 + $0x78] sm:$0xff] %v4060
    %4125 = vst [vmem:[#allocation7 + $0x80] sm:$0xff] %v4061
    %4126 = vst [vmem:[#allocation7 + $0x88] sm:$0xff] %v4062
    %4127 = vst [vmem:[#allocation7 + $0x90] sm:$0xff] %v4063
    %4128 = vst [vmem:[#allocation7 + $0x98] sm:$0xff] %v4064
    %4129 = vst [vmem:[#allocation7 + $0xa0] sm:$0xff] %v4065
    %4130 = vst [vmem:[#allocation7 + $0xa8] sm:$0xff] %v4066
    %4131 = vst [vmem:[#allocation7 + $0xb0] sm:$0xff] %v4067
    %4132 = vst [vmem:[#allocation7 + $0xb8] sm:$0xff] %v4068
    %4133 = vst [vmem:[#allocation7 + $0xc0] sm:$0xff] %v4069
    %4134 = vst [vmem:[#allocation7 + $0xc8] sm:$0xff] %v4070
    %4135 = vst [vmem:[#allocation7 + $0xd0] sm:$0xff] %v4071
    %4136 = vst [vmem:[#allocation7 + $0xd8] sm:$0xff] %v4072
    %4137 = vst [vmem:[#allocation7 + $0xe0] sm:$0xff] %v4073
    %4138 = vst [vmem:[#allocation7 + $0xe8] sm:$0xff] %v4074
    %4139 = vst [vmem:[#allocation7 + $0xf0] sm:$0xff] %v4075
    %4140 = vst [vmem:[#allocation7 + $0xf8] sm:$0xff] %v4076
    %4141 = vst [vmem:[#allocation7 + $0x100] sm:$0xff] %v4077
    %4142 = vst [vmem:[#allocation7 + $0x108] sm:$0xff] %v4078
    %4143 = vst [vmem:[#allocation7 + $0x110] sm:$0xff] %v4079
    %4144 = vst [vmem:[#allocation7 + $0x118] sm:$0xff] %v4080
    %4145 = vst [vmem:[#allocation7 + $0x120] sm:$0xff] %v4081
    %4146 = vst [vmem:[#allocation7 + $0x128] sm:$0xff] %v4082
    %4147 = vst [vmem:[#allocation7 + $0x130] sm:$0xff] %v4083
    %4148 = vst [vmem:[#allocation7 + $0x138] sm:$0xff] %v4084
    %4149 = vst [vmem:[#allocation7 + $0x140] sm:$0xff] %v4085
    %4150 = vst [vmem:[#allocation7 + $0x148] sm:$0xff] %v4086
    %4151 = vst [vmem:[#allocation7 + $0x150] sm:$0xff] %v4087
    %4152 = vst [vmem:[#allocation7 + $0x158] sm:$0xff] %v4088
    %4153 = vst [vmem:[#allocation7 + $0x160] sm:$0xff] %v4089
    %4154 = vst [vmem:[#allocation7 + $0x168] sm:$0xff] %v4090
    %4155 = vst [vmem:[#allocation7 + $0x170] sm:$0xff] %v4091
    %4156 = vst [vmem:[#allocation7 + $0x178] sm:$0xff] %v4092
    %4157 = vst [vmem:[#allocation7 + $0x180] sm:$0xff] %v4093
    %4158 = vst [vmem:[#allocation7 + $0x188] sm:$0xff] %v4094
    %4159 = vst [vmem:[#allocation7 + $0x190] sm:$0xff] %v4095
    %4160 = vst [vmem:[#allocation7 + $0x198] sm:$0xff] %v4096
    %4161 = vst [vmem:[#allocation7 + $0x1a0] sm:$0xff] %v4097
    %4162 = vst [vmem:[#allocation7 + $0x1a8] sm:$0xff] %v4098
    %4163 = vst [vmem:[#allocation7 + $0x1b0] sm:$0xff] %v4099
    %4164 = vst [vmem:[#allocation7 + $0x1b8] sm:$0xff] %v4100
    %4165 = vst [vmem:[#allocation7 + $0x1c0] sm:$0xff] %v4101
    %4166 = vst [vmem:[#allocation7 + $0x1c8] sm:$0xff] %v4102
    %4167 = vst [vmem:[#allocation7 + $0x1d0] sm:$0xff] %v4103
    %4168 = vst [vmem:[#allocation7 + $0x1d8] sm:$0xff] %v4104
    %4169 = vst [vmem:[#allocation7 + $0x1e0] sm:$0xff] %v4105
    %4170 = vst [vmem:[#allocation7 + $0x1e8] sm:$0xff] %v4106
    %4171 = vst [vmem:[#allocation7 + $0x1f0] sm:$0xff] %v4107
    %4172 = vst [vmem:[#allocation7 + $0x1f8] sm:$0xff] %v4108
    // Predicated region
    $region22: #{tpu_custom_call.1} parent=1 // pred_check
      _
    $region23: #{tpu_custom_call.1} parent=1 // pred_check_branch
      %4174 = sbr.rel (0) target = $region25
    $region24: #{tpu_custom_call.1} parent=1 // pred_region
      %s4176 = ssub.s32 8192, 8192
      %4177 = vsyncadd [#allocation4], %s4176
      %s4178 = sshll.u32 [#allocation7], 4
      %s4179 = int_to_ptr.vmem [resolvable:$true] %s4178
      %4184 = dma.vmem_to_hbm [thread:$0]  %s4179, 8192, %s3, [#allocation4], 512, 512, 32
    $region25: #{tpu_custom_call.1} parent=1 // pred_fallthru
      _
    // Predicated region
    $region26: #{tpu_custom_call.1} parent=1 // pred_check
      _
    $region27: #{tpu_custom_call.1} parent=1 // pred_check_branch
      %4186 = sbr.rel (0) target = $region29
    $region28: #{tpu_custom_call.1} parent=1 // pred_region
      %4187 = dma.done [#allocation4], 8192
    $region29: #{tpu_custom_call.1} parent=1 // pred_fallthru
      _
    %4188 = vsyncpa [#allocation3], 1
    %4189 = vsyncpa [#allocation6], 1
    %4190 = vsyncpa [#allocation4], 1

</llo_original>
